<compile_context>
chip_gen: v6e
topology: v6e:2x2x1
jax: 0.10.0
libtpu: 0.0.40
codegen_flags: <defaults>
</compile_context>

<pallas_src>
import functools
import math

import jax
import jax.numpy as jnp
from jax.experimental import pallas as pl
from jax.experimental.pallas import tpu as pltpu

LN_EPS = 1e-5  # nn.LayerNorm default
_VMEM_LIMIT = 48 * 1024 * 1024  # safe on v5e/v6e (128 MiB) and v7x (64 MiB)


def _pick_tile(n, target=512):
    """Largest tile <= target that divides n (falls back to n itself)."""
    if n <= target:
        return n
    t = target
    while t > 8 and n % t != 0:
        t //= 2
    return t if n % t == 0 else n


def _layer_norm(x, g, b):
    mu = jnp.mean(x, axis=-1, keepdims=True)
    var = jnp.mean((x - mu) ** 2, axis=-1, keepdims=True)
    return (x - mu) * jax.lax.rsqrt(var + LN_EPS) * g + b


def _gelu(x):
    # TODO(synk): PyTorch nn.GELU defaults to the exact erf form; the tanh
    # approximation is used since erf lowering is not guaranteed in Mosaic.
    c = math.sqrt(2.0 / math.pi)
    return 0.5 * x * (1.0 + jnp.tanh(c * (x + 0.044715 * x * x * x)))


def _rep_spec(p):
    """Full-array BlockSpec whose block index never changes (weights/biases)."""
    zeros = (0,) * p.ndim
    return pl.BlockSpec(p.shape, lambda *_, _z=zeros: _z)


# ---------------------------------------------------------------------------
# Kernels
# ---------------------------------------------------------------------------

def _qkv_kernel(x_ref, g_ref, b_ref, wq_ref, bq_ref, wk_ref, bk_ref,
                wv_ref, bv_ref, q_ref, k_ref, v_ref):
    x = x_ref[0].astype(jnp.float32)                        # (TN, D)
    xn = _layer_norm(x, g_ref[...], b_ref[...]).astype(jnp.bfloat16)
    # three lane-aligned projections (q weight/bias pre-scaled by 1/sqrt(dh))
    q_ref[0] = (jnp.dot(xn, wq_ref[...], preferred_element_type=jnp.float32)
                + bq_ref[...]).astype(jnp.bfloat16)
    k_ref[0] = (jnp.dot(xn, wk_ref[...], preferred_element_type=jnp.float32)
                + bk_ref[...]).astype(jnp.bfloat16)
    v_ref[0] = (jnp.dot(xn, wv_ref[...], preferred_element_type=jnp.float32)
                + bv_ref[...]).astype(jnp.bfloat16)


def _flash_attn_kernel(q_ref, k_ref, v_ref, x_ref, wo_ref, bo_ref, o_ref,
                       m_sc, l_sc, acc_sc):
    ki = pl.program_id(2)

    @pl.when(ki == 0)
    def _():
        m_sc[...] = jnp.full(m_sc.shape, -jnp.inf, m_sc.dtype)
        l_sc[...] = jnp.zeros(l_sc.shape, l_sc.dtype)
        acc_sc[...] = jnp.zeros(acc_sc.shape, acc_sc.dtype)

    q = q_ref[0]                                             # (H, TQ, dh) bf16
    k = k_ref[0]                                             # (H, TK, dh) bf16
    v = v_ref[0]                                             # (H, TK, dh) bf16

    s = jnp.einsum('hqd,hkd->hqk', q, k, preferred_element_type=jnp.float32)
    m_prev = m_sc[...]
    m_new = jnp.maximum(m_prev, jnp.max(s, axis=-1, keepdims=True))
    alpha = jnp.exp(m_prev - m_new)
    p = jnp.exp(s - m_new)
    l_sc[...] = alpha * l_sc[...] + jnp.sum(p, axis=-1, keepdims=True)
    acc_sc[...] = alpha * acc_sc[...] + jnp.einsum(
        'hqk,hkd->hqd', p.astype(jnp.bfloat16), v,
        preferred_element_type=jnp.float32)
    m_sc[...] = m_new

    @pl.when(ki == pl.num_programs(2) - 1)
    def _():
        # normalize, then batched to_out projection over heads (no Python-level
        # serial accumulation chain), summed over the head axis.
        o = (acc_sc[...] * pl.reciprocal(l_sc[...], approx=True)
             ).astype(jnp.bfloat16)                          # (H, TQ, dh)
        proj = jnp.einsum('hqd,hdn->hqn', o, wo_ref[...],
                          preferred_element_type=jnp.float32)  # (H, TQ, D)
        out = jnp.sum(proj, axis=0) + bo_ref[...]            # (TQ, D)
        o_ref[0] = (x_ref[0].astype(jnp.float32) + out).astype(o_ref.dtype)


def _ffn_kernel(x_ref, g_ref, b_ref, w1_ref, b1_ref, w2_ref, b2_ref, o_ref,
                xn_sc, acc_sc):
    hi = pl.program_id(2)

    @pl.when(hi == 0)
    def _():
        x = x_ref[0].astype(jnp.float32)
        xn_sc[...] = _layer_norm(x, g_ref[...], b_ref[...]).astype(jnp.bfloat16)
        acc_sc[...] = jnp.zeros(acc_sc.shape, acc_sc.dtype)

    h = jnp.dot(xn_sc[...], w1_ref[...],
                preferred_element_type=jnp.float32) + b1_ref[...]   # (TN, TH)
    h = _gelu(h)
    acc_sc[...] += jnp.dot(h.astype(jnp.bfloat16), w2_ref[...],
                           preferred_element_type=jnp.float32)      # (TN, D)

    @pl.when(hi == pl.num_programs(2) - 1)
    def _():
        y = acc_sc[...] + b2_ref[...]
        o_ref[0] = (x_ref[0].astype(jnp.float32) + y).astype(o_ref.dtype)


def _head_kernel(x_ref, g_ref, b_ref, w_ref, bias_ref, o_ref):
    # to_out (dim->num_tokens) and to_final (num_tokens->1) are linear with no
    # nonlinearity between them, so they are folded into one (1, D) row at init.
    xn = _layer_norm(x_ref[0].astype(jnp.float32), g_ref[...], b_ref[...])
    o_ref[0] = jnp.sum(xn * w_ref[...], axis=-1, keepdims=True) + bias_ref[...]


# ---------------------------------------------------------------------------
# Wrappers (pallas_call plumbing)
# ---------------------------------------------------------------------------

def attention_block(x, lp, *, heads, dim_head):
    B, N, D = x.shape
    inner = heads * dim_head
    TN = _pick_tile(N)

    plist = [lp["ln1_g"], lp["ln1_b"], lp["wq"], lp["bq"], lp["wk"], lp["bk"],
             lp["wv"], lp["bv"]]
    q, k, v = pl.pallas_call(
        _qkv_kernel,
        out_shape=tuple(jax.ShapeDtypeStruct((B, N, inner), jnp.bfloat16)
                        for _ in range(3)),
        grid=(B, N // TN),
        in_specs=[pl.BlockSpec((1, TN, D), lambda b, ni: (b, ni, 0))]
                 + [_rep_spec(p) for p in plist],
        out_specs=tuple(pl.BlockSpec((1, TN, inner), lambda b, ni: (b, ni, 0))
                        for _ in range(3)),
        compiler_params=pltpu.CompilerParams(
            dimension_semantics=("parallel", "parallel"),
            vmem_limit_bytes=_VMEM_LIMIT),
    )(x, *plist)

    # TODO(synk): head-split transpose is still a plain-JAX pass; writing q/k/v
    # head-split directly from the QKV kernel needs an in-kernel lane-split
    # reshape that is not guaranteed to lower cleanly in Mosaic.
    def to_heads(t):
        return jnp.transpose(t.reshape(B, N, heads, dim_head), (0, 2, 1, 3))
    qh, kh, vh = to_heads(q), to_heads(k), to_heads(v)

    TQ = _pick_tile(N)
    TK = _pick_tile(N)
    return pl.pallas_call(
        _flash_attn_kernel,
        out_shape=jax.ShapeDtypeStruct((B, N, D), jnp.bfloat16),
        grid=(B, N // TQ, N // TK),
        in_specs=[
            pl.BlockSpec((1, heads, TQ, dim_head), lambda b, qi, ki: (b, 0, qi, 0)),
            pl.BlockSpec((1, heads, TK, dim_head), lambda b, qi, ki: (b, 0, ki, 0)),
            pl.BlockSpec((1, heads, TK, dim_head), lambda b, qi, ki: (b, 0, ki, 0)),
            pl.BlockSpec((1, TQ, D), lambda b, qi, ki: (b, qi, 0)),
            _rep_spec(lp["wo"]),
            _rep_spec(lp["bo"]),
        ],
        out_specs=pl.BlockSpec((1, TQ, D), lambda b, qi, ki: (b, qi, 0)),
        scratch_shapes=[
            pltpu.VMEM((heads, TQ, 1), jnp.float32),         # running max
            pltpu.VMEM((heads, TQ, 1), jnp.float32),         # running denom
            pltpu.VMEM((heads, TQ, dim_head), jnp.float32),  # accumulator
        ],
        compiler_params=pltpu.CompilerParams(
            dimension_semantics=("parallel", "parallel", "arbitrary"),
            vmem_limit_bytes=_VMEM_LIMIT),
    )(qh, kh, vh, x, lp["wo"], lp["bo"])


def ffn_block(x, lp, *, hidden):
    B, N, D = x.shape
    TN = _pick_tile(N)
    TH = _pick_tile(hidden)
    return pl.pallas_call(
        _ffn_kernel,
        out_shape=jax.ShapeDtypeStruct((B, N, D), jnp.bfloat16),
        grid=(B, N // TN, hidden // TH),
        in_specs=[
            pl.BlockSpec((1, TN, D), lambda b, ni, hi: (b, ni, 0)),
            _rep_spec(lp["ln2_g"]), _rep_spec(lp["ln2_b"]),
            pl.BlockSpec((D, TH), lambda b, ni, hi: (0, hi)),
            pl.BlockSpec((1, TH), lambda b, ni, hi: (0, hi)),
            pl.BlockSpec((TH, D), lambda b, ni, hi: (hi, 0)),
            _rep_spec(lp["b2"]),
        ],
        out_specs=pl.BlockSpec((1, TN, D), lambda b, ni, hi: (b, ni, 0)),
        scratch_shapes=[
            pltpu.VMEM((TN, D), jnp.bfloat16),   # cached LayerNorm(x)
            pltpu.VMEM((TN, D), jnp.float32),    # MLP accumulator
        ],
        compiler_params=pltpu.CompilerParams(
            dimension_semantics=("parallel", "parallel", "arbitrary"),
            vmem_limit_bytes=_VMEM_LIMIT),
    )(x, lp["ln2_g"], lp["ln2_b"], lp["w1"], lp["b1"], lp["w2"], lp["b2"])


def lm_head(x, params):
    B, N, D = x.shape
    TN = _pick_tile(N)
    plist = [params["norm_g"], params["norm_b"], params["w_head"],
             params["b_head"]]
    out = pl.pallas_call(
        _head_kernel,
        out_shape=jax.ShapeDtypeStruct((B, N, 1), jnp.float32),
        grid=(B, N // TN),
        in_specs=[pl.BlockSpec((1, TN, D), lambda b, ni: (b, ni, 0))]
                 + [_rep_spec(p) for p in plist],
        out_specs=pl.BlockSpec((1, TN, 1), lambda b, ni: (b, ni, 0)),
        compiler_params=pltpu.CompilerParams(
            dimension_semantics=("parallel", "parallel"),
            vmem_limit_bytes=_VMEM_LIMIT),
    )(x, *plist)
    return out[..., 0]   # squeeze(2), as in the PyTorch forward


# ---------------------------------------------------------------------------
# Parameters & forward
# ---------------------------------------------------------------------------

def init_params(key, *, num_tokens, max_seq_len, dim, depth, heads, dim_head,
                ff_mult):
    inner = heads * dim_head
    hidden = dim * ff_mult
    scale = 1.0 / math.sqrt(dim_head)
    keys = jax.random.split(key, 4 + depth)

    # lm head: to_out (dim, num_tokens) and to_final (num_tokens, 1) fold
    # exactly into one (dim, 1) projection since there is no nonlinearity.
    w_out = jax.random.normal(keys[2], (dim, num_tokens), jnp.float32) * 0.02
    b_out = jnp.zeros((1, num_tokens), jnp.float32)
    w_final = jax.random.normal(keys[3], (1, num_tokens), jnp.float32) * 0.02
    b_final = jnp.zeros((1, 1), jnp.float32)
    w_head = (w_out @ w_final.T).T                    # (1, dim)
    b_head = b_out @ w_final.T + b_final              # (1, 1)

    params = {
        "token_emb": jax.random.normal(keys[0], (num_tokens, dim), jnp.float32) * 0.02,
        "pos_emb": jax.random.normal(keys[1], (max_seq_len, dim), jnp.float32) * 0.02,
        "norm_g": jnp.ones((1, dim), jnp.float32),
        "norm_b": jnp.zeros((1, dim), jnp.float32),
        "w_head": w_head,
        "b_head": b_head,
        "layers": [],
    }
    for i in range(depth):
        ks = jax.random.split(keys[4 + i], 6)
        wq = jax.random.normal(ks[0], (dim, inner), jnp.float32) * 0.02
        wk = jax.random.normal(ks[1], (dim, inner), jnp.float32) * 0.02
        wv = jax.random.normal(ks[2], (dim, inner), jnp.float32) * 0.02
        wo = jax.random.normal(ks[3], (inner, dim), jnp.float32) * 0.02
        layer = {
            "ln1_g": jnp.ones((1, dim), jnp.float32),
            "ln1_b": jnp.zeros((1, dim), jnp.float32),
            # q weight/bias pre-scaled by 1/sqrt(dim_head); bf16 MXU operands
            "wq": (wq * scale).astype(jnp.bfloat16),
            "bq": jnp.zeros((1, inner), jnp.float32) * scale,
            "wk": wk.astype(jnp.bfloat16),
            "bk": jnp.zeros((1, inner), jnp.float32),
            "wv": wv.astype(jnp.bfloat16),
            "bv": jnp.zeros((1, inner), jnp.float32),
            # to_out projection stored head-major (H, dh, D) for the epilogue
            "wo": wo.reshape(heads, dim_head, dim).astype(jnp.bfloat16),
            "bo": jnp.zeros((1, dim), jnp.float32),
            "ln2_g": jnp.ones((1, dim), jnp.float32),
            "ln2_b": jnp.zeros((1, dim), jnp.float32),
            "w1": (jax.random.normal(ks[4], (dim, hidden), jnp.float32)
                   * 0.02).astype(jnp.bfloat16),
            "b1": jnp.zeros((1, hidden), jnp.float32),
            "w2": (jax.random.normal(ks[5], (hidden, dim), jnp.float32)
                   * 0.02).astype(jnp.bfloat16),
            "b2": jnp.zeros((1, dim), jnp.float32),
        }
        params["layers"].append(layer)
    return params


def transformer_lm_forward(token_ids, params, *, heads, dim_head, ff_mult,
                           max_seq_len):
    B, N = token_ids.shape
    assert N <= max_seq_len
    D = params["token_emb"].shape[1]
    hidden = D * ff_mult
    # token embedding + positional embedding (gather = glue, plain JAX);
    # residual stream carried in bf16 between kernels.
    x = (params["token_emb"][token_ids] + params["pos_emb"][None, :N, :]
         ).astype(jnp.bfloat16)
    # emb/attn/ff dropout: eval mode -> identity
    for lp in params["layers"]:
        x = attention_block(x, lp, heads=heads, dim_head=dim_head)
        x = ffn_block(x, lp, hidden=hidden)
    return lm_head(x, params)        # (B, N) after to_out -> to_final -> squeeze


if __name__ == "__main__":
    NUM_TOKENS = 16
    MAX_SEQ = 16
    DIM = 32
    DEPTH = 2
    HEADS = 4
    DIM_HEAD = 8   # inner_dim = heads * dim_head = 32
    FF_MULT = 4
    B, N = 2, 8

    key = jax.random.PRNGKey(0)
    pkey, dkey = jax.random.split(key)
    params = init_params(pkey, num_tokens=NUM_TOKENS, max_seq_len=MAX_SEQ, dim=DIM,
                         depth=DEPTH, heads=HEADS, dim_head=DIM_HEAD,
                         ff_mult=FF_MULT)
    token_ids = jax.random.randint(dkey, (B, N), 0, NUM_TOKENS, dtype=jnp.int32)

    fwd = jax.jit(functools.partial(transformer_lm_forward, heads=HEADS,
                                    dim_head=DIM_HEAD, ff_mult=FF_MULT,
                                    max_seq_len=MAX_SEQ))
    out = fwd(token_ids, params)
    jax.block_until_ready(out)
    assert out.shape == (B, N), out.shape
    print("KERNEL_OK")
</pallas_src>

<mosaic_0001>
module attributes {stable_mosaic.version = 11 : i64} {
  func.func @_qkv_kernel(%arg0: i32, %arg1: i32, %arg2: memref<1x8x32xbf16, #tpu.memory_space<vmem>>, %arg3: memref<1x32xf32, #tpu.memory_space<vmem>>, %arg4: memref<1x32xf32, #tpu.memory_space<vmem>>, %arg5: memref<32x32xbf16, #tpu.memory_space<vmem>>, %arg6: memref<1x32xf32, #tpu.memory_space<vmem>>, %arg7: memref<32x32xbf16, #tpu.memory_space<vmem>>, %arg8: memref<1x32xf32, #tpu.memory_space<vmem>>, %arg9: memref<32x32xbf16, #tpu.memory_space<vmem>>, %arg10: memref<1x32xf32, #tpu.memory_space<vmem>>, %arg11: memref<1x8x32xbf16, #tpu.memory_space<vmem>>, %arg12: memref<1x8x32xbf16, #tpu.memory_space<vmem>>, %arg13: memref<1x8x32xbf16, #tpu.memory_space<vmem>>) attributes {dimension_semantics = [#tpu.dimension_semantics<parallel>, #tpu.dimension_semantics<parallel>], iteration_bounds = array<i64: 2, 1>, scalar_prefetch = 0 : i64, scratch_operands = 0 : i64, tpu.core_type = #tpu.core_type<tc>, window_params = [{transform_indices = @transform_0, window_bounds = array<i64: 1, 8, 32>}, {pipeline_mode = #tpu.pipeline_mode<synchronous>, transform_indices = @transform_1, window_bounds = array<i64: 1, 32>}, {pipeline_mode = #tpu.pipeline_mode<synchronous>, transform_indices = @transform_2, window_bounds = array<i64: 1, 32>}, {pipeline_mode = #tpu.pipeline_mode<synchronous>, transform_indices = @transform_3, window_bounds = array<i64: 32, 32>}, {pipeline_mode = #tpu.pipeline_mode<synchronous>, transform_indices = @transform_4, window_bounds = array<i64: 1, 32>}, {pipeline_mode = #tpu.pipeline_mode<synchronous>, transform_indices = @transform_5, window_bounds = array<i64: 32, 32>}, {pipeline_mode = #tpu.pipeline_mode<synchronous>, transform_indices = @transform_6, window_bounds = array<i64: 1, 32>}, {pipeline_mode = #tpu.pipeline_mode<synchronous>, transform_indices = @transform_7, window_bounds = array<i64: 32, 32>}, {pipeline_mode = #tpu.pipeline_mode<synchronous>, transform_indices = @transform_8, window_bounds = array<i64: 1, 32>}, {transform_indices = @transform_9, window_bounds = array<i64: 1, 8, 32>}, {transform_indices = @transform_10, window_bounds = array<i64: 1, 8, 32>}, {transform_indices = @transform_11, window_bounds = array<i64: 1, 8, 32>}]} {
    %c0 = arith.constant 0 : index
    %c0_0 = arith.constant 0 : index
    %c0_1 = arith.constant 0 : index
    %0 = vector.load %arg2[%c0, %c0_0, %c0_1] : memref<1x8x32xbf16, #tpu.memory_space<vmem>>, vector<1x8x32xbf16>
    %1 = vector.shape_cast %0 : vector<1x8x32xbf16> to vector<8x32xbf16>
    %2 = arith.extf %1 : vector<8x32xbf16> to vector<8x32xf32>
    %c0_2 = arith.constant 0 : index
    %c0_3 = arith.constant 0 : index
    %3 = vector.load %arg3[%c0_2, %c0_3] : memref<1x32xf32, #tpu.memory_space<vmem>>, vector<1x32xf32>
    %c0_4 = arith.constant 0 : index
    %c0_5 = arith.constant 0 : index
    %4 = vector.load %arg4[%c0_4, %c0_5] : memref<1x32xf32, #tpu.memory_space<vmem>>, vector<1x32xf32>
    %cst = arith.constant dense<0.000000e+00> : vector<8xf32>
    %5 = vector.multi_reduction <add>, %2, %cst [1] : vector<8x32xf32> to vector<8xf32>
    %6 = vector.shape_cast %5 : vector<8xf32> to vector<8x1xf32>
    %cst_6 = arith.constant 3.200000e+01 : f32
    %7 = vector.broadcast %cst_6 : f32 to vector<8x1xf32>
    %8 = arith.divf %6, %7 : vector<8x1xf32>
    %9 = vector.broadcast %8 : vector<8x1xf32> to vector<8x32xf32>
    %10 = arith.subf %2, %9 : vector<8x32xf32>
    %11 = arith.mulf %10, %10 : vector<8x32xf32>
    %cst_7 = arith.constant dense<0.000000e+00> : vector<8xf32>
    %12 = vector.multi_reduction <add>, %11, %cst_7 [1] : vector<8x32xf32> to vector<8xf32>
    %13 = vector.shape_cast %12 : vector<8xf32> to vector<8x1xf32>
    %cst_8 = arith.constant 3.200000e+01 : f32
    %14 = vector.broadcast %cst_8 : f32 to vector<8x1xf32>
    %15 = arith.divf %13, %14 : vector<8x1xf32>
    %16 = vector.broadcast %8 : vector<8x1xf32> to vector<8x32xf32>
    %17 = arith.subf %2, %16 : vector<8x32xf32>
    %cst_9 = arith.constant 9.99999974E-6 : f32
    %18 = vector.broadcast %cst_9 : f32 to vector<8x1xf32>
    %19 = arith.addf %15, %18 : vector<8x1xf32>
    %20 = math.rsqrt %19 : vector<8x1xf32>
    %21 = vector.broadcast %20 : vector<8x1xf32> to vector<8x32xf32>
    %22 = arith.mulf %17, %21 : vector<8x32xf32>
    %23 = vector.broadcast %3 : vector<1x32xf32> to vector<8x32xf32>
    %24 = arith.mulf %22, %23 : vector<8x32xf32>
    %25 = vector.broadcast %4 : vector<1x32xf32> to vector<8x32xf32>
    %26 = arith.addf %24, %25 : vector<8x32xf32>
    %27 = arith.truncf %26 : vector<8x32xf32> to vector<8x32xbf16>
    %c0_10 = arith.constant 0 : index
    %c0_11 = arith.constant 0 : index
    %28 = vector.load %arg5[%c0_10, %c0_11] : memref<32x32xbf16, #tpu.memory_space<vmem>>, vector<32x32xbf16>
    %cst_12 = arith.constant dense<0.000000e+00> : vector<8x32xf32>
    %29 = tpu.matmul %27, %28, %cst_12 {dimension_numbers = #tpu.dot_dimension_numbers<[1], [0], [0], [1], [0, 0, 1, 1], [], []>} : vector<8x32xbf16>, vector<32x32xbf16>, vector<8x32xf32> -> vector<8x32xf32>
    %c0_13 = arith.constant 0 : index
    %c0_14 = arith.constant 0 : index
    %30 = vector.load %arg6[%c0_13, %c0_14] : memref<1x32xf32, #tpu.memory_space<vmem>>, vector<1x32xf32>
    %31 = vector.broadcast %30 : vector<1x32xf32> to vector<8x32xf32>
    %32 = arith.addf %29, %31 : vector<8x32xf32>
    %33 = arith.truncf %32 : vector<8x32xf32> to vector<8x32xbf16>
    %c0_15 = arith.constant 0 : index
    %c0_16 = arith.constant 0 : index
    %c0_17 = arith.constant 0 : index
    %34 = vector.load %arg11[%c0_15, %c0_16, %c0_17] : memref<1x8x32xbf16, #tpu.memory_space<vmem>>, vector<1x8x32xbf16>
    %35 = vector.shape_cast %34 : vector<1x8x32xbf16> to vector<8x32xbf16>
    %36 = vector.shape_cast %33 : vector<8x32xbf16> to vector<1x8x32xbf16>
    tpu.vector_store %arg11[%c0_15, %c0_16, %c0_17], %36 {strides = array<i32>} : memref<1x8x32xbf16, #tpu.memory_space<vmem>>, vector<1x8x32xbf16>,
    %c0_18 = arith.constant 0 : index
    %c0_19 = arith.constant 0 : index
    %37 = vector.load %arg7[%c0_18, %c0_19] : memref<32x32xbf16, #tpu.memory_space<vmem>>, vector<32x32xbf16>
    %cst_20 = arith.constant dense<0.000000e+00> : vector<8x32xf32>
    %38 = tpu.matmul %27, %37, %cst_20 {dimension_numbers = #tpu.dot_dimension_numbers<[1], [0], [0], [1], [0, 0, 1, 1], [], []>} : vector<8x32xbf16>, vector<32x32xbf16>, vector<8x32xf32> -> vector<8x32xf32>
    %c0_21 = arith.constant 0 : index
    %c0_22 = arith.constant 0 : index
    %39 = vector.load %arg8[%c0_21, %c0_22] : memref<1x32xf32, #tpu.memory_space<vmem>>, vector<1x32xf32>
    %40 = vector.broadcast %39 : vector<1x32xf32> to vector<8x32xf32>
    %41 = arith.addf %38, %40 : vector<8x32xf32>
    %42 = arith.truncf %41 : vector<8x32xf32> to vector<8x32xbf16>
    %c0_23 = arith.constant 0 : index
    %c0_24 = arith.constant 0 : index
    %c0_25 = arith.constant 0 : index
    %43 = vector.load %arg12[%c0_23, %c0_24, %c0_25] : memref<1x8x32xbf16, #tpu.memory_space<vmem>>, vector<1x8x32xbf16>
    %44 = vector.shape_cast %43 : vector<1x8x32xbf16> to vector<8x32xbf16>
    %45 = vector.shape_cast %42 : vector<8x32xbf16> to vector<1x8x32xbf16>
    tpu.vector_store %arg12[%c0_23, %c0_24, %c0_25], %45 {strides = array<i32>} : memref<1x8x32xbf16, #tpu.memory_space<vmem>>, vector<1x8x32xbf16>,
    %c0_26 = arith.constant 0 : index
    %c0_27 = arith.constant 0 : index
    %46 = vector.load %arg9[%c0_26, %c0_27] : memref<32x32xbf16, #tpu.memory_space<vmem>>, vector<32x32xbf16>
    %cst_28 = arith.constant dense<0.000000e+00> : vector<8x32xf32>
    %47 = tpu.matmul %27, %46, %cst_28 {dimension_numbers = #tpu.dot_dimension_numbers<[1], [0], [0], [1], [0, 0, 1, 1], [], []>} : vector<8x32xbf16>, vector<32x32xbf16>, vector<8x32xf32> -> vector<8x32xf32>
    %c0_29 = arith.constant 0 : index
    %c0_30 = arith.constant 0 : index
    %48 = vector.load %arg10[%c0_29, %c0_30] : memref<1x32xf32, #tpu.memory_space<vmem>>, vector<1x32xf32>
    %49 = vector.broadcast %48 : vector<1x32xf32> to vector<8x32xf32>
    %50 = arith.addf %47, %49 : vector<8x32xf32>
    %51 = arith.truncf %50 : vector<8x32xf32> to vector<8x32xbf16>
    %c0_31 = arith.constant 0 : index
    %c0_32 = arith.constant 0 : index
    %c0_33 = arith.constant 0 : index
    %52 = vector.load %arg13[%c0_31, %c0_32, %c0_33] : memref<1x8x32xbf16, #tpu.memory_space<vmem>>, vector<1x8x32xbf16>
    %53 = vector.shape_cast %52 : vector<1x8x32xbf16> to vector<8x32xbf16>
    %54 = vector.shape_cast %51 : vector<8x32xbf16> to vector<1x8x32xbf16>
    tpu.vector_store %arg13[%c0_31, %c0_32, %c0_33], %54 {strides = array<i32>} : memref<1x8x32xbf16, #tpu.memory_space<vmem>>, vector<1x8x32xbf16>,
    return
  }
  func.func @transform_0(%arg0: i32, %arg1: i32) -> (i32, i32, i32) {
    %c0_i32 = arith.constant 0 : i32
    %c0_i32_0 = arith.constant 0 : i32
    return %arg0, %arg1, %c0_i32 : i32, i32, i32
  }
  func.func @transform_1(%arg0: i32, %arg1: i32) -> (i32, i32) {
    %c0_i32 = arith.constant 0 : i32
    %c0_i32_0 = arith.constant 0 : i32
    %c0_i32_1 = arith.constant 0 : i32
    return %c0_i32, %c0_i32_0 : i32, i32
  }
  func.func @transform_2(%arg0: i32, %arg1: i32) -> (i32, i32) {
    %c0_i32 = arith.constant 0 : i32
    %c0_i32_0 = arith.constant 0 : i32
    %c0_i32_1 = arith.constant 0 : i32
    return %c0_i32, %c0_i32_0 : i32, i32
  }
  func.func @transform_3(%arg0: i32, %arg1: i32) -> (i32, i32) {
    %c0_i32 = arith.constant 0 : i32
    %c0_i32_0 = arith.constant 0 : i32
    %c0_i32_1 = arith.constant 0 : i32
    return %c0_i32, %c0_i32_0 : i32, i32
  }
  func.func @transform_4(%arg0: i32, %arg1: i32) -> (i32, i32) {
    %c0_i32 = arith.constant 0 : i32
    %c0_i32_0 = arith.constant 0 : i32
    %c0_i32_1 = arith.constant 0 : i32
    return %c0_i32, %c0_i32_0 : i32, i32
  }
  func.func @transform_5(%arg0: i32, %arg1: i32) -> (i32, i32) {
    %c0_i32 = arith.constant 0 : i32
    %c0_i32_0 = arith.constant 0 : i32
    %c0_i32_1 = arith.constant 0 : i32
    return %c0_i32, %c0_i32_0 : i32, i32
  }
  func.func @transform_6(%arg0: i32, %arg1: i32) -> (i32, i32) {
    %c0_i32 = arith.constant 0 : i32
    %c0_i32_0 = arith.constant 0 : i32
    %c0_i32_1 = arith.constant 0 : i32
    return %c0_i32, %c0_i32_0 : i32, i32
  }
  func.func @transform_7(%arg0: i32, %arg1: i32) -> (i32, i32) {
    %c0_i32 = arith.constant 0 : i32
    %c0_i32_0 = arith.constant 0 : i32
    %c0_i32_1 = arith.constant 0 : i32
    return %c0_i32, %c0_i32_0 : i32, i32
  }
  func.func @transform_8(%arg0: i32, %arg1: i32) -> (i32, i32) {
    %c0_i32 = arith.constant 0 : i32
    %c0_i32_0 = arith.constant 0 : i32
    %c0_i32_1 = arith.constant 0 : i32
    return %c0_i32, %c0_i32_0 : i32, i32
  }
  func.func @transform_9(%arg0: i32, %arg1: i32) -> (i32, i32, i32) {
    %c0_i32 = arith.constant 0 : i32
    %c0_i32_0 = arith.constant 0 : i32
    return %arg0, %arg1, %c0_i32 : i32, i32, i32
  }
  func.func @transform_10(%arg0: i32, %arg1: i32) -> (i32, i32, i32) {
    %c0_i32 = arith.constant 0 : i32
    %c0_i32_0 = arith.constant 0 : i32
    return %arg0, %arg1, %c0_i32 : i32, i32, i32
  }
  func.func @transform_11(%arg0: i32, %arg1: i32) -> (i32, i32, i32) {
    %c0_i32 = arith.constant 0 : i32
    %c0_i32_0 = arith.constant 0 : i32
    return %arg0, %arg1, %c0_i32 : i32, i32, i32
  }
}

module attributes {stable_mosaic.version = 11 : i64} {
  func.func @_flash_attn_kernel(%arg0: i32, %arg1: i32, %arg2: i32, %arg3: memref<1x4x8x8xbf16, #tpu.memory_space<vmem>>, %arg4: memref<1x4x8x8xbf16, #tpu.memory_space<vmem>>, %arg5: memref<1x4x8x8xbf16, #tpu.memory_space<vmem>>, %arg6: memref<1x8x32xbf16, #tpu.memory_space<vmem>>, %arg7: memref<4x8x32xbf16, #tpu.memory_space<vmem>>, %arg8: memref<1x32xf32, #tpu.memory_space<vmem>>, %arg9: memref<1x8x32xbf16, #tpu.memory_space<vmem>>, %arg10: memref<4x8x1xf32, #tpu.memory_space<vmem>>, %arg11: memref<4x8x1xf32, #tpu.memory_space<vmem>>, %arg12: memref<4x8x8xf32, #tpu.memory_space<vmem>>) attributes {dimension_semantics = [#tpu.dimension_semantics<parallel>, #tpu.dimension_semantics<parallel>, #tpu.dimension_semantics<arbitrary>], iteration_bounds = array<i64: 2, 1, 1>, scalar_prefetch = 0 : i64, scratch_operands = 3 : i64, tpu.core_type = #tpu.core_type<tc>, window_params = [{transform_indices = @transform_0, window_bounds = array<i64: 1, 4, 8, 8>}, {transform_indices = @transform_1, window_bounds = array<i64: 1, 4, 8, 8>}, {transform_indices = @transform_2, window_bounds = array<i64: 1, 4, 8, 8>}, {transform_indices = @transform_3, window_bounds = array<i64: 1, 8, 32>}, {pipeline_mode = #tpu.pipeline_mode<synchronous>, transform_indices = @transform_4, window_bounds = array<i64: 4, 8, 32>}, {pipeline_mode = #tpu.pipeline_mode<synchronous>, transform_indices = @transform_5, window_bounds = array<i64: 1, 32>}, {transform_indices = @transform_6, window_bounds = array<i64: 1, 8, 32>}]} {
    %c0_i32 = arith.constant 0 : i32
    %0 = arith.cmpi eq, %arg2, %c0_i32 : i32
    %1 = arith.extui %0 : i1 to i32
    %c0_i32_0 = arith.constant 0 : i32
    %2 = arith.cmpi ne, %1, %c0_i32_0 : i32
    scf.if %2 {
      %cst_35 = arith.constant 0xFF800000 : f32
      %36 = vector.broadcast %cst_35 : f32 to vector<4x8x1xf32>
      %c0_36 = arith.constant 0 : index
      %c0_37 = arith.constant 0 : index
      %c0_38 = arith.constant 0 : index
      %37 = vector.load %arg10[%c0_36, %c0_37, %c0_38] : memref<4x8x1xf32, #tpu.memory_space<vmem>>, vector<4x8x1xf32>
      tpu.vector_store %arg10[%c0_36, %c0_37, %c0_38], %36 {strides = array<i32>} : memref<4x8x1xf32, #tpu.memory_space<vmem>>, vector<4x8x1xf32>,
      %cst_39 = arith.constant 0.000000e+00 : f32
      %38 = vector.broadcast %cst_39 : f32 to vector<4x8x1xf32>
      %c0_40 = arith.constant 0 : index
      %c0_41 = arith.constant 0 : index
      %c0_42 = arith.constant 0 : index
      %39 = vector.load %arg11[%c0_40, %c0_41, %c0_42] : memref<4x8x1xf32, #tpu.memory_space<vmem>>, vector<4x8x1xf32>
      tpu.vector_store %arg11[%c0_40, %c0_41, %c0_42], %38 {strides = array<i32>} : memref<4x8x1xf32, #tpu.memory_space<vmem>>, vector<4x8x1xf32>,
      %cst_43 = arith.constant 0.000000e+00 : f32
      %40 = vector.broadcast %cst_43 : f32 to vector<4x8x8xf32>
      %c0_44 = arith.constant 0 : index
      %c0_45 = arith.constant 0 : index
      %c0_46 = arith.constant 0 : index
      %41 = vector.load %arg12[%c0_44, %c0_45, %c0_46] : memref<4x8x8xf32, #tpu.memory_space<vmem>>, vector<4x8x8xf32>
      tpu.vector_store %arg12[%c0_44, %c0_45, %c0_46], %40 {strides = array<i32>} : memref<4x8x8xf32, #tpu.memory_space<vmem>>, vector<4x8x8xf32>,
    } else {
    }
    %c0 = arith.constant 0 : index
    %c0_1 = arith.constant 0 : index
    %c0_2 = arith.constant 0 : index
    %c0_3 = arith.constant 0 : index
    %3 = vector.load %arg3[%c0, %c0_1, %c0_2, %c0_3] : memref<1x4x8x8xbf16, #tpu.memory_space<vmem>>, vector<1x4x8x8xbf16>
    %4 = vector.shape_cast %3 : vector<1x4x8x8xbf16> to vector<4x8x8xbf16>
    %c0_4 = arith.constant 0 : index
    %c0_5 = arith.constant 0 : index
    %c0_6 = arith.constant 0 : index
    %c0_7 = arith.constant 0 : index
    %5 = vector.load %arg4[%c0_4, %c0_5, %c0_6, %c0_7] : memref<1x4x8x8xbf16, #tpu.memory_space<vmem>>, vector<1x4x8x8xbf16>
    %6 = vector.shape_cast %5 : vector<1x4x8x8xbf16> to vector<4x8x8xbf16>
    %c0_8 = arith.constant 0 : index
    %c0_9 = arith.constant 0 : index
    %c0_10 = arith.constant 0 : index
    %c0_11 = arith.constant 0 : index
    %7 = vector.load %arg5[%c0_8, %c0_9, %c0_10, %c0_11] : memref<1x4x8x8xbf16, #tpu.memory_space<vmem>>, vector<1x4x8x8xbf16>
    %8 = vector.shape_cast %7 : vector<1x4x8x8xbf16> to vector<4x8x8xbf16>
    "tpu.trace_start"() <{level = 10 : i32, message = "hqd,hkd->hqk"}> : () -> ()
    %cst = arith.constant dense<0.000000e+00> : vector<4x8x8xf32>
    %9 = tpu.matmul %4, %6, %cst {dimension_numbers = #tpu.dot_dimension_numbers<[2], [2], [1], [1], [0, 0, 0, 1, 1, 1], [0], [0]>} : vector<4x8x8xbf16>, vector<4x8x8xbf16>, vector<4x8x8xf32> -> vector<4x8x8xf32>
    "tpu.trace_stop"() : () -> ()
    %c0_12 = arith.constant 0 : index
    %c0_13 = arith.constant 0 : index
    %c0_14 = arith.constant 0 : index
    %10 = vector.load %arg10[%c0_12, %c0_13, %c0_14] : memref<4x8x1xf32, #tpu.memory_space<vmem>>, vector<4x8x1xf32>
    %cst_15 = arith.constant dense<0xFF800000> : vector<4x8xf32>
    %11 = vector.multi_reduction <maximumf>, %9, %cst_15 [2] : vector<4x8x8xf32> to vector<4x8xf32>
    %12 = vector.shape_cast %11 : vector<4x8xf32> to vector<4x8x1xf32>
    %13 = arith.maximumf %10, %12 : vector<4x8x1xf32>
    %14 = arith.subf %10, %13 : vector<4x8x1xf32>
    %15 = math.exp %14 : vector<4x8x1xf32>
    %16 = vector.broadcast %13 : vector<4x8x1xf32> to vector<4x8x8xf32>
    %17 = arith.subf %9, %16 : vector<4x8x8xf32>
    %18 = math.exp %17 : vector<4x8x8xf32>
    %c0_16 = arith.constant 0 : index
    %c0_17 = arith.constant 0 : index
    %c0_18 = arith.constant 0 : index
    %19 = vector.load %arg11[%c0_16, %c0_17, %c0_18] : memref<4x8x1xf32, #tpu.memory_space<vmem>>, vector<4x8x1xf32>
    %20 = arith.mulf %15, %19 : vector<4x8x1xf32>
    %cst_19 = arith.constant dense<0.000000e+00> : vector<4x8xf32>
    %21 = vector.multi_reduction <add>, %18, %cst_19 [2] : vector<4x8x8xf32> to vector<4x8xf32>
    %22 = vector.shape_cast %21 : vector<4x8xf32> to vector<4x8x1xf32>
    %23 = arith.addf %20, %22 : vector<4x8x1xf32>
    %c0_20 = arith.constant 0 : index
    %c0_21 = arith.constant 0 : index
    %c0_22 = arith.constant 0 : index
    %24 = vector.load %arg11[%c0_20, %c0_21, %c0_22] : memref<4x8x1xf32, #tpu.memory_space<vmem>>, vector<4x8x1xf32>
    tpu.vector_store %arg11[%c0_20, %c0_21, %c0_22], %23 {strides = array<i32>} : memref<4x8x1xf32, #tpu.memory_space<vmem>>, vector<4x8x1xf32>,
    %c0_23 = arith.constant 0 : index
    %c0_24 = arith.constant 0 : index
    %c0_25 = arith.constant 0 : index
    %25 = vector.load %arg12[%c0_23, %c0_24, %c0_25] : memref<4x8x8xf32, #tpu.memory_space<vmem>>, vector<4x8x8xf32>
    %26 = vector.broadcast %15 : vector<4x8x1xf32> to vector<4x8x8xf32>
    %27 = arith.mulf %26, %25 : vector<4x8x8xf32>
    %28 = arith.truncf %18 : vector<4x8x8xf32> to vector<4x8x8xbf16>
    "tpu.trace_start"() <{level = 10 : i32, message = "hqk,hkd->hqd"}> : () -> ()
    %cst_26 = arith.constant dense<0.000000e+00> : vector<4x8x8xf32>
    %29 = tpu.matmul %28, %8, %cst_26 {dimension_numbers = #tpu.dot_dimension_numbers<[2], [1], [1], [2], [0, 0, 0, 1, 1, 2], [0], [0]>} : vector<4x8x8xbf16>, vector<4x8x8xbf16>, vector<4x8x8xf32> -> vector<4x8x8xf32>
    "tpu.trace_stop"() : () -> ()
    %30 = arith.addf %27, %29 : vector<4x8x8xf32>
    %c0_27 = arith.constant 0 : index
    %c0_28 = arith.constant 0 : index
    %c0_29 = arith.constant 0 : index
    %31 = vector.load %arg12[%c0_27, %c0_28, %c0_29] : memref<4x8x8xf32, #tpu.memory_space<vmem>>, vector<4x8x8xf32>
    tpu.vector_store %arg12[%c0_27, %c0_28, %c0_29], %30 {strides = array<i32>} : memref<4x8x8xf32, #tpu.memory_space<vmem>>, vector<4x8x8xf32>,
    %c0_30 = arith.constant 0 : index
    %c0_31 = arith.constant 0 : index
    %c0_32 = arith.constant 0 : index
    %32 = vector.load %arg10[%c0_30, %c0_31, %c0_32] : memref<4x8x1xf32, #tpu.memory_space<vmem>>, vector<4x8x1xf32>
    tpu.vector_store %arg10[%c0_30, %c0_31, %c0_32], %13 {strides = array<i32>} : memref<4x8x1xf32, #tpu.memory_space<vmem>>, vector<4x8x1xf32>,
    %c0_i32_33 = arith.constant 0 : i32
    %33 = arith.cmpi eq, %arg2, %c0_i32_33 : i32
    %34 = arith.extui %33 : i1 to i32
    %c0_i32_34 = arith.constant 0 : i32
    %35 = arith.cmpi ne, %34, %c0_i32_34 : i32
    scf.if %35 {
      %c0_35 = arith.constant 0 : index
      %c0_36 = arith.constant 0 : index
      %c0_37 = arith.constant 0 : index
      %36 = vector.load %arg12[%c0_35, %c0_36, %c0_37] : memref<4x8x8xf32, #tpu.memory_space<vmem>>, vector<4x8x8xf32>
      %c0_38 = arith.constant 0 : index
      %c0_39 = arith.constant 0 : index
      %c0_40 = arith.constant 0 : index
      %37 = vector.load %arg11[%c0_38, %c0_39, %c0_40] : memref<4x8x1xf32, #tpu.memory_space<vmem>>, vector<4x8x1xf32>
      %38 = tpu.reciprocal %37 {approx = true} : vector<4x8x1xf32> -> vector<4x8x1xf32>
      %39 = vector.broadcast %38 : vector<4x8x1xf32> to vector<4x8x8xf32>
      %40 = arith.mulf %36, %39 : vector<4x8x8xf32>
      %41 = arith.truncf %40 : vector<4x8x8xf32> to vector<4x8x8xbf16>
      %c0_41 = arith.constant 0 : index
      %c0_42 = arith.constant 0 : index
      %c0_43 = arith.constant 0 : index
      %42 = vector.load %arg7[%c0_41, %c0_42, %c0_43] : memref<4x8x32xbf16, #tpu.memory_space<vmem>>, vector<4x8x32xbf16>
      "tpu.trace_start"() <{level = 10 : i32, message = "hqd,hdn->hqn"}> : () -> ()
      %cst_44 = arith.constant dense<0.000000e+00> : vector<4x8x32xf32>
      %43 = tpu.matmul %41, %42, %cst_44 {dimension_numbers = #tpu.dot_dimension_numbers<[2], [1], [1], [2], [0, 0, 0, 1, 1, 2], [0], [0]>} : vector<4x8x8xbf16>, vector<4x8x32xbf16>, vector<4x8x32xf32> -> vector<4x8x32xf32>
      "tpu.trace_stop"() : () -> ()
      %cst_45 = arith.constant dense<0.000000e+00> : vector<8x32xf32>
      %44 = vector.multi_reduction <add>, %43, %cst_45 [0] : vector<4x8x32xf32> to vector<8x32xf32>
      %c0_46 = arith.constant 0 : index
      %c0_47 = arith.constant 0 : index
      %45 = vector.load %arg8[%c0_46, %c0_47] : memref<1x32xf32, #tpu.memory_space<vmem>>, vector<1x32xf32>
      %46 = vector.broadcast %45 : vector<1x32xf32> to vector<8x32xf32>
      %47 = arith.addf %44, %46 : vector<8x32xf32>
      %c0_48 = arith.constant 0 : index
      %c0_49 = arith.constant 0 : index
      %c0_50 = arith.constant 0 : index
      %48 = vector.load %arg6[%c0_48, %c0_49, %c0_50] : memref<1x8x32xbf16, #tpu.memory_space<vmem>>, vector<1x8x32xbf16>
      %49 = vector.shape_cast %48 : vector<1x8x32xbf16> to vector<8x32xbf16>
      %50 = arith.extf %49 : vector<8x32xbf16> to vector<8x32xf32>
      %51 = arith.addf %50, %47 : vector<8x32xf32>
      %52 = arith.truncf %51 : vector<8x32xf32> to vector<8x32xbf16>
      %c0_51 = arith.constant 0 : index
      %c0_52 = arith.constant 0 : index
      %c0_53 = arith.constant 0 : index
      %53 = vector.load %arg9[%c0_51, %c0_52, %c0_53] : memref<1x8x32xbf16, #tpu.memory_space<vmem>>, vector<1x8x32xbf16>
      %54 = vector.shape_cast %53 : vector<1x8x32xbf16> to vector<8x32xbf16>
      %55 = vector.shape_cast %52 : vector<8x32xbf16> to vector<1x8x32xbf16>
      tpu.vector_store %arg9[%c0_51, %c0_52, %c0_53], %55 {strides = array<i32>} : memref<1x8x32xbf16, #tpu.memory_space<vmem>>, vector<1x8x32xbf16>,
    } else {
    }
    return
  }
  func.func @transform_0(%arg0: i32, %arg1: i32, %arg2: i32) -> (i32, i32, i32, i32) {
    %c0_i32 = arith.constant 0 : i32
    %c0_i32_0 = arith.constant 0 : i32
    %c0_i32_1 = arith.constant 0 : i32
    return %arg0, %c0_i32, %arg1, %c0_i32_0 : i32, i32, i32, i32
  }
  func.func @transform_1(%arg0: i32, %arg1: i32, %arg2: i32) -> (i32, i32, i32, i32) {
    %c0_i32 = arith.constant 0 : i32
    %c0_i32_0 = arith.constant 0 : i32
    %c0_i32_1 = arith.constant 0 : i32
    return %arg0, %c0_i32, %arg2, %c0_i32_0 : i32, i32, i32, i32
  }
  func.func @transform_2(%arg0: i32, %arg1: i32, %arg2: i32) -> (i32, i32, i32, i32) {
    %c0_i32 = arith.constant 0 : i32
    %c0_i32_0 = arith.constant 0 : i32
    %c0_i32_1 = arith.constant 0 : i32
    return %arg0, %c0_i32, %arg2, %c0_i32_0 : i32, i32, i32, i32
  }
  func.func @transform_3(%arg0: i32, %arg1: i32, %arg2: i32) -> (i32, i32, i32) {
    %c0_i32 = arith.constant 0 : i32
    %c0_i32_0 = arith.constant 0 : i32
    return %arg0, %arg1, %c0_i32 : i32, i32, i32
  }
  func.func @transform_4(%arg0: i32, %arg1: i32, %arg2: i32) -> (i32, i32, i32) {
    %c0_i32 = arith.constant 0 : i32
    %c0_i32_0 = arith.constant 0 : i32
    %c0_i32_1 = arith.constant 0 : i32
    %c0_i32_2 = arith.constant 0 : i32
    return %c0_i32, %c0_i32_0, %c0_i32_1 : i32, i32, i32
  }
  func.func @transform_5(%arg0: i32, %arg1: i32, %arg2: i32) -> (i32, i32) {
    %c0_i32 = arith.constant 0 : i32
    %c0_i32_0 = arith.constant 0 : i32
    %c0_i32_1 = arith.constant 0 : i32
    return %c0_i32, %c0_i32_0 : i32, i32
  }
  func.func @transform_6(%arg0: i32, %arg1: i32, %arg2: i32) -> (i32, i32, i32) {
    %c0_i32 = arith.constant 0 : i32
    %c0_i32_0 = arith.constant 0 : i32
    return %arg0, %arg1, %c0_i32 : i32, i32, i32
  }
}

module attributes {stable_mosaic.version = 11 : i64} {
  func.func @_ffn_kernel(%arg0: i32, %arg1: i32, %arg2: i32, %arg3: memref<1x8x32xbf16, #tpu.memory_space<vmem>>, %arg4: memref<1x32xf32, #tpu.memory_space<vmem>>, %arg5: memref<1x32xf32, #tpu.memory_space<vmem>>, %arg6: memref<32x128xbf16, #tpu.memory_space<vmem>>, %arg7: memref<1x128xf32, #tpu.memory_space<vmem>>, %arg8: memref<128x32xbf16, #tpu.memory_space<vmem>>, %arg9: memref<1x32xf32, #tpu.memory_space<vmem>>, %arg10: memref<1x8x32xbf16, #tpu.memory_space<vmem>>, %arg11: memref<8x32xbf16, #tpu.memory_space<vmem>>, %arg12: memref<8x32xf32, #tpu.memory_space<vmem>>) attributes {dimension_semantics = [#tpu.dimension_semantics<parallel>, #tpu.dimension_semantics<parallel>, #tpu.dimension_semantics<arbitrary>], iteration_bounds = array<i64: 2, 1, 1>, scalar_prefetch = 0 : i64, scratch_operands = 2 : i64, tpu.core_type = #tpu.core_type<tc>, window_params = [{transform_indices = @transform_0, window_bounds = array<i64: 1, 8, 32>}, {pipeline_mode = #tpu.pipeline_mode<synchronous>, transform_indices = @transform_1, window_bounds = array<i64: 1, 32>}, {pipeline_mode = #tpu.pipeline_mode<synchronous>, transform_indices = @transform_2, window_bounds = array<i64: 1, 32>}, {transform_indices = @transform_3, window_bounds = array<i64: 32, 128>}, {transform_indices = @transform_4, window_bounds = array<i64: 1, 128>}, {transform_indices = @transform_5, window_bounds = array<i64: 128, 32>}, {pipeline_mode = #tpu.pipeline_mode<synchronous>, transform_indices = @transform_6, window_bounds = array<i64: 1, 32>}, {transform_indices = @transform_7, window_bounds = array<i64: 1, 8, 32>}]} {
    %c0_i32 = arith.constant 0 : i32
    %0 = arith.cmpi eq, %arg2, %c0_i32 : i32
    %1 = arith.extui %0 : i1 to i32
    %c0_i32_0 = arith.constant 0 : i32
    %2 = arith.cmpi ne, %1, %c0_i32_0 : i32
    scf.if %2 {
      %c0_19 = arith.constant 0 : index
      %c0_20 = arith.constant 0 : index
      %c0_21 = arith.constant 0 : index
      %31 = vector.load %arg3[%c0_19, %c0_20, %c0_21] : memref<1x8x32xbf16, #tpu.memory_space<vmem>>, vector<1x8x32xbf16>
      %32 = vector.shape_cast %31 : vector<1x8x32xbf16> to vector<8x32xbf16>
      %33 = arith.extf %32 : vector<8x32xbf16> to vector<8x32xf32>
      %c0_22 = arith.constant 0 : index
      %c0_23 = arith.constant 0 : index
      %34 = vector.load %arg4[%c0_22, %c0_23] : memref<1x32xf32, #tpu.memory_space<vmem>>, vector<1x32xf32>
      %c0_24 = arith.constant 0 : index
      %c0_25 = arith.constant 0 : index
      %35 = vector.load %arg5[%c0_24, %c0_25] : memref<1x32xf32, #tpu.memory_space<vmem>>, vector<1x32xf32>
      %cst_26 = arith.constant dense<0.000000e+00> : vector<8xf32>
      %36 = vector.multi_reduction <add>, %33, %cst_26 [1] : vector<8x32xf32> to vector<8xf32>
      %37 = vector.shape_cast %36 : vector<8xf32> to vector<8x1xf32>
      %cst_27 = arith.constant 3.200000e+01 : f32
      %38 = vector.broadcast %cst_27 : f32 to vector<8x1xf32>
      %39 = arith.divf %37, %38 : vector<8x1xf32>
      %40 = vector.broadcast %39 : vector<8x1xf32> to vector<8x32xf32>
      %41 = arith.subf %33, %40 : vector<8x32xf32>
      %42 = arith.mulf %41, %41 : vector<8x32xf32>
      %cst_28 = arith.constant dense<0.000000e+00> : vector<8xf32>
      %43 = vector.multi_reduction <add>, %42, %cst_28 [1] : vector<8x32xf32> to vector<8xf32>
      %44 = vector.shape_cast %43 : vector<8xf32> to vector<8x1xf32>
      %cst_29 = arith.constant 3.200000e+01 : f32
      %45 = vector.broadcast %cst_29 : f32 to vector<8x1xf32>
      %46 = arith.divf %44, %45 : vector<8x1xf32>
      %47 = vector.broadcast %39 : vector<8x1xf32> to vector<8x32xf32>
      %48 = arith.subf %33, %47 : vector<8x32xf32>
      %cst_30 = arith.constant 9.99999974E-6 : f32
      %49 = vector.broadcast %cst_30 : f32 to vector<8x1xf32>
      %50 = arith.addf %46, %49 : vector<8x1xf32>
      %51 = math.rsqrt %50 : vector<8x1xf32>
      %52 = vector.broadcast %51 : vector<8x1xf32> to vector<8x32xf32>
      %53 = arith.mulf %48, %52 : vector<8x32xf32>
      %54 = vector.broadcast %34 : vector<1x32xf32> to vector<8x32xf32>
      %55 = arith.mulf %53, %54 : vector<8x32xf32>
      %56 = vector.broadcast %35 : vector<1x32xf32> to vector<8x32xf32>
      %57 = arith.addf %55, %56 : vector<8x32xf32>
      %58 = arith.truncf %57 : vector<8x32xf32> to vector<8x32xbf16>
      %c0_31 = arith.constant 0 : index
      %c0_32 = arith.constant 0 : index
      %59 = vector.load %arg11[%c0_31, %c0_32] : memref<8x32xbf16, #tpu.memory_space<vmem>>, vector<8x32xbf16>
      tpu.vector_store %arg11[%c0_31, %c0_32], %58 {strides = array<i32>} : memref<8x32xbf16, #tpu.memory_space<vmem>>, vector<8x32xbf16>,
      %cst_33 = arith.constant 0.000000e+00 : f32
      %60 = vector.broadcast %cst_33 : f32 to vector<8x32xf32>
      %c0_34 = arith.constant 0 : index
      %c0_35 = arith.constant 0 : index
      %61 = vector.load %arg12[%c0_34, %c0_35] : memref<8x32xf32, #tpu.memory_space<vmem>>, vector<8x32xf32>
      tpu.vector_store %arg12[%c0_34, %c0_35], %60 {strides = array<i32>} : memref<8x32xf32, #tpu.memory_space<vmem>>, vector<8x32xf32>,
    } else {
    }
    %c0 = arith.constant 0 : index
    %c0_1 = arith.constant 0 : index
    %3 = vector.load %arg11[%c0, %c0_1] : memref<8x32xbf16, #tpu.memory_space<vmem>>, vector<8x32xbf16>
    %c0_2 = arith.constant 0 : index
    %c0_3 = arith.constant 0 : index
    %4 = vector.load %arg6[%c0_2, %c0_3] : memref<32x128xbf16, #tpu.memory_space<vmem>>, vector<32x128xbf16>
    %cst = arith.constant dense<0.000000e+00> : vector<8x128xf32>
    %5 = tpu.matmul %3, %4, %cst {dimension_numbers = #tpu.dot_dimension_numbers<[1], [0], [0], [1], [0, 0, 1, 1], [], []>} : vector<8x32xbf16>, vector<32x128xbf16>, vector<8x128xf32> -> vector<8x128xf32>
    %c0_4 = arith.constant 0 : index
    %c0_5 = arith.constant 0 : index
    %6 = vector.load %arg7[%c0_4, %c0_5] : memref<1x128xf32, #tpu.memory_space<vmem>>, vector<1x128xf32>
    %7 = vector.broadcast %6 : vector<1x128xf32> to vector<8x128xf32>
    %8 = arith.addf %5, %7 : vector<8x128xf32>
    %cst_6 = arith.constant 5.000000e-01 : f32
    %9 = vector.broadcast %cst_6 : f32 to vector<8x128xf32>
    %10 = arith.mulf %9, %8 : vector<8x128xf32>
    %cst_7 = arith.constant 4.471500e-02 : f32
    %11 = vector.broadcast %cst_7 : f32 to vector<8x128xf32>
    %12 = arith.mulf %11, %8 : vector<8x128xf32>
    %13 = arith.mulf %12, %8 : vector<8x128xf32>
    %14 = arith.mulf %13, %8 : vector<8x128xf32>
    %15 = arith.addf %8, %14 : vector<8x128xf32>
    %cst_8 = arith.constant 0.797884583 : f32
    %16 = vector.broadcast %cst_8 : f32 to vector<8x128xf32>
    %17 = arith.mulf %16, %15 : vector<8x128xf32>
    %18 = math.tanh %17 : vector<8x128xf32>
    %cst_9 = arith.constant 1.000000e+00 : f32
    %19 = vector.broadcast %cst_9 : f32 to vector<8x128xf32>
    %20 = arith.addf %19, %18 : vector<8x128xf32>
    %21 = arith.mulf %10, %20 : vector<8x128xf32>
    %c0_10 = arith.constant 0 : index
    %c0_11 = arith.constant 0 : index
    %22 = vector.load %arg12[%c0_10, %c0_11] : memref<8x32xf32, #tpu.memory_space<vmem>>, vector<8x32xf32>
    %23 = arith.truncf %21 : vector<8x128xf32> to vector<8x128xbf16>
    %c0_12 = arith.constant 0 : index
    %c0_13 = arith.constant 0 : index
    %24 = vector.load %arg8[%c0_12, %c0_13] : memref<128x32xbf16, #tpu.memory_space<vmem>>, vector<128x32xbf16>
    %cst_14 = arith.constant dense<0.000000e+00> : vector<8x32xf32>
    %25 = tpu.matmul %23, %24, %cst_14 {dimension_numbers = #tpu.dot_dimension_numbers<[1], [0], [0], [1], [0, 0, 1, 1], [], []>} : vector<8x128xbf16>, vector<128x32xbf16>, vector<8x32xf32> -> vector<8x32xf32>
    %26 = arith.addf %22, %25 : vector<8x32xf32>
    %c0_15 = arith.constant 0 : index
    %c0_16 = arith.constant 0 : index
    %27 = vector.load %arg12[%c0_15, %c0_16] : memref<8x32xf32, #tpu.memory_space<vmem>>, vector<8x32xf32>
    tpu.vector_store %arg12[%c0_15, %c0_16], %26 {strides = array<i32>} : memref<8x32xf32, #tpu.memory_space<vmem>>, vector<8x32xf32>,
    %c0_i32_17 = arith.constant 0 : i32
    %28 = arith.cmpi eq, %arg2, %c0_i32_17 : i32
    %29 = arith.extui %28 : i1 to i32
    %c0_i32_18 = arith.constant 0 : i32
    %30 = arith.cmpi ne, %29, %c0_i32_18 : i32
    scf.if %30 {
      %c0_19 = arith.constant 0 : index
      %c0_20 = arith.constant 0 : index
      %31 = vector.load %arg12[%c0_19, %c0_20] : memref<8x32xf32, #tpu.memory_space<vmem>>, vector<8x32xf32>
      %c0_21 = arith.constant 0 : index
      %c0_22 = arith.constant 0 : index
      %32 = vector.load %arg9[%c0_21, %c0_22] : memref<1x32xf32, #tpu.memory_space<vmem>>, vector<1x32xf32>
      %33 = vector.broadcast %32 : vector<1x32xf32> to vector<8x32xf32>
      %34 = arith.addf %31, %33 : vector<8x32xf32>
      %c0_23 = arith.constant 0 : index
      %c0_24 = arith.constant 0 : index
      %c0_25 = arith.constant 0 : index
      %35 = vector.load %arg3[%c0_23, %c0_24, %c0_25] : memref<1x8x32xbf16, #tpu.memory_space<vmem>>, vector<1x8x32xbf16>
      %36 = vector.shape_cast %35 : vector<1x8x32xbf16> to vector<8x32xbf16>
      %37 = arith.extf %36 : vector<8x32xbf16> to vector<8x32xf32>
      %38 = arith.addf %37, %34 : vector<8x32xf32>
      %39 = arith.truncf %38 : vector<8x32xf32> to vector<8x32xbf16>
      %c0_26 = arith.constant 0 : index
      %c0_27 = arith.constant 0 : index
      %c0_28 = arith.constant 0 : index
      %40 = vector.load %arg10[%c0_26, %c0_27, %c0_28] : memref<1x8x32xbf16, #tpu.memory_space<vmem>>, vector<1x8x32xbf16>
      %41 = vector.shape_cast %40 : vector<1x8x32xbf16> to vector<8x32xbf16>
      %42 = vector.shape_cast %39 : vector<8x32xbf16> to vector<1x8x32xbf16>
      tpu.vector_store %arg10[%c0_26, %c0_27, %c0_28], %42 {strides = array<i32>} : memref<1x8x32xbf16, #tpu.memory_space<vmem>>, vector<1x8x32xbf16>,
    } else {
    }
    return
  }
  func.func @transform_0(%arg0: i32, %arg1: i32, %arg2: i32) -> (i32, i32, i32) {
    %c0_i32 = arith.constant 0 : i32
    %c0_i32_0 = arith.constant 0 : i32
    return %arg0, %arg1, %c0_i32 : i32, i32, i32
  }
  func.func @transform_1(%arg0: i32, %arg1: i32, %arg2: i32) -> (i32, i32) {
    %c0_i32 = arith.constant 0 : i32
    %c0_i32_0 = arith.constant 0 : i32
    %c0_i32_1 = arith.constant 0 : i32
    return %c0_i32, %c0_i32_0 : i32, i32
  }
  func.func @transform_2(%arg0: i32, %arg1: i32, %arg2: i32) -> (i32, i32) {
    %c0_i32 = arith.constant 0 : i32
    %c0_i32_0 = arith.constant 0 : i32
    %c0_i32_1 = arith.constant 0 : i32
    return %c0_i32, %c0_i32_0 : i32, i32
  }
  func.func @transform_3(%arg0: i32, %arg1: i32, %arg2: i32) -> (i32, i32) {
    %c0_i32 = arith.constant 0 : i32
    %c0_i32_0 = arith.constant 0 : i32
    return %c0_i32, %arg2 : i32, i32
  }
  func.func @transform_4(%arg0: i32, %arg1: i32, %arg2: i32) -> (i32, i32) {
    %c0_i32 = arith.constant 0 : i32
    %c0_i32_0 = arith.constant 0 : i32
    return %c0_i32, %arg2 : i32, i32
  }
  func.func @transform_5(%arg0: i32, %arg1: i32, %arg2: i32) -> (i32, i32) {
    %c0_i32 = arith.constant 0 : i32
    %c0_i32_0 = arith.constant 0 : i32
    return %arg2, %c0_i32 : i32, i32
  }
  func.func @transform_6(%arg0: i32, %arg1: i32, %arg2: i32) -> (i32, i32) {
    %c0_i32 = arith.constant 0 : i32
    %c0_i32_0 = arith.constant 0 : i32
    %c0_i32_1 = arith.constant 0 : i32
    return %c0_i32, %c0_i32_0 : i32, i32
  }
  func.func @transform_7(%arg0: i32, %arg1: i32, %arg2: i32) -> (i32, i32, i32) {
    %c0_i32 = arith.constant 0 : i32
    %c0_i32_0 = arith.constant 0 : i32
    return %arg0, %arg1, %c0_i32 : i32, i32, i32
  }
}

module attributes {stable_mosaic.version = 11 : i64} {
  func.func @_head_kernel(%arg0: i32, %arg1: i32, %arg2: memref<1x8x32xbf16, #tpu.memory_space<vmem>>, %arg3: memref<1x32xf32, #tpu.memory_space<vmem>>, %arg4: memref<1x32xf32, #tpu.memory_space<vmem>>, %arg5: memref<1x32xf32, #tpu.memory_space<vmem>>, %arg6: memref<1x1xf32, #tpu.memory_space<vmem>>, %arg7: memref<1x8x1xf32, #tpu.memory_space<vmem>>) attributes {dimension_semantics = [#tpu.dimension_semantics<parallel>, #tpu.dimension_semantics<parallel>], iteration_bounds = array<i64: 2, 1>, scalar_prefetch = 0 : i64, scratch_operands = 0 : i64, tpu.core_type = #tpu.core_type<tc>, window_params = [{transform_indices = @transform_0, window_bounds = array<i64: 1, 8, 32>}, {pipeline_mode = #tpu.pipeline_mode<synchronous>, transform_indices = @transform_1, window_bounds = array<i64: 1, 32>}, {pipeline_mode = #tpu.pipeline_mode<synchronous>, transform_indices = @transform_2, window_bounds = array<i64: 1, 32>}, {pipeline_mode = #tpu.pipeline_mode<synchronous>, transform_indices = @transform_3, window_bounds = array<i64: 1, 32>}, {pipeline_mode = #tpu.pipeline_mode<synchronous>, transform_indices = @transform_4, window_bounds = array<i64: 1, 1>}, {transform_indices = @transform_5, window_bounds = array<i64: 1, 8, 1>}]} {
    %c0 = arith.constant 0 : index
    %c0_0 = arith.constant 0 : index
    %c0_1 = arith.constant 0 : index
    %0 = vector.load %arg2[%c0, %c0_0, %c0_1] : memref<1x8x32xbf16, #tpu.memory_space<vmem>>, vector<1x8x32xbf16>
    %1 = vector.shape_cast %0 : vector<1x8x32xbf16> to vector<8x32xbf16>
    %2 = arith.extf %1 : vector<8x32xbf16> to vector<8x32xf32>
    %c0_2 = arith.constant 0 : index
    %c0_3 = arith.constant 0 : index
    %3 = vector.load %arg3[%c0_2, %c0_3] : memref<1x32xf32, #tpu.memory_space<vmem>>, vector<1x32xf32>
    %c0_4 = arith.constant 0 : index
    %c0_5 = arith.constant 0 : index
    %4 = vector.load %arg4[%c0_4, %c0_5] : memref<1x32xf32, #tpu.memory_space<vmem>>, vector<1x32xf32>
    %cst = arith.constant dense<0.000000e+00> : vector<8xf32>
    %5 = vector.multi_reduction <add>, %2, %cst [1] : vector<8x32xf32> to vector<8xf32>
    %6 = vector.shape_cast %5 : vector<8xf32> to vector<8x1xf32>
    %cst_6 = arith.constant 3.200000e+01 : f32
    %7 = vector.broadcast %cst_6 : f32 to vector<8x1xf32>
    %8 = arith.divf %6, %7 : vector<8x1xf32>
    %9 = vector.broadcast %8 : vector<8x1xf32> to vector<8x32xf32>
    %10 = arith.subf %2, %9 : vector<8x32xf32>
    %11 = arith.mulf %10, %10 : vector<8x32xf32>
    %cst_7 = arith.constant dense<0.000000e+00> : vector<8xf32>
    %12 = vector.multi_reduction <add>, %11, %cst_7 [1] : vector<8x32xf32> to vector<8xf32>
    %13 = vector.shape_cast %12 : vector<8xf32> to vector<8x1xf32>
    %cst_8 = arith.constant 3.200000e+01 : f32
    %14 = vector.broadcast %cst_8 : f32 to vector<8x1xf32>
    %15 = arith.divf %13, %14 : vector<8x1xf32>
    %16 = vector.broadcast %8 : vector<8x1xf32> to vector<8x32xf32>
    %17 = arith.subf %2, %16 : vector<8x32xf32>
    %cst_9 = arith.constant 9.99999974E-6 : f32
    %18 = vector.broadcast %cst_9 : f32 to vector<8x1xf32>
    %19 = arith.addf %15, %18 : vector<8x1xf32>
    %20 = math.rsqrt %19 : vector<8x1xf32>
    %21 = vector.broadcast %20 : vector<8x1xf32> to vector<8x32xf32>
    %22 = arith.mulf %17, %21 : vector<8x32xf32>
    %23 = vector.broadcast %3 : vector<1x32xf32> to vector<8x32xf32>
    %24 = arith.mulf %22, %23 : vector<8x32xf32>
    %25 = vector.broadcast %4 : vector<1x32xf32> to vector<8x32xf32>
    %26 = arith.addf %24, %25 : vector<8x32xf32>
    %c0_10 = arith.constant 0 : index
    %c0_11 = arith.constant 0 : index
    %27 = vector.load %arg5[%c0_10, %c0_11] : memref<1x32xf32, #tpu.memory_space<vmem>>, vector<1x32xf32>
    %28 = vector.broadcast %27 : vector<1x32xf32> to vector<8x32xf32>
    %29 = arith.mulf %26, %28 : vector<8x32xf32>
    %cst_12 = arith.constant dense<0.000000e+00> : vector<8xf32>
    %30 = vector.multi_reduction <add>, %29, %cst_12 [1] : vector<8x32xf32> to vector<8xf32>
    %31 = vector.shape_cast %30 : vector<8xf32> to vector<8x1xf32>
    %c0_13 = arith.constant 0 : index
    %c0_14 = arith.constant 0 : index
    %32 = vector.load %arg6[%c0_13, %c0_14] : memref<1x1xf32, #tpu.memory_space<vmem>>, vector<1x1xf32>
    %33 = vector.broadcast %32 : vector<1x1xf32> to vector<8x1xf32>
    %34 = arith.addf %31, %33 : vector<8x1xf32>
    %c0_15 = arith.constant 0 : index
    %c0_16 = arith.constant 0 : index
    %c0_17 = arith.constant 0 : index
    %35 = vector.load %arg7[%c0_15, %c0_16, %c0_17] : memref<1x8x1xf32, #tpu.memory_space<vmem>>, vector<1x8x1xf32>
    %36 = vector.shape_cast %35 : vector<1x8x1xf32> to vector<8x1xf32>
    %37 = vector.shape_cast %34 : vector<8x1xf32> to vector<1x8x1xf32>
    tpu.vector_store %arg7[%c0_15, %c0_16, %c0_17], %37 {strides = array<i32>} : memref<1x8x1xf32, #tpu.memory_space<vmem>>, vector<1x8x1xf32>,
    return
  }
  func.func @transform_0(%arg0: i32, %arg1: i32) -> (i32, i32, i32) {
    %c0_i32 = arith.constant 0 : i32
    %c0_i32_0 = arith.constant 0 : i32
    return %arg0, %arg1, %c0_i32 : i32, i32, i32
  }
  func.func @transform_1(%arg0: i32, %arg1: i32) -> (i32, i32) {
    %c0_i32 = arith.constant 0 : i32
    %c0_i32_0 = arith.constant 0 : i32
    %c0_i32_1 = arith.constant 0 : i32
    return %c0_i32, %c0_i32_0 : i32, i32
  }
  func.func @transform_2(%arg0: i32, %arg1: i32) -> (i32, i32) {
    %c0_i32 = arith.constant 0 : i32
    %c0_i32_0 = arith.constant 0 : i32
    %c0_i32_1 = arith.constant 0 : i32
    return %c0_i32, %c0_i32_0 : i32, i32
  }
  func.func @transform_3(%arg0: i32, %arg1: i32) -> (i32, i32) {
    %c0_i32 = arith.constant 0 : i32
    %c0_i32_0 = arith.constant 0 : i32
    %c0_i32_1 = arith.constant 0 : i32
    return %c0_i32, %c0_i32_0 : i32, i32
  }
  func.func @transform_4(%arg0: i32, %arg1: i32) -> (i32, i32) {
    %c0_i32 = arith.constant 0 : i32
    %c0_i32_0 = arith.constant 0 : i32
    %c0_i32_1 = arith.constant 0 : i32
    return %c0_i32, %c0_i32_0 : i32, i32
  }
  func.func @transform_5(%arg0: i32, %arg1: i32) -> (i32, i32, i32) {
    %c0_i32 = arith.constant 0 : i32
    %c0_i32_0 = arith.constant 0 : i32
    return %arg0, %arg1, %c0_i32 : i32, i32, i32
  }
}

</mosaic_0001>

<llo_original>
// kernel: transformer_lm_forward.13
$region0: #{transformer_lm_forward.13}
  #allocation0 [shape = 'u32[]', space=smem, size = 0x4, offset = 0x4, fixed_abs, tag = 'smem constant byte address 0x4 - core index']
  #allocation1 [shape = 'u32[144,128]{1,0:T(1,128)}', space=vmem, size = 0x12000, scoped, tag = 'internal scratch']
  #allocation2 [shape = 'f32[1,1]{1,0:T(1,128)S(1)}', space=vmem, size = 0x200, scoped, tag = 'scoped memory for transformer_lm_forward.13']
  %s0 = inlined_call_operand.vmem [shape: bf16[2,8,32], index: 0, kind: input, shape index: {}]
  %s1 = inlined_call_operand.vmem [shape: f32[1,32], index: 1, kind: input, shape index: {}]
  %s2 = inlined_call_operand.vmem [shape: f32[1,32], index: 2, kind: input, shape index: {}]
  %s3 = inlined_call_operand.vmem [shape: f32[1,32], index: 3, kind: input, shape index: {}]
  %s4 = inlined_call_operand.<no memory space> [shape: f32[1,1], index: 4, kind: input, shape index: {}]
  %s5 = inlined_call_operand.vmem [shape: f32[2,8,1], index: 5, kind: output, shape index: {}]
  %s6 = sld [smem:[#allocation0]]
  $region53: #{transformer_lm_forward.13} parent=0
    _
  %s8 = ssub.s32 1, %s6
  %s9 = scalar_select 0, %s8, %s6
  %v10 = vstv %s4
  %11 = vst [vmem:[#allocation2] sm:$0x1] %v10
  loop: start=0, step=1, limit=4
  $region2: #{transformer_lm_forward.13} parent=0 // loop_pre_header
    _
  $region3: #{transformer_lm_forward.13} parent=0 // loop_header
    %s13 = sphi 0, %s17
    %p14 = scmp.ge.s32.totalorder %s13, 4
    %s20 = sphi 0, %s32
    %s21 = sphi 0, %s28
    %s22 = sphi 0, %s20
    %s23 = sphi 0, %s21
    %s24 = sphi 0, %s22
    %s25 = sphi 0, %s23
    %s37 = sphi 0, %s39
    %s40 = sphi 0, %s37
    %s41 = sphi 0, %s40
    %s57 = sphi 0, %s41
    %s61 = sphi 0, %s61
    %s63 = sphi 0, %s61
    %s64 = sphi 0, %s63
    %s78 = sphi 0, %s64
    %s82 = sphi 0, %s82
    %s84 = sphi 0, %s82
    %s85 = sphi 0, %s84
    %s99 = sphi 0, %s85
    %s103 = sphi 0, %s103
    %s105 = sphi 0, %s103
    %s106 = sphi 0, %s105
    %s120 = sphi 0, %s106
    %s124 = sphi 0, %s124
    %s126 = sphi 0, %s124
    %s127 = sphi 0, %s126
    %s141 = sphi 0, %s127
    %s149 = sphi 0, %s151
    %s152 = sphi 0, %s149
    %s153 = sphi 0, %s152
    %s169 = sphi 0, %s153
  $region4: #{transformer_lm_forward.13} parent=0 // loop_header_branch
    %16 = sbr.rel (%p14) target = $region8
  $region5: #{transformer_lm_forward.13} parent=0 // loop_body
    %s18 = ssub.s32 %s13, 1
    %s19 = ssub.s32 %s13, 2
    %s26 = sadd.s32 1, %s21
    %p27 = scmp.ge.s32.totalorder %s26, 1
    %s28 = scalar_select %p27, 0, %s26
    %s29 = sadd.s32 1, %s20
    %s30 = scalar_select %p27, %s29, %s20
    %p31 = scmp.ge.s32.totalorder %s30, 2
    %s32 = scalar_select %p31, 0, %s30
    %s33 = ssub.s32 %s20, %s32
    %s34 = ssub.s32 %s21, %s28
    %s35 = sor.u32 %s33, %s34
    %p36 = scmp.eq.s32.totalorder %s35, 0
    %s38 = sadd.s32 %s37, 1
    %s39 = scalar_select %p36, %s37, %s38
    %p42 = pneg %p36
    %p43 = scmp.eq.s32.totalorder %s13, 1
    %p44 = por %p42, %p43
    %p45 = scmp.ne.s32.totalorder %s37, %s40
    %p46 = scmp.eq.s32.totalorder %s13, 0
    %p47 = por %p45, %p46
    %p48 = scmp.ne.s32.totalorder %s37, %s40
    %p49 = scmp.eq.s32.totalorder %s18, 1
    %p50 = por %p48, %p49
    %p51 = scmp.ne.s32.totalorder %s40, %s41
    %p52 = scmp.eq.s32.totalorder %s18, 0
    %p53 = por %p51, %p52
    %p54 = scmp.ne.s32.totalorder %s40, %s41
    %p55 = scmp.eq.s32.totalorder %s19, 1
    %p56 = por %p54, %p55
    %p58 = scmp.ne.s32.totalorder %s41, %s57
    %p59 = scmp.eq.s32.totalorder %s19, 0
    %p60 = por %p58, %p59
    %s62 = sadd.s32 %s61, 1
    %p65 = scmp.eq.s32.totalorder %s13, 1
    %p66 = scmp.ne.s32.totalorder %s61, %s63
    %p67 = scmp.eq.s32.totalorder %s13, 0
    %p68 = por %p66, %p67
    %p69 = scmp.ne.s32.totalorder %s61, %s63
    %p70 = scmp.eq.s32.totalorder %s18, 1
    %p71 = por %p69, %p70
    %p72 = scmp.ne.s32.totalorder %s63, %s64
    %p73 = scmp.eq.s32.totalorder %s18, 0
    %p74 = por %p72, %p73
    %p75 = scmp.ne.s32.totalorder %s63, %s64
    %p76 = scmp.eq.s32.totalorder %s19, 1
    %p77 = por %p75, %p76
    %p79 = scmp.ne.s32.totalorder %s64, %s78
    %p80 = scmp.eq.s32.totalorder %s19, 0
    %p81 = por %p79, %p80
    %s83 = sadd.s32 %s82, 1
    %p86 = scmp.eq.s32.totalorder %s13, 1
    %p87 = scmp.ne.s32.totalorder %s82, %s84
    %p88 = scmp.eq.s32.totalorder %s13, 0
    %p89 = por %p87, %p88
    %p90 = scmp.ne.s32.totalorder %s82, %s84
    %p91 = scmp.eq.s32.totalorder %s18, 1
    %p92 = por %p90, %p91
    %p93 = scmp.ne.s32.totalorder %s84, %s85
    %p94 = scmp.eq.s32.totalorder %s18, 0
    %p95 = por %p93, %p94
    %p96 = scmp.ne.s32.totalorder %s84, %s85
    %p97 = scmp.eq.s32.totalorder %s19, 1
    %p98 = por %p96, %p97
    %p100 = scmp.ne.s32.totalorder %s85, %s99
    %p101 = scmp.eq.s32.totalorder %s19, 0
    %p102 = por %p100, %p101
    %s104 = sadd.s32 %s103, 1
    %p107 = scmp.eq.s32.totalorder %s13, 1
    %p108 = scmp.ne.s32.totalorder %s103, %s105
    %p109 = scmp.eq.s32.totalorder %s13, 0
    %p110 = por %p108, %p109
    %p111 = scmp.ne.s32.totalorder %s103, %s105
    %p112 = scmp.eq.s32.totalorder %s18, 1
    %p113 = por %p111, %p112
    %p114 = scmp.ne.s32.totalorder %s105, %s106
    %p115 = scmp.eq.s32.totalorder %s18, 0
    %p116 = por %p114, %p115
    %p117 = scmp.ne.s32.totalorder %s105, %s106
    %p118 = scmp.eq.s32.totalorder %s19, 1
    %p119 = por %p117, %p118
    %p121 = scmp.ne.s32.totalorder %s106, %s120
    %p122 = scmp.eq.s32.totalorder %s19, 0
    %p123 = por %p121, %p122
    %s125 = sadd.s32 %s124, 1
    %p128 = scmp.eq.s32.totalorder %s13, 1
    %p129 = scmp.ne.s32.totalorder %s124, %s126
    %p130 = scmp.eq.s32.totalorder %s13, 0
    %p131 = por %p129, %p130
    %p132 = scmp.ne.s32.totalorder %s124, %s126
    %p133 = scmp.eq.s32.totalorder %s18, 1
    %p134 = por %p132, %p133
    %p135 = scmp.ne.s32.totalorder %s126, %s127
    %p136 = scmp.eq.s32.totalorder %s18, 0
    %p137 = por %p135, %p136
    %p138 = scmp.ne.s32.totalorder %s126, %s127
    %p139 = scmp.eq.s32.totalorder %s19, 1
    %p140 = por %p138, %p139
    %p142 = scmp.ne.s32.totalorder %s127, %s141
    %p143 = scmp.eq.s32.totalorder %s19, 0
    %p144 = por %p142, %p143
    %s145 = ssub.s32 %s20, %s32
    %s146 = ssub.s32 %s21, %s28
    %s147 = sor.u32 %s145, %s146
    %p148 = scmp.eq.s32.totalorder %s147, 0
    %s150 = sadd.s32 %s149, 1
    %s151 = scalar_select %p148, %s149, %s150
    %p154 = pneg %p148
    %p155 = scmp.eq.s32.totalorder %s13, 1
    %p156 = por %p154, %p155
    %p157 = scmp.ne.s32.totalorder %s149, %s152
    %p158 = scmp.eq.s32.totalorder %s13, 0
    %p159 = por %p157, %p158
    %p160 = scmp.ne.s32.totalorder %s149, %s152
    %p161 = scmp.eq.s32.totalorder %s18, 1
    %p162 = por %p160, %p161
    %p163 = scmp.ne.s32.totalorder %s152, %s153
    %p164 = scmp.eq.s32.totalorder %s18, 0
    %p165 = por %p163, %p164
    %p166 = scmp.ne.s32.totalorder %s152, %s153
    %p167 = scmp.eq.s32.totalorder %s19, 1
    %p168 = por %p166, %p167
    %p170 = scmp.ne.s32.totalorder %s153, %s169
    %p171 = scmp.eq.s32.totalorder %s19, 0
    %p172 = por %p170, %p171
    %p173 = scmp.le.s32.totalorder 1, %s13
    %p174 = scmp.lt.s32.totalorder %s13, 3
    %p175 = pnand %p173, %p174
    %p176 = pneg %p175
    // Predicated region
    $region9: #{transformer_lm_forward.13} parent=5 // pred_check
      _
    $region10: #{transformer_lm_forward.13} parent=5 // pred_check_branch
      %178 = sbr.rel (%p175) target = $region12
    $region11: #{transformer_lm_forward.13} parent=5 // pred_region
      %s179 = ssub.s32 %s13, 1
      // Predicated region
      $region13: #{transformer_lm_forward.13} parent=11 // pred_check
        %p180 = pneg %p74
      $region14: #{transformer_lm_forward.13} parent=11 // pred_check_branch
        %182 = sbr.rel (%p180) target = $region16
      $region15: #{transformer_lm_forward.13} parent=11 // pred_region
        _
      $region16: #{transformer_lm_forward.13} parent=11 // pred_fallthru
        _
      // Predicated region
      $region17: #{transformer_lm_forward.13} parent=11 // pred_check
        %p183 = pneg %p95
      $region18: #{transformer_lm_forward.13} parent=11 // pred_check_branch
        %185 = sbr.rel (%p183) target = $region20
      $region19: #{transformer_lm_forward.13} parent=11 // pred_region
        _
      $region20: #{transformer_lm_forward.13} parent=11 // pred_fallthru
        _
      // Predicated region
      $region21: #{transformer_lm_forward.13} parent=11 // pred_check
        %p186 = pneg %p116
      $region22: #{transformer_lm_forward.13} parent=11 // pred_check_branch
        %188 = sbr.rel (%p186) target = $region24
      $region23: #{transformer_lm_forward.13} parent=11 // pred_region
        _
      $region24: #{transformer_lm_forward.13} parent=11 // pred_fallthru
        _
      // Predicated region
      $region25: #{transformer_lm_forward.13} parent=11 // pred_check
        %p189 = pneg %p137
      $region26: #{transformer_lm_forward.13} parent=11 // pred_check_branch
        %191 = sbr.rel (%p189) target = $region28
      $region27: #{transformer_lm_forward.13} parent=11 // pred_region
        _
      $region28: #{transformer_lm_forward.13} parent=11 // pred_fallthru
        _
    $region12: #{transformer_lm_forward.13} parent=5 // pred_fallthru
      _
    %p192 = scmp.lt.s32.totalorder %s13, 2
    // Predicated region
    $region29: #{transformer_lm_forward.13} parent=5 // pred_check
      %p193 = pneg %p192
    $region30: #{transformer_lm_forward.13} parent=5 // pred_check_branch
      %195 = sbr.rel (%p193) target = $region32
    $region31: #{transformer_lm_forward.13} parent=5 // pred_region
      // Predicated region
      $region33: #{transformer_lm_forward.13} parent=31 // pred_check
        %p196 = pneg %p47
      $region34: #{transformer_lm_forward.13} parent=31 // pred_check_branch
        %198 = sbr.rel (%p196) target = $region36
      $region35: #{transformer_lm_forward.13} parent=31 // pred_region
        %p199 = scmp.lt.s32.totalorder %s20, 1
        %s200 = scalar_select %p199, %s20, 1
        %p201 = scmp.lt.s32.totalorder %s21, 0
        %s202 = scalar_select %p201, %s21, 0
        %s203 = sadd.s32 %s202, %s200
        %s204 = smul.addr %s203, 4
        %s205 = scalar_lea.vmem %s0, %s204
      $region36: #{transformer_lm_forward.13} parent=31 // pred_fallthru
        _
    $region32: #{transformer_lm_forward.13} parent=5 // pred_fallthru
      _
    %p206 = scmp.le.s32.totalorder 1, %s13
    %p207 = scmp.lt.s32.totalorder %s13, 3
    %p208 = pnand %p206, %p207
    %p209 = pneg %p208
    // Predicated region
    $region37: #{transformer_lm_forward.13} parent=5 // pred_check
      _
    $region38: #{transformer_lm_forward.13} parent=5 // pred_check_branch
      %211 = sbr.rel (%p208) target = $region40
    $region39: #{transformer_lm_forward.13} parent=5 // pred_region
      %s212 = ssub.s32 %s13, 1
      %p213 = scmp.lt.s32.totalorder %s22, 1
      %s214 = scalar_select %p213, %s22, 1
      %p215 = scmp.lt.s32.totalorder %s23, 0
      %s216 = scalar_select %p215, %s23, 0
      %s217 = sadd.s32 %s216, %s214
      %s218 = smul.addr %s217, 4
      %s219 = scalar_lea.vmem %s0, %s218
      %p220 = pneg %p53
      %p221 = pneg %p50
      %p222 = pneg %p74
      %p223 = pneg %p71
      %p224 = pneg %p95
      %p225 = pneg %p92
      %p226 = pneg %p116
      %p227 = pneg %p113
      %p228 = pneg %p137
      %p229 = pneg %p134
      %p230 = pneg %p165
      %p231 = pneg %p162
      %p232 = scmp.lt.s32.totalorder %s22, 1
      %s233 = scalar_select %p232, %s22, 1
      %p234 = scmp.lt.s32.totalorder %s23, 0
      %s235 = scalar_select %p234, %s23, 0
      %s236 = sadd.s32 %s235, %s233
      %s237 = smul.addr %s236, 8
      %s238 = scalar_lea.vmem %s5, %s237
      %p239 = scmp.lt.s32.totalorder %s22, 1
      %s240 = scalar_select %p239, %s22, 1
      %p241 = scmp.lt.s32.totalorder %s23, 0
      %s242 = scalar_select %p241, %s23, 0
      %s243 = sadd.s32 %s242, %s240
      %s244 = smul.addr %s243, 4
      %s245 = scalar_lea.vmem %s0, %s244
      %p246 = scmp.lt.s32.totalorder %s22, 1
      %s247 = scalar_select %p246, %s22, 1
      %p248 = scmp.lt.s32.totalorder %s23, 0
      %s249 = scalar_select %p248, %s23, 0
      %s250 = sadd.s32 %s249, %s247
      %s251 = smul.addr %s250, 8
      %s252 = scalar_lea.vmem %s5, %s251
      %v253 = vld [vmem:[%s245] sm:$0xf]
      %v254 = vunpack.c.l.bf16 %v253
      %v255 = vld [vmem:[%s1] sm:$0x1]
      %v256 = vld [vmem:[%s2] sm:$0x1]
      %vm257 = vcmask 261120
      %v258 = vsel %vm257, %v254, 0.0
      %259 = vadd.xlane.f32.xlu0 %v258
      %v260 = vpop.xlane.xlu0 %259
      %v261 = vrcp.pop 32.0
      %v262 = vmul.f32 %v260, %v261
      %v263 = vsub.f32 %v254, %v262
      %v264 = vmul.f32 %v263, %v263
      %v265 = vsel %vm257, %v264, 0.0
      %266 = vadd.xlane.f32.xlu0 %v265
      %v267 = vpop.xlane.xlu0 %266
      %v268 = vmul.f32 %v267, %v261
      %v269 = vadd.f32 %v268, 1e-05
      %v270 = vrsqrt.pop %v269
      %v271 = vmul.f32 %v263, %v270
      %v273 = vlaneseq
      %v274 = vshrl.u32 %v273, 7
      %v275 = vsub.s32 0, %v274
      %v276 = vrot.slane %v255, %v275
      %v278 = vmul.f32 %v271, %v276
      %v280 = vlaneseq
      %v281 = vshrl.u32 %v280, 7
      %v282 = vsub.s32 0, %v281
      %v283 = vrot.slane %v256, %v282
      %v285 = vadd.f32 %v278, %v283
      %v286 = vld [vmem:[%s3] sm:$0x1]
      %v288 = vlaneseq
      %v289 = vshrl.u32 %v288, 7
      %v290 = vsub.s32 0, %v289
      %v291 = vrot.slane %v286, %v290
      %v293 = vmul.f32 %v285, %v291
      %v294 = vsel %vm257, %v293, 0.0
      %295 = vadd.xlane.f32.xlu0 %v294
      %v296 = vpop.xlane.xlu0 %295
      %v297 = vld [vmem:[#allocation2] sm:$0x1]
      %v299 = vlaneseq
      %v300 = vshrl.u32 %v299, 7
      %v301 = vsub.s32 0, %v300
      %v302 = vrot.slane %v297, %v301
      %v304 = vadd.f32 %v296, %v302
      %vm305 = vcmask 7168
      %306 = vst.msk [vmem:[%s252] sm:$0xff] %vm305, %v304
      %p307 = scmp.lt.s32.totalorder %s22, 1
      %s308 = scalar_select %p307, %s22, 1
      %p309 = scmp.lt.s32.totalorder %s23, 0
      %s310 = scalar_select %p309, %s23, 0
      %s311 = sadd.s32 %s310, %s308
      %s312 = smul.addr %s311, 8
      %s313 = scalar_lea.vmem %s5, %s312
      // Predicated region
      $region41: #{transformer_lm_forward.13} parent=39 // pred_check
        %p314 = pneg %p162
      $region42: #{transformer_lm_forward.13} parent=39 // pred_check_branch
        %316 = sbr.rel (%p314) target = $region44
      $region43: #{transformer_lm_forward.13} parent=39 // pred_region
        _
      $region44: #{transformer_lm_forward.13} parent=39 // pred_fallthru
        _
    $region40: #{transformer_lm_forward.13} parent=5 // pred_fallthru
      _
    %p317 = scmp.le.s32.totalorder 2, %s13
    // Predicated region
    $region45: #{transformer_lm_forward.13} parent=5 // pred_check
      %p318 = pneg %p317
    $region46: #{transformer_lm_forward.13} parent=5 // pred_check_branch
      %320 = sbr.rel (%p318) target = $region48
    $region47: #{transformer_lm_forward.13} parent=5 // pred_region
      %s321 = ssub.s32 %s13, 2
      // Predicated region
      $region49: #{transformer_lm_forward.13} parent=47 // pred_check
        %p322 = pneg %p168
      $region50: #{transformer_lm_forward.13} parent=47 // pred_check_branch
        %324 = sbr.rel (%p322) target = $region52
      $region51: #{transformer_lm_forward.13} parent=47 // pred_region
        %p325 = scmp.lt.s32.totalorder %s24, 1
        %s326 = scalar_select %p325, %s24, 1
        %p327 = scmp.lt.s32.totalorder %s25, 0
        %s328 = scalar_select %p327, %s25, 0
        %s329 = sadd.s32 %s328, %s326
        %s330 = smul.addr %s329, 8
        %s331 = scalar_lea.vmem %s5, %s330
      $region52: #{transformer_lm_forward.13} parent=47 // pred_fallthru
        _
    $region48: #{transformer_lm_forward.13} parent=5 // pred_fallthru
      _
  $region6: #{transformer_lm_forward.13} parent=0 // loop_footer
    %s17 = sadd.s32 1, %s13
  $region7: #{transformer_lm_forward.13} parent=0 // loop_footer_branch
    %12 = sbr.rel target = $region3
  $region8: #{transformer_lm_forward.13} parent=0 // loop_exit
    _

// kernel: transformer_lm_forward.7
$region0: #{transformer_lm_forward.7}
  #allocation0 [shape = 'u32[]', space=smem, size = 0x4, offset = 0x4, fixed_abs, tag = 'smem constant byte address 0x4 - core index']
  #allocation1 [shape = 'u32[144,128]{1,0:T(1,128)}', space=vmem, size = 0x12000, scoped, tag = 'internal scratch']
  %s0 = inlined_call_operand.vmem [shape: bf16[2,8,32], index: 0, kind: input, shape index: {}]
  %s1 = inlined_call_operand.vmem [shape: f32[1,32], index: 1, kind: input, shape index: {}]
  %s2 = inlined_call_operand.vmem [shape: f32[1,32], index: 2, kind: input, shape index: {}]
  %s3 = inlined_call_operand.vmem [shape: bf16[32,32], index: 3, kind: input, shape index: {}]
  %s4 = inlined_call_operand.vmem [shape: f32[1,32], index: 4, kind: input, shape index: {}]
  %s5 = inlined_call_operand.vmem [shape: bf16[32,32], index: 5, kind: input, shape index: {}]
  %s6 = inlined_call_operand.vmem [shape: f32[1,32], index: 6, kind: input, shape index: {}]
  %s7 = inlined_call_operand.vmem [shape: bf16[32,32], index: 7, kind: input, shape index: {}]
  %s8 = inlined_call_operand.vmem [shape: f32[1,32], index: 8, kind: input, shape index: {}]
  %s9 = inlined_call_operand.vmem [shape: bf16[2,8,32], index: 9, kind: output, shape index: {0}]
  %s10 = inlined_call_operand.vmem [shape: bf16[2,8,32], index: 10, kind: output, shape index: {1}]
  %s11 = inlined_call_operand.vmem [shape: bf16[2,8,32], index: 11, kind: output, shape index: {2}]
  %12 = xla_tuple %s9, %s10, %s11
  %s13 = sld [smem:[#allocation0]]
  $region85: #{transformer_lm_forward.7} parent=0
    _
  %s15 = ssub.s32 1, %s13
  %s16 = scalar_select 0, %s15, %s13
  loop: start=0, step=1, limit=4
  $region2: #{transformer_lm_forward.7} parent=0 // loop_pre_header
    _
  $region3: #{transformer_lm_forward.7} parent=0 // loop_header
    %s18 = sphi 0, %s22
    %p19 = scmp.ge.s32.totalorder %s18, 4
    %s25 = sphi 0, %s37
    %s26 = sphi 0, %s33
    %s27 = sphi 0, %s25
    %s28 = sphi 0, %s26
    %s29 = sphi 0, %s27
    %s30 = sphi 0, %s28
    %s42 = sphi 0, %s44
    %s45 = sphi 0, %s42
    %s46 = sphi 0, %s45
    %s62 = sphi 0, %s46
    %s66 = sphi 0, %s66
    %s68 = sphi 0, %s66
    %s69 = sphi 0, %s68
    %s83 = sphi 0, %s69
    %s87 = sphi 0, %s87
    %s89 = sphi 0, %s87
    %s90 = sphi 0, %s89
    %s104 = sphi 0, %s90
    %s108 = sphi 0, %s108
    %s110 = sphi 0, %s108
    %s111 = sphi 0, %s110
    %s125 = sphi 0, %s111
    %s129 = sphi 0, %s129
    %s131 = sphi 0, %s129
    %s132 = sphi 0, %s131
    %s146 = sphi 0, %s132
    %s150 = sphi 0, %s150
    %s152 = sphi 0, %s150
    %s153 = sphi 0, %s152
    %s167 = sphi 0, %s153
    %s171 = sphi 0, %s171
    %s173 = sphi 0, %s171
    %s174 = sphi 0, %s173
    %s188 = sphi 0, %s174
    %s192 = sphi 0, %s192
    %s194 = sphi 0, %s192
    %s195 = sphi 0, %s194
    %s209 = sphi 0, %s195
    %s213 = sphi 0, %s213
    %s215 = sphi 0, %s213
    %s216 = sphi 0, %s215
    %s230 = sphi 0, %s216
    %s238 = sphi 0, %s240
    %s241 = sphi 0, %s238
    %s242 = sphi 0, %s241
    %s258 = sphi 0, %s242
    %s266 = sphi 0, %s268
    %s269 = sphi 0, %s266
    %s270 = sphi 0, %s269
    %s286 = sphi 0, %s270
    %s294 = sphi 0, %s296
    %s297 = sphi 0, %s294
    %s298 = sphi 0, %s297
    %s314 = sphi 0, %s298
  $region4: #{transformer_lm_forward.7} parent=0 // loop_header_branch
    %21 = sbr.rel (%p19) target = $region8
  $region5: #{transformer_lm_forward.7} parent=0 // loop_body
    %s23 = ssub.s32 %s18, 1
    %s24 = ssub.s32 %s18, 2
    %s31 = sadd.s32 1, %s26
    %p32 = scmp.ge.s32.totalorder %s31, 1
    %s33 = scalar_select %p32, 0, %s31
    %s34 = sadd.s32 1, %s25
    %s35 = scalar_select %p32, %s34, %s25
    %p36 = scmp.ge.s32.totalorder %s35, 2
    %s37 = scalar_select %p36, 0, %s35
    %s38 = ssub.s32 %s25, %s37
    %s39 = ssub.s32 %s26, %s33
    %s40 = sor.u32 %s38, %s39
    %p41 = scmp.eq.s32.totalorder %s40, 0
    %s43 = sadd.s32 %s42, 1
    %s44 = scalar_select %p41, %s42, %s43
    %p47 = pneg %p41
    %p48 = scmp.eq.s32.totalorder %s18, 1
    %p49 = por %p47, %p48
    %p50 = scmp.ne.s32.totalorder %s42, %s45
    %p51 = scmp.eq.s32.totalorder %s18, 0
    %p52 = por %p50, %p51
    %p53 = scmp.ne.s32.totalorder %s42, %s45
    %p54 = scmp.eq.s32.totalorder %s23, 1
    %p55 = por %p53, %p54
    %p56 = scmp.ne.s32.totalorder %s45, %s46
    %p57 = scmp.eq.s32.totalorder %s23, 0
    %p58 = por %p56, %p57
    %p59 = scmp.ne.s32.totalorder %s45, %s46
    %p60 = scmp.eq.s32.totalorder %s24, 1
    %p61 = por %p59, %p60
    %p63 = scmp.ne.s32.totalorder %s46, %s62
    %p64 = scmp.eq.s32.totalorder %s24, 0
    %p65 = por %p63, %p64
    %s67 = sadd.s32 %s66, 1
    %p70 = scmp.eq.s32.totalorder %s18, 1
    %p71 = scmp.ne.s32.totalorder %s66, %s68
    %p72 = scmp.eq.s32.totalorder %s18, 0
    %p73 = por %p71, %p72
    %p74 = scmp.ne.s32.totalorder %s66, %s68
    %p75 = scmp.eq.s32.totalorder %s23, 1
    %p76 = por %p74, %p75
    %p77 = scmp.ne.s32.totalorder %s68, %s69
    %p78 = scmp.eq.s32.totalorder %s23, 0
    %p79 = por %p77, %p78
    %p80 = scmp.ne.s32.totalorder %s68, %s69
    %p81 = scmp.eq.s32.totalorder %s24, 1
    %p82 = por %p80, %p81
    %p84 = scmp.ne.s32.totalorder %s69, %s83
    %p85 = scmp.eq.s32.totalorder %s24, 0
    %p86 = por %p84, %p85
    %s88 = sadd.s32 %s87, 1
    %p91 = scmp.eq.s32.totalorder %s18, 1
    %p92 = scmp.ne.s32.totalorder %s87, %s89
    %p93 = scmp.eq.s32.totalorder %s18, 0
    %p94 = por %p92, %p93
    %p95 = scmp.ne.s32.totalorder %s87, %s89
    %p96 = scmp.eq.s32.totalorder %s23, 1
    %p97 = por %p95, %p96
    %p98 = scmp.ne.s32.totalorder %s89, %s90
    %p99 = scmp.eq.s32.totalorder %s23, 0
    %p100 = por %p98, %p99
    %p101 = scmp.ne.s32.totalorder %s89, %s90
    %p102 = scmp.eq.s32.totalorder %s24, 1
    %p103 = por %p101, %p102
    %p105 = scmp.ne.s32.totalorder %s90, %s104
    %p106 = scmp.eq.s32.totalorder %s24, 0
    %p107 = por %p105, %p106
    %s109 = sadd.s32 %s108, 1
    %p112 = scmp.eq.s32.totalorder %s18, 1
    %p113 = scmp.ne.s32.totalorder %s108, %s110
    %p114 = scmp.eq.s32.totalorder %s18, 0
    %p115 = por %p113, %p114
    %p116 = scmp.ne.s32.totalorder %s108, %s110
    %p117 = scmp.eq.s32.totalorder %s23, 1
    %p118 = por %p116, %p117
    %p119 = scmp.ne.s32.totalorder %s110, %s111
    %p120 = scmp.eq.s32.totalorder %s23, 0
    %p121 = por %p119, %p120
    %p122 = scmp.ne.s32.totalorder %s110, %s111
    %p123 = scmp.eq.s32.totalorder %s24, 1
    %p124 = por %p122, %p123
    %p126 = scmp.ne.s32.totalorder %s111, %s125
    %p127 = scmp.eq.s32.totalorder %s24, 0
    %p128 = por %p126, %p127
    %s130 = sadd.s32 %s129, 1
    %p133 = scmp.eq.s32.totalorder %s18, 1
    %p134 = scmp.ne.s32.totalorder %s129, %s131
    %p135 = scmp.eq.s32.totalorder %s18, 0
    %p136 = por %p134, %p135
    %p137 = scmp.ne.s32.totalorder %s129, %s131
    %p138 = scmp.eq.s32.totalorder %s23, 1
    %p139 = por %p137, %p138
    %p140 = scmp.ne.s32.totalorder %s131, %s132
    %p141 = scmp.eq.s32.totalorder %s23, 0
    %p142 = por %p140, %p141
    %p143 = scmp.ne.s32.totalorder %s131, %s132
    %p144 = scmp.eq.s32.totalorder %s24, 1
    %p145 = por %p143, %p144
    %p147 = scmp.ne.s32.totalorder %s132, %s146
    %p148 = scmp.eq.s32.totalorder %s24, 0
    %p149 = por %p147, %p148
    %s151 = sadd.s32 %s150, 1
    %p154 = scmp.eq.s32.totalorder %s18, 1
    %p155 = scmp.ne.s32.totalorder %s150, %s152
    %p156 = scmp.eq.s32.totalorder %s18, 0
    %p157 = por %p155, %p156
    %p158 = scmp.ne.s32.totalorder %s150, %s152
    %p159 = scmp.eq.s32.totalorder %s23, 1
    %p160 = por %p158, %p159
    %p161 = scmp.ne.s32.totalorder %s152, %s153
    %p162 = scmp.eq.s32.totalorder %s23, 0
    %p163 = por %p161, %p162
    %p164 = scmp.ne.s32.totalorder %s152, %s153
    %p165 = scmp.eq.s32.totalorder %s24, 1
    %p166 = por %p164, %p165
    %p168 = scmp.ne.s32.totalorder %s153, %s167
    %p169 = scmp.eq.s32.totalorder %s24, 0
    %p170 = por %p168, %p169
    %s172 = sadd.s32 %s171, 1
    %p175 = scmp.eq.s32.totalorder %s18, 1
    %p176 = scmp.ne.s32.totalorder %s171, %s173
    %p177 = scmp.eq.s32.totalorder %s18, 0
    %p178 = por %p176, %p177
    %p179 = scmp.ne.s32.totalorder %s171, %s173
    %p180 = scmp.eq.s32.totalorder %s23, 1
    %p181 = por %p179, %p180
    %p182 = scmp.ne.s32.totalorder %s173, %s174
    %p183 = scmp.eq.s32.totalorder %s23, 0
    %p184 = por %p182, %p183
    %p185 = scmp.ne.s32.totalorder %s173, %s174
    %p186 = scmp.eq.s32.totalorder %s24, 1
    %p187 = por %p185, %p186
    %p189 = scmp.ne.s32.totalorder %s174, %s188
    %p190 = scmp.eq.s32.totalorder %s24, 0
    %p191 = por %p189, %p190
    %s193 = sadd.s32 %s192, 1
    %p196 = scmp.eq.s32.totalorder %s18, 1
    %p197 = scmp.ne.s32.totalorder %s192, %s194
    %p198 = scmp.eq.s32.totalorder %s18, 0
    %p199 = por %p197, %p198
    %p200 = scmp.ne.s32.totalorder %s192, %s194
    %p201 = scmp.eq.s32.totalorder %s23, 1
    %p202 = por %p200, %p201
    %p203 = scmp.ne.s32.totalorder %s194, %s195
    %p204 = scmp.eq.s32.totalorder %s23, 0
    %p205 = por %p203, %p204
    %p206 = scmp.ne.s32.totalorder %s194, %s195
    %p207 = scmp.eq.s32.totalorder %s24, 1
    %p208 = por %p206, %p207
    %p210 = scmp.ne.s32.totalorder %s195, %s209
    %p211 = scmp.eq.s32.totalorder %s24, 0
    %p212 = por %p210, %p211
    %s214 = sadd.s32 %s213, 1
    %p217 = scmp.eq.s32.totalorder %s18, 1
    %p218 = scmp.ne.s32.totalorder %s213, %s215
    %p219 = scmp.eq.s32.totalorder %s18, 0
    %p220 = por %p218, %p219
    %p221 = scmp.ne.s32.totalorder %s213, %s215
    %p222 = scmp.eq.s32.totalorder %s23, 1
    %p223 = por %p221, %p222
    %p224 = scmp.ne.s32.totalorder %s215, %s216
    %p225 = scmp.eq.s32.totalorder %s23, 0
    %p226 = por %p224, %p225
    %p227 = scmp.ne.s32.totalorder %s215, %s216
    %p228 = scmp.eq.s32.totalorder %s24, 1
    %p229 = por %p227, %p228
    %p231 = scmp.ne.s32.totalorder %s216, %s230
    %p232 = scmp.eq.s32.totalorder %s24, 0
    %p233 = por %p231, %p232
    %s234 = ssub.s32 %s25, %s37
    %s235 = ssub.s32 %s26, %s33
    %s236 = sor.u32 %s234, %s235
    %p237 = scmp.eq.s32.totalorder %s236, 0
    %s239 = sadd.s32 %s238, 1
    %s240 = scalar_select %p237, %s238, %s239
    %p243 = pneg %p237
    %p244 = scmp.eq.s32.totalorder %s18, 1
    %p245 = por %p243, %p244
    %p246 = scmp.ne.s32.totalorder %s238, %s241
    %p247 = scmp.eq.s32.totalorder %s18, 0
    %p248 = por %p246, %p247
    %p249 = scmp.ne.s32.totalorder %s238, %s241
    %p250 = scmp.eq.s32.totalorder %s23, 1
    %p251 = por %p249, %p250
    %p252 = scmp.ne.s32.totalorder %s241, %s242
    %p253 = scmp.eq.s32.totalorder %s23, 0
    %p254 = por %p252, %p253
    %p255 = scmp.ne.s32.totalorder %s241, %s242
    %p256 = scmp.eq.s32.totalorder %s24, 1
    %p257 = por %p255, %p256
    %p259 = scmp.ne.s32.totalorder %s242, %s258
    %p260 = scmp.eq.s32.totalorder %s24, 0
    %p261 = por %p259, %p260
    %s262 = ssub.s32 %s25, %s37
    %s263 = ssub.s32 %s26, %s33
    %s264 = sor.u32 %s262, %s263
    %p265 = scmp.eq.s32.totalorder %s264, 0
    %s267 = sadd.s32 %s266, 1
    %s268 = scalar_select %p265, %s266, %s267
    %p271 = pneg %p265
    %p272 = scmp.eq.s32.totalorder %s18, 1
    %p273 = por %p271, %p272
    %p274 = scmp.ne.s32.totalorder %s266, %s269
    %p275 = scmp.eq.s32.totalorder %s18, 0
    %p276 = por %p274, %p275
    %p277 = scmp.ne.s32.totalorder %s266, %s269
    %p278 = scmp.eq.s32.totalorder %s23, 1
    %p279 = por %p277, %p278
    %p280 = scmp.ne.s32.totalorder %s269, %s270
    %p281 = scmp.eq.s32.totalorder %s23, 0
    %p282 = por %p280, %p281
    %p283 = scmp.ne.s32.totalorder %s269, %s270
    %p284 = scmp.eq.s32.totalorder %s24, 1
    %p285 = por %p283, %p284
    %p287 = scmp.ne.s32.totalorder %s270, %s286
    %p288 = scmp.eq.s32.totalorder %s24, 0
    %p289 = por %p287, %p288
    %s290 = ssub.s32 %s25, %s37
    %s291 = ssub.s32 %s26, %s33
    %s292 = sor.u32 %s290, %s291
    %p293 = scmp.eq.s32.totalorder %s292, 0
    %s295 = sadd.s32 %s294, 1
    %s296 = scalar_select %p293, %s294, %s295
    %p299 = pneg %p293
    %p300 = scmp.eq.s32.totalorder %s18, 1
    %p301 = por %p299, %p300
    %p302 = scmp.ne.s32.totalorder %s294, %s297
    %p303 = scmp.eq.s32.totalorder %s18, 0
    %p304 = por %p302, %p303
    %p305 = scmp.ne.s32.totalorder %s294, %s297
    %p306 = scmp.eq.s32.totalorder %s23, 1
    %p307 = por %p305, %p306
    %p308 = scmp.ne.s32.totalorder %s297, %s298
    %p309 = scmp.eq.s32.totalorder %s23, 0
    %p310 = por %p308, %p309
    %p311 = scmp.ne.s32.totalorder %s297, %s298
    %p312 = scmp.eq.s32.totalorder %s24, 1
    %p313 = por %p311, %p312
    %p315 = scmp.ne.s32.totalorder %s298, %s314
    %p316 = scmp.eq.s32.totalorder %s24, 0
    %p317 = por %p315, %p316
    %p318 = scmp.le.s32.totalorder 1, %s18
    %p319 = scmp.lt.s32.totalorder %s18, 3
    %p320 = pnand %p318, %p319
    %p321 = pneg %p320
    // Predicated region
    $region9: #{transformer_lm_forward.7} parent=5 // pred_check
      _
    $region10: #{transformer_lm_forward.7} parent=5 // pred_check_branch
      %323 = sbr.rel (%p320) target = $region12
    $region11: #{transformer_lm_forward.7} parent=5 // pred_region
      %s324 = ssub.s32 %s18, 1
      // Predicated region
      $region13: #{transformer_lm_forward.7} parent=11 // pred_check
        %p325 = pneg %p79
      $region14: #{transformer_lm_forward.7} parent=11 // pred_check_branch
        %327 = sbr.rel (%p325) target = $region16
      $region15: #{transformer_lm_forward.7} parent=11 // pred_region
        _
      $region16: #{transformer_lm_forward.7} parent=11 // pred_fallthru
        _
      // Predicated region
      $region17: #{transformer_lm_forward.7} parent=11 // pred_check
        %p328 = pneg %p100
      $region18: #{transformer_lm_forward.7} parent=11 // pred_check_branch
        %330 = sbr.rel (%p328) target = $region20
      $region19: #{transformer_lm_forward.7} parent=11 // pred_region
        _
      $region20: #{transformer_lm_forward.7} parent=11 // pred_fallthru
        _
      // Predicated region
      $region21: #{transformer_lm_forward.7} parent=11 // pred_check
        %p331 = pneg %p121
      $region22: #{transformer_lm_forward.7} parent=11 // pred_check_branch
        %333 = sbr.rel (%p331) target = $region24
      $region23: #{transformer_lm_forward.7} parent=11 // pred_region
        _
      $region24: #{transformer_lm_forward.7} parent=11 // pred_fallthru
        _
      // Predicated region
      $region25: #{transformer_lm_forward.7} parent=11 // pred_check
        %p334 = pneg %p142
      $region26: #{transformer_lm_forward.7} parent=11 // pred_check_branch
        %336 = sbr.rel (%p334) target = $region28
      $region27: #{transformer_lm_forward.7} parent=11 // pred_region
        _
      $region28: #{transformer_lm_forward.7} parent=11 // pred_fallthru
        _
      // Predicated region
      $region29: #{transformer_lm_forward.7} parent=11 // pred_check
        %p337 = pneg %p163
      $region30: #{transformer_lm_forward.7} parent=11 // pred_check_branch
        %339 = sbr.rel (%p337) target = $region32
      $region31: #{transformer_lm_forward.7} parent=11 // pred_region
        _
      $region32: #{transformer_lm_forward.7} parent=11 // pred_fallthru
        _
      // Predicated region
      $region33: #{transformer_lm_forward.7} parent=11 // pred_check
        %p340 = pneg %p184
      $region34: #{transformer_lm_forward.7} parent=11 // pred_check_branch
        %342 = sbr.rel (%p340) target = $region36
      $region35: #{transformer_lm_forward.7} parent=11 // pred_region
        _
      $region36: #{transformer_lm_forward.7} parent=11 // pred_fallthru
        _
      // Predicated region
      $region37: #{transformer_lm_forward.7} parent=11 // pred_check
        %p343 = pneg %p205
      $region38: #{transformer_lm_forward.7} parent=11 // pred_check_branch
        %345 = sbr.rel (%p343) target = $region40
      $region39: #{transformer_lm_forward.7} parent=11 // pred_region
        _
      $region40: #{transformer_lm_forward.7} parent=11 // pred_fallthru
        _
      // Predicated region
      $region41: #{transformer_lm_forward.7} parent=11 // pred_check
        %p346 = pneg %p226
      $region42: #{transformer_lm_forward.7} parent=11 // pred_check_branch
        %348 = sbr.rel (%p346) target = $region44
      $region43: #{transformer_lm_forward.7} parent=11 // pred_region
        _
      $region44: #{transformer_lm_forward.7} parent=11 // pred_fallthru
        _
    $region12: #{transformer_lm_forward.7} parent=5 // pred_fallthru
      _
    %p349 = scmp.lt.s32.totalorder %s18, 2
    // Predicated region
    $region45: #{transformer_lm_forward.7} parent=5 // pred_check
      %p350 = pneg %p349
    $region46: #{transformer_lm_forward.7} parent=5 // pred_check_branch
      %352 = sbr.rel (%p350) target = $region48
    $region47: #{transformer_lm_forward.7} parent=5 // pred_region
      // Predicated region
      $region49: #{transformer_lm_forward.7} parent=47 // pred_check
        %p353 = pneg %p52
      $region50: #{transformer_lm_forward.7} parent=47 // pred_check_branch
        %355 = sbr.rel (%p353) target = $region52
      $region51: #{transformer_lm_forward.7} parent=47 // pred_region
        %p356 = scmp.lt.s32.totalorder %s25, 1
        %s357 = scalar_select %p356, %s25, 1
        %p358 = scmp.lt.s32.totalorder %s26, 0
        %s359 = scalar_select %p358, %s26, 0
        %s360 = sadd.s32 %s359, %s357
        %s361 = smul.addr %s360, 4
        %s362 = scalar_lea.vmem %s0, %s361
      $region52: #{transformer_lm_forward.7} parent=47 // pred_fallthru
        _
    $region48: #{transformer_lm_forward.7} parent=5 // pred_fallthru
      _
    %p363 = scmp.le.s32.totalorder 1, %s18
    %p364 = scmp.lt.s32.totalorder %s18, 3
    %p365 = pnand %p363, %p364
    %p366 = pneg %p365
    // Predicated region
    $region53: #{transformer_lm_forward.7} parent=5 // pred_check
      _
    $region54: #{transformer_lm_forward.7} parent=5 // pred_check_branch
      %368 = sbr.rel (%p365) target = $region56
    $region55: #{transformer_lm_forward.7} parent=5 // pred_region
      %s369 = ssub.s32 %s18, 1
      %p370 = scmp.lt.s32.totalorder %s27, 1
      %s371 = scalar_select %p370, %s27, 1
      %p372 = scmp.lt.s32.totalorder %s28, 0
      %s373 = scalar_select %p372, %s28, 0
      %s374 = sadd.s32 %s373, %s371
      %s375 = smul.addr %s374, 4
      %s376 = scalar_lea.vmem %s0, %s375
      %p377 = pneg %p58
      %p378 = pneg %p55
      %p379 = pneg %p79
      %p380 = pneg %p76
      %p381 = pneg %p100
      %p382 = pneg %p97
      %p383 = pneg %p121
      %p384 = pneg %p118
      %p385 = pneg %p142
      %p386 = pneg %p139
      %p387 = pneg %p163
      %p388 = pneg %p160
      %p389 = pneg %p184
      %p390 = pneg %p181
      %p391 = pneg %p205
      %p392 = pneg %p202
      %p393 = pneg %p226
      %p394 = pneg %p223
      %p395 = pneg %p254
      %p396 = pneg %p251
      %p397 = scmp.lt.s32.totalorder %s27, 1
      %s398 = scalar_select %p397, %s27, 1
      %p399 = scmp.lt.s32.totalorder %s28, 0
      %s400 = scalar_select %p399, %s28, 0
      %s401 = sadd.s32 %s400, %s398
      %s402 = smul.addr %s401, 4
      %s403 = scalar_lea.vmem %s9, %s402
      %p404 = pneg %p282
      %p405 = pneg %p279
      %p406 = scmp.lt.s32.totalorder %s27, 1
      %s407 = scalar_select %p406, %s27, 1
      %p408 = scmp.lt.s32.totalorder %s28, 0
      %s409 = scalar_select %p408, %s28, 0
      %s410 = sadd.s32 %s409, %s407
      %s411 = smul.addr %s410, 4
      %s412 = scalar_lea.vmem %s10, %s411
      %p413 = pneg %p310
      %p414 = pneg %p307
      %p415 = scmp.lt.s32.totalorder %s27, 1
      %s416 = scalar_select %p415, %s27, 1
      %p417 = scmp.lt.s32.totalorder %s28, 0
      %s418 = scalar_select %p417, %s28, 0
      %s419 = sadd.s32 %s418, %s416
      %s420 = smul.addr %s419, 4
      %s421 = scalar_lea.vmem %s11, %s420
      %p422 = scmp.lt.s32.totalorder %s27, 1
      %s423 = scalar_select %p422, %s27, 1
      %p424 = scmp.lt.s32.totalorder %s28, 0
      %s425 = scalar_select %p424, %s28, 0
      %s426 = sadd.s32 %s425, %s423
      %s427 = smul.addr %s426, 4
      %s428 = scalar_lea.vmem %s0, %s427
      %p429 = scmp.lt.s32.totalorder %s27, 1
      %s430 = scalar_select %p429, %s27, 1
      %p431 = scmp.lt.s32.totalorder %s28, 0
      %s432 = scalar_select %p431, %s28, 0
      %s433 = sadd.s32 %s432, %s430
      %s434 = smul.addr %s433, 4
      %s435 = scalar_lea.vmem %s9, %s434
      %p436 = scmp.lt.s32.totalorder %s27, 1
      %s437 = scalar_select %p436, %s27, 1
      %p438 = scmp.lt.s32.totalorder %s28, 0
      %s439 = scalar_select %p438, %s28, 0
      %s440 = sadd.s32 %s439, %s437
      %s441 = smul.addr %s440, 4
      %s442 = scalar_lea.vmem %s10, %s441
      %p443 = scmp.lt.s32.totalorder %s27, 1
      %s444 = scalar_select %p443, %s27, 1
      %p445 = scmp.lt.s32.totalorder %s28, 0
      %s446 = scalar_select %p445, %s28, 0
      %s447 = sadd.s32 %s446, %s444
      %s448 = smul.addr %s447, 4
      %s449 = scalar_lea.vmem %s11, %s448
      %v451 = vld [vmem:[%s428] sm:$0xf]
      %v452 = vunpack.c.l.bf16 %v451
      %v453 = vld [vmem:[%s1] sm:$0x1]
      %v454 = vld [vmem:[%s2] sm:$0x1]
      %vm455 = vcmask 261120
      %v456 = vsel %vm455, %v452, 0.0
      %457 = vadd.xlane.f32.xlu0 %v456
      %v458 = vpop.xlane.xlu0 %457
      %v459 = vrcp.pop 32.0
      %v460 = vmul.f32 %v458, %v459
      %v461 = vsub.f32 %v452, %v460
      %v462 = vmul.f32 %v461, %v461
      %v463 = vsel %vm455, %v462, 0.0
      %464 = vadd.xlane.f32.xlu0 %v463
      %v465 = vpop.xlane.xlu0 %464
      %v466 = vmul.f32 %v465, %v459
      %v467 = vadd.f32 %v466, 1e-05
      %v468 = vrsqrt.pop %v467
      %v469 = vmul.f32 %v461, %v468
      %v471 = vlaneseq
      %v472 = vshrl.u32 %v471, 7
      %v473 = vsub.s32 0, %v472
      %v474 = vrot.slane %v453, %v473
      %v476 = vmul.f32 %v469, %v474
      %v478 = vlaneseq
      %v479 = vshrl.u32 %v478, 7
      %v480 = vsub.s32 0, %v479
      %v481 = vrot.slane %v454, %v480
      %v483 = vadd.f32 %v476, %v481
      %v484 = vpack.c.bf16 %v483, %v483
      %v485 = vld [vmem:[%s3] sm:$0xf]
      %v486 = vld [vmem:[%s3 + $0x4] sm:$0xf]
      %v487 = vld [vmem:[%s3 + $0x8] sm:$0xf]
      %v488 = vld [vmem:[%s3 + $0xc] sm:$0xf]
      %v489 = vld [vmem:[%s4] sm:$0x1]
      %v491 = vlaneseq
      %v492 = vshrl.u32 %v491, 7
      %v493 = vsub.s32 0, %v492
      %v494 = vrot.slane %v489, %v493
      %v500 = vunpack.c.l.b16 %v485
      %v501 = vunpack.c.l.b16 %v486
      %v502 = vunpack.c.l.b16 %v487
      %v503 = vunpack.c.l.b16 %v488
      %v504 = vpack.c.b16 %v501, %v500
      %v505 = vpack.c.b16 %v503, %v502
      %v509 = vsel %vm455, %v484, 0
      %511 = vmatprep.subr.bf16.mxu0 0
      %512 = vmatpush1.bf16.msra.mxu0 0
      %513 = vmatprep.subr.bf16.mxu0 0
      %514 = vmatpush1.bf16.msra.mxu0 0
      %515 = vmatprep.subr.bf16.mxu0 0
      %516 = vmatpush1.bf16.msra.mxu0 0
      %517 = vmatprep.subr.bf16.mxu0 0
      %518 = vmatpush1.bf16.msra.mxu0 0
      %519 = vmatprep.subr.bf16.mxu0 0
      %520 = vmatpush1.bf16.msra.mxu0 0
      %521 = vmatprep.subr.bf16.mxu0 0
      %522 = vmatpush1.bf16.msra.mxu0 0
      %523 = vmatprep.subr.bf16.mxu0 0
      %524 = vmatpush1.bf16.msra.mxu0 %v505
      %525 = vmatprep.subr.bf16.mxu0 0
      %526 = vmatpush1.bf16.msra.mxu0 %v504
      %527 = vmatprep.subr.bf16.mxu0 0
      %528 = vmatpush2.bf16.msra.mxu0 0
      %529 = vmatprep.subr.bf16.mxu0 0
      %530 = vmatpush2.bf16.msra.mxu0 0
      %531 = vmatprep.subr.bf16.mxu0 0
      %532 = vmatpush2.bf16.msra.mxu0 0
      %533 = vmatprep.subr.bf16.mxu0 0
      %534 = vmatpush2.bf16.msra.mxu0 0
      %535 = vmatprep.subr.bf16.mxu0 0
      %536 = vmatpush2.bf16.msra.mxu0 0
      %537 = vmatprep.subr.bf16.mxu0 0
      %538 = vmatpush2.bf16.msra.mxu0 0
      %539 = vmatprep.subr.bf16.mxu0 0
      %540 = vmatpush2.bf16.msra.mxu0 0
      %541 = vmatprep.subr.bf16.mxu0 0
      %542 = vmatpush2.bf16.msra.mxu0 0
      %543 = vmatprep.mubr.bf16.mxu0 0
      %544 = vmatmul.mubr.bf16.gmra.mxu0 %v509
      %v545 = vpop.f32.mrf.mxu0
      %v546 = vadd.f32 %v494, %v545
      %v547 = vpop.f32.mrf.mxu0
      %v548 = vpop.f32.mrf.mxu0
      %v549 = vpop.f32.mrf.mxu0
      %550 = vdwg.mxu0
      %v551 = vpack.c.bf16 %v546, %v546
      %vm552 = vcmask 257024
      %553 = vst.msk [vmem:[%s435] sm:$0xf] %vm552, %v551
      %v554 = vld [vmem:[%s5] sm:$0xf]
      %v555 = vld [vmem:[%s5 + $0x4] sm:$0xf]
      %v556 = vld [vmem:[%s5 + $0x8] sm:$0xf]
      %v557 = vld [vmem:[%s5 + $0xc] sm:$0xf]
      %v558 = vld [vmem:[%s6] sm:$0x1]
      %v560 = vlaneseq
      %v561 = vshrl.u32 %v560, 7
      %v562 = vsub.s32 0, %v561
      %v563 = vrot.slane %v558, %v562
      %v569 = vunpack.c.l.b16 %v554
      %v570 = vunpack.c.l.b16 %v555
      %v571 = vunpack.c.l.b16 %v556
      %v572 = vunpack.c.l.b16 %v557
      %v573 = vpack.c.b16 %v570, %v569
      %v574 = vpack.c.b16 %v572, %v571
      %577 = vmatprep.subr.bf16.mxu0 0
      %578 = vmatpush1.bf16.msra.mxu0 0
      %579 = vmatprep.subr.bf16.mxu0 0
      %580 = vmatpush1.bf16.msra.mxu0 0
      %581 = vmatprep.subr.bf16.mxu0 0
      %582 = vmatpush1.bf16.msra.mxu0 0
      %583 = vmatprep.subr.bf16.mxu0 0
      %584 = vmatpush1.bf16.msra.mxu0 0
      %585 = vmatprep.subr.bf16.mxu0 0
      %586 = vmatpush1.bf16.msra.mxu0 0
      %587 = vmatprep.subr.bf16.mxu0 0
      %588 = vmatpush1.bf16.msra.mxu0 0
      %589 = vmatprep.subr.bf16.mxu0 0
      %590 = vmatpush1.bf16.msra.mxu0 %v574
      %591 = vmatprep.subr.bf16.mxu0 0
      %592 = vmatpush1.bf16.msra.mxu0 %v573
      %593 = vmatprep.subr.bf16.mxu0 0
      %594 = vmatpush2.bf16.msra.mxu0 0
      %595 = vmatprep.subr.bf16.mxu0 0
      %596 = vmatpush2.bf16.msra.mxu0 0
      %597 = vmatprep.subr.bf16.mxu0 0
      %598 = vmatpush2.bf16.msra.mxu0 0
      %599 = vmatprep.subr.bf16.mxu0 0
      %600 = vmatpush2.bf16.msra.mxu0 0
      %601 = vmatprep.subr.bf16.mxu0 0
      %602 = vmatpush2.bf16.msra.mxu0 0
      %603 = vmatprep.subr.bf16.mxu0 0
      %604 = vmatpush2.bf16.msra.mxu0 0
      %605 = vmatprep.subr.bf16.mxu0 0
      %606 = vmatpush2.bf16.msra.mxu0 0
      %607 = vmatprep.subr.bf16.mxu0 0
      %608 = vmatpush2.bf16.msra.mxu0 0
      %609 = vmatprep.mubr.bf16.mxu0 0
      %610 = vmatmul.mubr.bf16.gmra.mxu0 %v509
      %v611 = vpop.f32.mrf.mxu0
      %v612 = vadd.f32 %v563, %v611
      %v613 = vpop.f32.mrf.mxu0
      %v614 = vpop.f32.mrf.mxu0
      %v615 = vpop.f32.mrf.mxu0
      %616 = vdwg.mxu0
      %v617 = vpack.c.bf16 %v612, %v612
      %618 = vst.msk [vmem:[%s442] sm:$0xf] %vm552, %v617
      %v619 = vld [vmem:[%s7] sm:$0xf]
      %v620 = vld [vmem:[%s7 + $0x4] sm:$0xf]
      %v621 = vld [vmem:[%s7 + $0x8] sm:$0xf]
      %v622 = vld [vmem:[%s7 + $0xc] sm:$0xf]
      %v623 = vld [vmem:[%s8] sm:$0x1]
      %v625 = vlaneseq
      %v626 = vshrl.u32 %v625, 7
      %v627 = vsub.s32 0, %v626
      %v628 = vrot.slane %v623, %v627
      %v634 = vunpack.c.l.b16 %v619
      %v635 = vunpack.c.l.b16 %v620
      %v636 = vunpack.c.l.b16 %v621
      %v637 = vunpack.c.l.b16 %v622
      %v638 = vpack.c.b16 %v635, %v634
      %v639 = vpack.c.b16 %v637, %v636
      %642 = vmatprep.subr.bf16.mxu0 0
      %643 = vmatpush1.bf16.msra.mxu0 0
      %644 = vmatprep.subr.bf16.mxu0 0
      %645 = vmatpush1.bf16.msra.mxu0 0
      %646 = vmatprep.subr.bf16.mxu0 0
      %647 = vmatpush1.bf16.msra.mxu0 0
      %648 = vmatprep.subr.bf16.mxu0 0
      %649 = vmatpush1.bf16.msra.mxu0 0
      %650 = vmatprep.subr.bf16.mxu0 0
      %651 = vmatpush1.bf16.msra.mxu0 0
      %652 = vmatprep.subr.bf16.mxu0 0
      %653 = vmatpush1.bf16.msra.mxu0 0
      %654 = vmatprep.subr.bf16.mxu0 0
      %655 = vmatpush1.bf16.msra.mxu0 %v639
      %656 = vmatprep.subr.bf16.mxu0 0
      %657 = vmatpush1.bf16.msra.mxu0 %v638
      %658 = vmatprep.subr.bf16.mxu0 0
      %659 = vmatpush2.bf16.msra.mxu0 0
      %660 = vmatprep.subr.bf16.mxu0 0
      %661 = vmatpush2.bf16.msra.mxu0 0
      %662 = vmatprep.subr.bf16.mxu0 0
      %663 = vmatpush2.bf16.msra.mxu0 0
      %664 = vmatprep.subr.bf16.mxu0 0
      %665 = vmatpush2.bf16.msra.mxu0 0
      %666 = vmatprep.subr.bf16.mxu0 0
      %667 = vmatpush2.bf16.msra.mxu0 0
      %668 = vmatprep.subr.bf16.mxu0 0
      %669 = vmatpush2.bf16.msra.mxu0 0
      %670 = vmatprep.subr.bf16.mxu0 0
      %671 = vmatpush2.bf16.msra.mxu0 0
      %672 = vmatprep.subr.bf16.mxu0 0
      %673 = vmatpush2.bf16.msra.mxu0 0
      %674 = vmatprep.mubr.bf16.mxu0 0
      %675 = vmatmul.mubr.bf16.gmra.mxu0 %v509
      %v676 = vpop.f32.mrf.mxu0
      %v677 = vadd.f32 %v628, %v676
      %v678 = vpop.f32.mrf.mxu0
      %v679 = vpop.f32.mrf.mxu0
      %v680 = vpop.f32.mrf.mxu0
      %681 = vdwg.mxu0
      %v682 = vpack.c.bf16 %v677, %v677
      %683 = vst.msk [vmem:[%s449] sm:$0xf] %vm552, %v682
      %p684 = scmp.lt.s32.totalorder %s27, 1
      %s685 = scalar_select %p684, %s27, 1
      %p686 = scmp.lt.s32.totalorder %s28, 0
      %s687 = scalar_select %p686, %s28, 0
      %s688 = sadd.s32 %s687, %s685
      %s689 = smul.addr %s688, 4
      %s690 = scalar_lea.vmem %s9, %s689
      %p691 = scmp.lt.s32.totalorder %s27, 1
      %s692 = scalar_select %p691, %s27, 1
      %p693 = scmp.lt.s32.totalorder %s28, 0
      %s694 = scalar_select %p693, %s28, 0
      %s695 = sadd.s32 %s694, %s692
      %s696 = smul.addr %s695, 4
      %s697 = scalar_lea.vmem %s10, %s696
      %p698 = scmp.lt.s32.totalorder %s27, 1
      %s699 = scalar_select %p698, %s27, 1
      %p700 = scmp.lt.s32.totalorder %s28, 0
      %s701 = scalar_select %p700, %s28, 0
      %s702 = sadd.s32 %s701, %s699
      %s703 = smul.addr %s702, 4
      %s704 = scalar_lea.vmem %s11, %s703
      // Predicated region
      $region57: #{transformer_lm_forward.7} parent=55 // pred_check
        %p705 = pneg %p251
      $region58: #{transformer_lm_forward.7} parent=55 // pred_check_branch
        %707 = sbr.rel (%p705) target = $region60
      $region59: #{transformer_lm_forward.7} parent=55 // pred_region
        _
      $region60: #{transformer_lm_forward.7} parent=55 // pred_fallthru
        _
      // Predicated region
      $region61: #{transformer_lm_forward.7} parent=55 // pred_check
        %p708 = pneg %p279
      $region62: #{transformer_lm_forward.7} parent=55 // pred_check_branch
        %710 = sbr.rel (%p708) target = $region64
      $region63: #{transformer_lm_forward.7} parent=55 // pred_region
        _
      $region64: #{transformer_lm_forward.7} parent=55 // pred_fallthru
        _
      // Predicated region
      $region65: #{transformer_lm_forward.7} parent=55 // pred_check
        %p711 = pneg %p307
      $region66: #{transformer_lm_forward.7} parent=55 // pred_check_branch
        %713 = sbr.rel (%p711) target = $region68
      $region67: #{transformer_lm_forward.7} parent=55 // pred_region
        _
      $region68: #{transformer_lm_forward.7} parent=55 // pred_fallthru
        _
    $region56: #{transformer_lm_forward.7} parent=5 // pred_fallthru
      _
    %p714 = scmp.le.s32.totalorder 2, %s18
    // Predicated region
    $region69: #{transformer_lm_forward.7} parent=5 // pred_check
      %p715 = pneg %p714
    $region70: #{transformer_lm_forward.7} parent=5 // pred_check_branch
      %717 = sbr.rel (%p715) target = $region72
    $region71: #{transformer_lm_forward.7} parent=5 // pred_region
      %s718 = ssub.s32 %s18, 2
      // Predicated region
      $region73: #{transformer_lm_forward.7} parent=71 // pred_check
        %p719 = pneg %p257
      $region74: #{transformer_lm_forward.7} parent=71 // pred_check_branch
        %721 = sbr.rel (%p719) target = $region76
      $region75: #{transformer_lm_forward.7} parent=71 // pred_region
        %p722 = scmp.lt.s32.totalorder %s29, 1
        %s723 = scalar_select %p722, %s29, 1
        %p724 = scmp.lt.s32.totalorder %s30, 0
        %s725 = scalar_select %p724, %s30, 0
        %s726 = sadd.s32 %s725, %s723
        %s727 = smul.addr %s726, 4
        %s728 = scalar_lea.vmem %s9, %s727
      $region76: #{transformer_lm_forward.7} parent=71 // pred_fallthru
        _
      // Predicated region
      $region77: #{transformer_lm_forward.7} parent=71 // pred_check
        %p729 = pneg %p285
      $region78: #{transformer_lm_forward.7} parent=71 // pred_check_branch
        %731 = sbr.rel (%p729) target = $region80
      $region79: #{transformer_lm_forward.7} parent=71 // pred_region
        %p732 = scmp.lt.s32.totalorder %s29, 1
        %s733 = scalar_select %p732, %s29, 1
        %p734 = scmp.lt.s32.totalorder %s30, 0
        %s735 = scalar_select %p734, %s30, 0
        %s736 = sadd.s32 %s735, %s733
        %s737 = smul.addr %s736, 4
        %s738 = scalar_lea.vmem %s10, %s737
      $region80: #{transformer_lm_forward.7} parent=71 // pred_fallthru
        _
      // Predicated region
      $region81: #{transformer_lm_forward.7} parent=71 // pred_check
        %p739 = pneg %p313
      $region82: #{transformer_lm_forward.7} parent=71 // pred_check_branch
        %741 = sbr.rel (%p739) target = $region84
      $region83: #{transformer_lm_forward.7} parent=71 // pred_region
        %p742 = scmp.lt.s32.totalorder %s29, 1
        %s743 = scalar_select %p742, %s29, 1
        %p744 = scmp.lt.s32.totalorder %s30, 0
        %s745 = scalar_select %p744, %s30, 0
        %s746 = sadd.s32 %s745, %s743
        %s747 = smul.addr %s746, 4
        %s748 = scalar_lea.vmem %s11, %s747
      $region84: #{transformer_lm_forward.7} parent=71 // pred_fallthru
        _
    $region72: #{transformer_lm_forward.7} parent=5 // pred_fallthru
      _
  $region6: #{transformer_lm_forward.7} parent=0 // loop_footer
    %s22 = sadd.s32 1, %s18
  $region7: #{transformer_lm_forward.7} parent=0 // loop_footer_branch
    %17 = sbr.rel target = $region3
  $region8: #{transformer_lm_forward.7} parent=0 // loop_exit
    _

// kernel: transformer_lm_forward.9
$region0: #{transformer_lm_forward.9}
  #allocation0 [shape = 'u32[]', space=smem, size = 0x4, offset = 0x4, fixed_abs, tag = 'smem constant byte address 0x4 - core index']
  #allocation1 [shape = 'u32[144,128]{1,0:T(1,128)}', space=vmem, size = 0x12000, scoped, tag = 'internal scratch']
  #allocation2 [shape = 'bf16[8,32]{1,0:T(8,128)(2,1)}', space=vmem, size = 0x800, scoped, tag = 'scratch operand']
  #allocation3 [shape = 'f32[8,32]{1,0:T(8,128)}', space=vmem, size = 0x1000, scoped, tag = 'scratch operand']
  %s0 = inlined_call_operand.vmem [shape: bf16[2,8,32], index: 0, kind: input, shape index: {}]
  %s1 = inlined_call_operand.vmem [shape: f32[1,32], index: 1, kind: input, shape index: {}]
  %s2 = inlined_call_operand.vmem [shape: f32[1,32], index: 2, kind: input, shape index: {}]
  %s3 = inlined_call_operand.vmem [shape: bf16[32,128], index: 3, kind: input, shape index: {}]
  %s4 = inlined_call_operand.vmem [shape: f32[1,128], index: 4, kind: input, shape index: {}]
  %s5 = inlined_call_operand.vmem [shape: bf16[128,32], index: 5, kind: input, shape index: {}]
  %s6 = inlined_call_operand.vmem [shape: f32[1,32], index: 6, kind: input, shape index: {}]
  %s7 = inlined_call_operand.vmem [shape: bf16[2,8,32], index: 7, kind: output, shape index: {}]
  %s8 = sld [smem:[#allocation0]]
  $region69: #{transformer_lm_forward.9} parent=0
    _
  %s10 = ssub.s32 1, %s8
  %s11 = scalar_select 0, %s10, %s8
  loop: start=0, step=1, limit=4
  $region2: #{transformer_lm_forward.9} parent=0 // loop_pre_header
    _
  $region3: #{transformer_lm_forward.9} parent=0 // loop_header
    %s13 = sphi 0, %s17
    %p14 = scmp.ge.s32.totalorder %s13, 4
    %s20 = sphi 0, %s39
    %s21 = sphi 0, %s35
    %s22 = sphi 0, %s31
    %s23 = sphi 0, %s20
    %s24 = sphi 0, %s21
    %s25 = sphi 0, %s22
    %s26 = sphi 0, %s23
    %s27 = sphi 0, %s24
    %s28 = sphi 0, %s25
    %s44 = sphi 0, %s46
    %s47 = sphi 0, %s44
    %s48 = sphi 0, %s47
    %s64 = sphi 0, %s48
    %s68 = sphi 0, %s68
    %s70 = sphi 0, %s68
    %s71 = sphi 0, %s70
    %s85 = sphi 0, %s71
    %s89 = sphi 0, %s89
    %s91 = sphi 0, %s89
    %s92 = sphi 0, %s91
    %s106 = sphi 0, %s92
    %s112 = sphi 0, %s114
    %s115 = sphi 0, %s112
    %s116 = sphi 0, %s115
    %s132 = sphi 0, %s116
    %s138 = sphi 0, %s140
    %s141 = sphi 0, %s138
    %s142 = sphi 0, %s141
    %s158 = sphi 0, %s142
    %s164 = sphi 0, %s166
    %s167 = sphi 0, %s164
    %s168 = sphi 0, %s167
    %s184 = sphi 0, %s168
    %s188 = sphi 0, %s188
    %s190 = sphi 0, %s188
    %s191 = sphi 0, %s190
    %s205 = sphi 0, %s191
    %s213 = sphi 0, %s215
    %s216 = sphi 0, %s213
    %s217 = sphi 0, %s216
    %s233 = sphi 0, %s217
  $region4: #{transformer_lm_forward.9} parent=0 // loop_header_branch
    %16 = sbr.rel (%p14) target = $region8
  $region5: #{transformer_lm_forward.9} parent=0 // loop_body
    %s18 = ssub.s32 %s13, 1
    %s19 = ssub.s32 %s13, 2
    %s29 = sadd.s32 1, %s22
    %p30 = scmp.ge.s32.totalorder %s29, 1
    %s31 = scalar_select %p30, 0, %s29
    %s32 = sadd.s32 1, %s21
    %s33 = scalar_select %p30, %s32, %s21
    %p34 = scmp.ge.s32.totalorder %s33, 1
    %s35 = scalar_select %p34, 0, %s33
    %s36 = sadd.s32 1, %s20
    %s37 = scalar_select %p34, %s36, %s20
    %p38 = scmp.ge.s32.totalorder %s37, 2
    %s39 = scalar_select %p38, 0, %s37
    %s40 = ssub.s32 %s20, %s39
    %s41 = ssub.s32 %s21, %s35
    %s42 = sor.u32 %s40, %s41
    %p43 = scmp.eq.s32.totalorder %s42, 0
    %s45 = sadd.s32 %s44, 1
    %s46 = scalar_select %p43, %s44, %s45
    %p49 = pneg %p43
    %p50 = scmp.eq.s32.totalorder %s13, 1
    %p51 = por %p49, %p50
    %p52 = scmp.ne.s32.totalorder %s44, %s47
    %p53 = scmp.eq.s32.totalorder %s13, 0
    %p54 = por %p52, %p53
    %p55 = scmp.ne.s32.totalorder %s44, %s47
    %p56 = scmp.eq.s32.totalorder %s18, 1
    %p57 = por %p55, %p56
    %p58 = scmp.ne.s32.totalorder %s47, %s48
    %p59 = scmp.eq.s32.totalorder %s18, 0
    %p60 = por %p58, %p59
    %p61 = scmp.ne.s32.totalorder %s47, %s48
    %p62 = scmp.eq.s32.totalorder %s19, 1
    %p63 = por %p61, %p62
    %p65 = scmp.ne.s32.totalorder %s48, %s64
    %p66 = scmp.eq.s32.totalorder %s19, 0
    %p67 = por %p65, %p66
    %s69 = sadd.s32 %s68, 1
    %p72 = scmp.eq.s32.totalorder %s13, 1
    %p73 = scmp.ne.s32.totalorder %s68, %s70
    %p74 = scmp.eq.s32.totalorder %s13, 0
    %p75 = por %p73, %p74
    %p76 = scmp.ne.s32.totalorder %s68, %s70
    %p77 = scmp.eq.s32.totalorder %s18, 1
    %p78 = por %p76, %p77
    %p79 = scmp.ne.s32.totalorder %s70, %s71
    %p80 = scmp.eq.s32.totalorder %s18, 0
    %p81 = por %p79, %p80
    %p82 = scmp.ne.s32.totalorder %s70, %s71
    %p83 = scmp.eq.s32.totalorder %s19, 1
    %p84 = por %p82, %p83
    %p86 = scmp.ne.s32.totalorder %s71, %s85
    %p87 = scmp.eq.s32.totalorder %s19, 0
    %p88 = por %p86, %p87
    %s90 = sadd.s32 %s89, 1
    %p93 = scmp.eq.s32.totalorder %s13, 1
    %p94 = scmp.ne.s32.totalorder %s89, %s91
    %p95 = scmp.eq.s32.totalorder %s13, 0
    %p96 = por %p94, %p95
    %p97 = scmp.ne.s32.totalorder %s89, %s91
    %p98 = scmp.eq.s32.totalorder %s18, 1
    %p99 = por %p97, %p98
    %p100 = scmp.ne.s32.totalorder %s91, %s92
    %p101 = scmp.eq.s32.totalorder %s18, 0
    %p102 = por %p100, %p101
    %p103 = scmp.ne.s32.totalorder %s91, %s92
    %p104 = scmp.eq.s32.totalorder %s19, 1
    %p105 = por %p103, %p104
    %p107 = scmp.ne.s32.totalorder %s92, %s106
    %p108 = scmp.eq.s32.totalorder %s19, 0
    %p109 = por %p107, %p108
    %s110 = ssub.s32 %s22, %s31
    %p111 = scmp.eq.s32.totalorder %s110, 0
    %s113 = sadd.s32 %s112, 1
    %s114 = scalar_select %p111, %s112, %s113
    %p117 = pneg %p111
    %p118 = scmp.eq.s32.totalorder %s13, 1
    %p119 = por %p117, %p118
    %p120 = scmp.ne.s32.totalorder %s112, %s115
    %p121 = scmp.eq.s32.totalorder %s13, 0
    %p122 = por %p120, %p121
    %p123 = scmp.ne.s32.totalorder %s112, %s115
    %p124 = scmp.eq.s32.totalorder %s18, 1
    %p125 = por %p123, %p124
    %p126 = scmp.ne.s32.totalorder %s115, %s116
    %p127 = scmp.eq.s32.totalorder %s18, 0
    %p128 = por %p126, %p127
    %p129 = scmp.ne.s32.totalorder %s115, %s116
    %p130 = scmp.eq.s32.totalorder %s19, 1
    %p131 = por %p129, %p130
    %p133 = scmp.ne.s32.totalorder %s116, %s132
    %p134 = scmp.eq.s32.totalorder %s19, 0
    %p135 = por %p133, %p134
    %s136 = ssub.s32 %s22, %s31
    %p137 = scmp.eq.s32.totalorder %s136, 0
    %s139 = sadd.s32 %s138, 1
    %s140 = scalar_select %p137, %s138, %s139
    %p143 = pneg %p137
    %p144 = scmp.eq.s32.totalorder %s13, 1
    %p145 = por %p143, %p144
    %p146 = scmp.ne.s32.totalorder %s138, %s141
    %p147 = scmp.eq.s32.totalorder %s13, 0
    %p148 = por %p146, %p147
    %p149 = scmp.ne.s32.totalorder %s138, %s141
    %p150 = scmp.eq.s32.totalorder %s18, 1
    %p151 = por %p149, %p150
    %p152 = scmp.ne.s32.totalorder %s141, %s142
    %p153 = scmp.eq.s32.totalorder %s18, 0
    %p154 = por %p152, %p153
    %p155 = scmp.ne.s32.totalorder %s141, %s142
    %p156 = scmp.eq.s32.totalorder %s19, 1
    %p157 = por %p155, %p156
    %p159 = scmp.ne.s32.totalorder %s142, %s158
    %p160 = scmp.eq.s32.totalorder %s19, 0
    %p161 = por %p159, %p160
    %s162 = ssub.s32 %s22, %s31
    %p163 = scmp.eq.s32.totalorder %s162, 0
    %s165 = sadd.s32 %s164, 1
    %s166 = scalar_select %p163, %s164, %s165
    %p169 = pneg %p163
    %p170 = scmp.eq.s32.totalorder %s13, 1
    %p171 = por %p169, %p170
    %p172 = scmp.ne.s32.totalorder %s164, %s167
    %p173 = scmp.eq.s32.totalorder %s13, 0
    %p174 = por %p172, %p173
    %p175 = scmp.ne.s32.totalorder %s164, %s167
    %p176 = scmp.eq.s32.totalorder %s18, 1
    %p177 = por %p175, %p176
    %p178 = scmp.ne.s32.totalorder %s167, %s168
    %p179 = scmp.eq.s32.totalorder %s18, 0
    %p180 = por %p178, %p179
    %p181 = scmp.ne.s32.totalorder %s167, %s168
    %p182 = scmp.eq.s32.totalorder %s19, 1
    %p183 = por %p181, %p182
    %p185 = scmp.ne.s32.totalorder %s168, %s184
    %p186 = scmp.eq.s32.totalorder %s19, 0
    %p187 = por %p185, %p186
    %s189 = sadd.s32 %s188, 1
    %p192 = scmp.eq.s32.totalorder %s13, 1
    %p193 = scmp.ne.s32.totalorder %s188, %s190
    %p194 = scmp.eq.s32.totalorder %s13, 0
    %p195 = por %p193, %p194
    %p196 = scmp.ne.s32.totalorder %s188, %s190
    %p197 = scmp.eq.s32.totalorder %s18, 1
    %p198 = por %p196, %p197
    %p199 = scmp.ne.s32.totalorder %s190, %s191
    %p200 = scmp.eq.s32.totalorder %s18, 0
    %p201 = por %p199, %p200
    %p202 = scmp.ne.s32.totalorder %s190, %s191
    %p203 = scmp.eq.s32.totalorder %s19, 1
    %p204 = por %p202, %p203
    %p206 = scmp.ne.s32.totalorder %s191, %s205
    %p207 = scmp.eq.s32.totalorder %s19, 0
    %p208 = por %p206, %p207
    %s209 = ssub.s32 %s20, %s39
    %s210 = ssub.s32 %s21, %s35
    %s211 = sor.u32 %s209, %s210
    %p212 = scmp.eq.s32.totalorder %s211, 0
    %s214 = sadd.s32 %s213, 1
    %s215 = scalar_select %p212, %s213, %s214
    %p218 = pneg %p212
    %p219 = scmp.eq.s32.totalorder %s13, 1
    %p220 = por %p218, %p219
    %p221 = scmp.ne.s32.totalorder %s213, %s216
    %p222 = scmp.eq.s32.totalorder %s13, 0
    %p223 = por %p221, %p222
    %p224 = scmp.ne.s32.totalorder %s213, %s216
    %p225 = scmp.eq.s32.totalorder %s18, 1
    %p226 = por %p224, %p225
    %p227 = scmp.ne.s32.totalorder %s216, %s217
    %p228 = scmp.eq.s32.totalorder %s18, 0
    %p229 = por %p227, %p228
    %p230 = scmp.ne.s32.totalorder %s216, %s217
    %p231 = scmp.eq.s32.totalorder %s19, 1
    %p232 = por %p230, %p231
    %p234 = scmp.ne.s32.totalorder %s217, %s233
    %p235 = scmp.eq.s32.totalorder %s19, 0
    %p236 = por %p234, %p235
    %p237 = scmp.le.s32.totalorder 1, %s13
    %p238 = scmp.lt.s32.totalorder %s13, 3
    %p239 = pnand %p237, %p238
    %p240 = pneg %p239
    // Predicated region
    $region9: #{transformer_lm_forward.9} parent=5 // pred_check
      _
    $region10: #{transformer_lm_forward.9} parent=5 // pred_check_branch
      %242 = sbr.rel (%p239) target = $region12
    $region11: #{transformer_lm_forward.9} parent=5 // pred_region
      %s243 = ssub.s32 %s13, 1
      // Predicated region
      $region13: #{transformer_lm_forward.9} parent=11 // pred_check
        %p244 = pneg %p81
      $region14: #{transformer_lm_forward.9} parent=11 // pred_check_branch
        %246 = sbr.rel (%p244) target = $region16
      $region15: #{transformer_lm_forward.9} parent=11 // pred_region
        _
      $region16: #{transformer_lm_forward.9} parent=11 // pred_fallthru
        _
      // Predicated region
      $region17: #{transformer_lm_forward.9} parent=11 // pred_check
        %p247 = pneg %p102
      $region18: #{transformer_lm_forward.9} parent=11 // pred_check_branch
        %249 = sbr.rel (%p247) target = $region20
      $region19: #{transformer_lm_forward.9} parent=11 // pred_region
        _
      $region20: #{transformer_lm_forward.9} parent=11 // pred_fallthru
        _
      // Predicated region
      $region21: #{transformer_lm_forward.9} parent=11 // pred_check
        %p250 = pneg %p128
      $region22: #{transformer_lm_forward.9} parent=11 // pred_check_branch
        %252 = sbr.rel (%p250) target = $region24
      $region23: #{transformer_lm_forward.9} parent=11 // pred_region
        %p253 = scmp.lt.s32.totalorder %s25, 0
        %s254 = scalar_select %p253, %s25, 0
        %s255 = smul.addr %s254, 4
        %s256 = scalar_lea.vmem %s3, %s255
      $region24: #{transformer_lm_forward.9} parent=11 // pred_fallthru
        _
      // Predicated region
      $region25: #{transformer_lm_forward.9} parent=11 // pred_check
        %p257 = pneg %p154
      $region26: #{transformer_lm_forward.9} parent=11 // pred_check_branch
        %259 = sbr.rel (%p257) target = $region28
      $region27: #{transformer_lm_forward.9} parent=11 // pred_region
        %p260 = scmp.lt.s32.totalorder %s25, 0
        %s261 = scalar_select %p260, %s25, 0
        %s262 = scalar_lea.vmem %s4, %s261
      $region28: #{transformer_lm_forward.9} parent=11 // pred_fallthru
        _
      // Predicated region
      $region29: #{transformer_lm_forward.9} parent=11 // pred_check
        %p263 = pneg %p180
      $region30: #{transformer_lm_forward.9} parent=11 // pred_check_branch
        %265 = sbr.rel (%p263) target = $region32
      $region31: #{transformer_lm_forward.9} parent=11 // pred_region
        %s266 = smul.u32 16, %s25
        %p267 = scmp.lt.s32.totalorder %s266, 15
        %s268 = scalar_select %p267, %s266, 15
        %s269 = smul.addr %s268, 4
        %s270 = scalar_lea.vmem %s5, %s269
        %s271 = smul.u32 16, %s25
      $region32: #{transformer_lm_forward.9} parent=11 // pred_fallthru
        _
      // Predicated region
      $region33: #{transformer_lm_forward.9} parent=11 // pred_check
        %p272 = pneg %p201
      $region34: #{transformer_lm_forward.9} parent=11 // pred_check_branch
        %274 = sbr.rel (%p272) target = $region36
      $region35: #{transformer_lm_forward.9} parent=11 // pred_region
        _
      $region36: #{transformer_lm_forward.9} parent=11 // pred_fallthru
        _
    $region12: #{transformer_lm_forward.9} parent=5 // pred_fallthru
      _
    %p275 = scmp.lt.s32.totalorder %s13, 2
    // Predicated region
    $region37: #{transformer_lm_forward.9} parent=5 // pred_check
      %p276 = pneg %p275
    $region38: #{transformer_lm_forward.9} parent=5 // pred_check_branch
      %278 = sbr.rel (%p276) target = $region40
    $region39: #{transformer_lm_forward.9} parent=5 // pred_region
      // Predicated region
      $region41: #{transformer_lm_forward.9} parent=39 // pred_check
        %p279 = pneg %p54
      $region42: #{transformer_lm_forward.9} parent=39 // pred_check_branch
        %281 = sbr.rel (%p279) target = $region44
      $region43: #{transformer_lm_forward.9} parent=39 // pred_region
        %p282 = scmp.lt.s32.totalorder %s20, 1
        %s283 = scalar_select %p282, %s20, 1
        %p284 = scmp.lt.s32.totalorder %s21, 0
        %s285 = scalar_select %p284, %s21, 0
        %s286 = sadd.s32 %s285, %s283
        %s287 = smul.addr %s286, 4
        %s288 = scalar_lea.vmem %s0, %s287
      $region44: #{transformer_lm_forward.9} parent=39 // pred_fallthru
        _
    $region40: #{transformer_lm_forward.9} parent=5 // pred_fallthru
      _
    %p289 = scmp.le.s32.totalorder 1, %s13
    %p290 = scmp.lt.s32.totalorder %s13, 3
    %p291 = pnand %p289, %p290
    %p292 = pneg %p291
    // Predicated region
    $region45: #{transformer_lm_forward.9} parent=5 // pred_check
      _
    $region46: #{transformer_lm_forward.9} parent=5 // pred_check_branch
      %294 = sbr.rel (%p291) target = $region48
    $region47: #{transformer_lm_forward.9} parent=5 // pred_region
      %s295 = ssub.s32 %s13, 1
      %p296 = scmp.lt.s32.totalorder %s23, 1
      %s297 = scalar_select %p296, %s23, 1
      %p298 = scmp.lt.s32.totalorder %s24, 0
      %s299 = scalar_select %p298, %s24, 0
      %s300 = sadd.s32 %s299, %s297
      %s301 = smul.addr %s300, 4
      %s302 = scalar_lea.vmem %s0, %s301
      %p303 = pneg %p60
      %p304 = pneg %p57
      %p305 = pneg %p81
      %p306 = pneg %p78
      %p307 = pneg %p102
      %p308 = pneg %p99
      %p309 = scmp.lt.s32.totalorder %s25, 0
      %s310 = scalar_select %p309, %s25, 0
      %s311 = smul.addr %s310, 4
      %s312 = scalar_lea.vmem %s3, %s311
      %p313 = pneg %p128
      %p314 = pneg %p125
      %p315 = scmp.lt.s32.totalorder %s25, 0
      %s316 = scalar_select %p315, %s25, 0
      %s317 = scalar_lea.vmem %s4, %s316
      %p318 = pneg %p154
      %p319 = pneg %p151
      %s320 = smul.u32 16, %s25
      %p321 = scmp.lt.s32.totalorder %s320, 15
      %s322 = scalar_select %p321, %s320, 15
      %s323 = smul.addr %s322, 4
      %s324 = scalar_lea.vmem %s5, %s323
      %p325 = pneg %p180
      %p326 = pneg %p177
      %p327 = pneg %p201
      %p328 = pneg %p198
      %p329 = pneg %p229
      %p330 = pneg %p226
      %p331 = scmp.lt.s32.totalorder %s23, 1
      %s332 = scalar_select %p331, %s23, 1
      %p333 = scmp.lt.s32.totalorder %s24, 0
      %s334 = scalar_select %p333, %s24, 0
      %s335 = sadd.s32 %s334, %s332
      %s336 = smul.addr %s335, 4
      %s337 = scalar_lea.vmem %s7, %s336
      %p338 = scmp.lt.s32.totalorder %s23, 1
      %s339 = scalar_select %p338, %s23, 1
      %p340 = scmp.lt.s32.totalorder %s24, 0
      %s341 = scalar_select %p340, %s24, 0
      %s342 = sadd.s32 %s341, %s339
      %s343 = smul.addr %s342, 4
      %s344 = scalar_lea.vmem %s0, %s343
      %p345 = scmp.lt.s32.totalorder %s25, 0
      %s346 = scalar_select %p345, %s25, 0
      %s347 = smul.addr %s346, 4
      %s348 = scalar_lea.vmem %s3, %s347
      %p349 = scmp.lt.s32.totalorder %s25, 0
      %s350 = scalar_select %p349, %s25, 0
      %s351 = scalar_lea.vmem %s4, %s350
      %s352 = smul.u32 16, %s25
      %p353 = scmp.lt.s32.totalorder %s352, 15
      %s354 = scalar_select %p353, %s352, 15
      %s355 = smul.addr %s354, 4
      %s356 = scalar_lea.vmem %s5, %s355
      %s357 = smul.u32 16, %s25
      %p358 = scmp.lt.s32.totalorder %s23, 1
      %s359 = scalar_select %p358, %s23, 1
      %p360 = scmp.lt.s32.totalorder %s24, 0
      %s361 = scalar_select %p360, %s24, 0
      %s362 = sadd.s32 %s361, %s359
      %s363 = smul.addr %s362, 4
      %s364 = scalar_lea.vmem %s7, %s363
      %p366 = scmp.eq.s32.totalorder %s25, 0
      // Predicated region
      $region49: #{transformer_lm_forward.9} parent=47 // pred_check
        %p367 = pneg %p366
      $region50: #{transformer_lm_forward.9} parent=47 // pred_check_branch
        %369 = sbr.rel (%p367) target = $region52
      $region51: #{transformer_lm_forward.9} parent=47 // pred_region
        %v370 = vld [vmem:[%s344] sm:$0xf]
        %v371 = vunpack.c.l.bf16 %v370
        %v372 = vld [vmem:[%s1] sm:$0x1]
        %v373 = vld [vmem:[%s2] sm:$0x1]
        %vm374 = vcmask 261120
        %v375 = vsel %vm374, %v371, 0.0
        %376 = vadd.xlane.f32.xlu0 %v375
        %v377 = vpop.xlane.xlu0 %376
        %v378 = vrcp.pop 32.0
        %v379 = vmul.f32 %v377, %v378
        %v380 = vsub.f32 %v371, %v379
        %v381 = vmul.f32 %v380, %v380
        %v382 = vsel %vm374, %v381, 0.0
        %383 = vadd.xlane.f32.xlu0 %v382
        %v384 = vpop.xlane.xlu0 %383
        %v385 = vmul.f32 %v384, %v378
        %v386 = vadd.f32 %v385, 1e-05
        %v387 = vrsqrt.pop %v386
        %v388 = vmul.f32 %v380, %v387
        %v390 = vlaneseq
        %v391 = vshrl.u32 %v390, 7
        %v392 = vsub.s32 0, %v391
        %v393 = vrot.slane %v372, %v392
        %v395 = vmul.f32 %v388, %v393
        %v397 = vlaneseq
        %v398 = vshrl.u32 %v397, 7
        %v399 = vsub.s32 0, %v398
        %v400 = vrot.slane %v373, %v399
        %v402 = vadd.f32 %v395, %v400
        %v403 = vpack.c.bf16 %v402, %v402
        %vm404 = vcmask 257024
        %405 = vst.msk [vmem:[#allocation2] sm:$0xf] %vm404, %v403
        %406 = vst.msk [vmem:[#allocation3] sm:$0xff] %vm374, 0.0
      $region52: #{transformer_lm_forward.9} parent=47 // pred_fallthru
        _
      %v407 = vld [vmem:[#allocation2] sm:$0xf]
      %v408 = vld [vmem:[%s348] sm:$0xf]
      %v409 = vld [vmem:[%s348 + $0x4] sm:$0xf]
      %v410 = vld [vmem:[%s348 + $0x8] sm:$0xf]
      %v411 = vld [vmem:[%s348 + $0xc] sm:$0xf]
      %v412 = vld [vmem:[%s351] sm:$0x1]
      %v414 = vlaneseq
      %v415 = vshrl.u32 %v414, 7
      %v416 = vsub.s32 0, %v415
      %v417 = vrot.slane %v412, %v416
      %v423 = vunpack.c.l.b16 %v408
      %v424 = vunpack.c.l.b16 %v409
      %v425 = vunpack.c.l.b16 %v410
      %v426 = vunpack.c.l.b16 %v411
      %v427 = vpack.c.b16 %v424, %v423
      %v428 = vpack.c.b16 %v426, %v425
      %vm431 = vcmask 261120
      %v433 = vsel %vm431, %v407, 0
      %435 = vmatprep.subr.bf16.mxu0 0
      %436 = vmatpush1.bf16.msra.mxu0 0
      %437 = vmatprep.subr.bf16.mxu0 0
      %438 = vmatpush1.bf16.msra.mxu0 0
      %439 = vmatprep.subr.bf16.mxu0 0
      %440 = vmatpush1.bf16.msra.mxu0 0
      %441 = vmatprep.subr.bf16.mxu0 0
      %442 = vmatpush1.bf16.msra.mxu0 0
      %443 = vmatprep.subr.bf16.mxu0 0
      %444 = vmatpush1.bf16.msra.mxu0 0
      %445 = vmatprep.subr.bf16.mxu0 0
      %446 = vmatpush1.bf16.msra.mxu0 0
      %447 = vmatprep.subr.bf16.mxu0 0
      %448 = vmatpush1.bf16.msra.mxu0 %v428
      %449 = vmatprep.subr.bf16.mxu0 0
      %450 = vmatpush1.bf16.msra.mxu0 %v427
      %451 = vmatprep.subr.bf16.mxu0 0
      %452 = vmatpush2.bf16.msra.mxu0 0
      %453 = vmatprep.subr.bf16.mxu0 0
      %454 = vmatpush2.bf16.msra.mxu0 0
      %455 = vmatprep.subr.bf16.mxu0 0
      %456 = vmatpush2.bf16.msra.mxu0 0
      %457 = vmatprep.subr.bf16.mxu0 0
      %458 = vmatpush2.bf16.msra.mxu0 0
      %459 = vmatprep.subr.bf16.mxu0 0
      %460 = vmatpush2.bf16.msra.mxu0 0
      %461 = vmatprep.subr.bf16.mxu0 0
      %462 = vmatpush2.bf16.msra.mxu0 0
      %463 = vmatprep.subr.bf16.mxu0 0
      %464 = vmatpush2.bf16.msra.mxu0 0
      %465 = vmatprep.subr.bf16.mxu0 0
      %466 = vmatpush2.bf16.msra.mxu0 0
      %467 = vmatprep.mubr.bf16.mxu0 0
      %468 = vmatmul.mubr.bf16.gmra.mxu0 %v433
      %v469 = vpop.f32.mrf.mxu0
      %v470 = vadd.f32 %v417, %v469
      %v471 = vpop.f32.mrf.mxu0
      %v472 = vpop.f32.mrf.mxu0
      %v473 = vpop.f32.mrf.mxu0
      %474 = vdwg.mxu0
      %v475 = vmul.f32 %v470, 0.5
      %v476 = vmul.f32 %v470, 0.044715
      %v477 = vmul.f32 %v476, %v470
      %v478 = vmul.f32 %v477, %v470
      %v479 = vadd.f32 %v470, %v478
      %v480 = vmul.f32 %v479, 0.7978846
      %v481 = vtanh.pop %v480
      %v482 = vadd.f32 %v481, 1.0
      %v483 = vmul.f32 %v475, %v482
      %v484 = vld [vmem:[#allocation3] sm:$0xff]
      %v485 = vpack.c.bf16 %v483, %v483
      %v486 = vld [vmem:[%s356] sm:$0xf]
      %v487 = vld [vmem:[%s356 + $0x4] sm:$0xf]
      %v488 = vld [vmem:[%s356 + $0x8] sm:$0xf]
      %v489 = vld [vmem:[%s356 + $0xc] sm:$0xf]
      %v490 = vld [vmem:[%s356 + $0x10] sm:$0xf]
      %v491 = vld [vmem:[%s356 + $0x14] sm:$0xf]
      %v492 = vld [vmem:[%s356 + $0x18] sm:$0xf]
      %v493 = vld [vmem:[%s356 + $0x1c] sm:$0xf]
      %v494 = vld [vmem:[%s356 + $0x20] sm:$0xf]
      %v495 = vld [vmem:[%s356 + $0x24] sm:$0xf]
      %v496 = vld [vmem:[%s356 + $0x28] sm:$0xf]
      %v497 = vld [vmem:[%s356 + $0x2c] sm:$0xf]
      %v498 = vld [vmem:[%s356 + $0x30] sm:$0xf]
      %v499 = vld [vmem:[%s356 + $0x34] sm:$0xf]
      %v500 = vld [vmem:[%s356 + $0x38] sm:$0xf]
      %v501 = vld [vmem:[%s356 + $0x3c] sm:$0xf]
      %v518 = vunpack.c.l.b16 %v486
      %v519 = vunpack.c.l.b16 %v487
      %v520 = vunpack.c.l.b16 %v488
      %v521 = vunpack.c.l.b16 %v489
      %v522 = vunpack.c.l.b16 %v490
      %v523 = vunpack.c.l.b16 %v491
      %v524 = vunpack.c.l.b16 %v492
      %v525 = vunpack.c.l.b16 %v493
      %v526 = vunpack.c.l.b16 %v494
      %v527 = vunpack.c.l.b16 %v495
      %v528 = vunpack.c.l.b16 %v496
      %v529 = vunpack.c.l.b16 %v497
      %v530 = vunpack.c.l.b16 %v498
      %v531 = vunpack.c.l.b16 %v499
      %v532 = vunpack.c.l.b16 %v500
      %v533 = vunpack.c.l.b16 %v501
      %v534 = vpack.c.b16 %v519, %v518
      %v535 = vpack.c.b16 %v521, %v520
      %v536 = vpack.c.b16 %v523, %v522
      %v537 = vpack.c.b16 %v525, %v524
      %v538 = vpack.c.b16 %v527, %v526
      %v539 = vpack.c.b16 %v529, %v528
      %v540 = vpack.c.b16 %v531, %v530
      %v541 = vpack.c.b16 %v533, %v532
      %550 = vmatprep.subr.bf16.mxu0 0
      %551 = vmatpush1.bf16.msra.mxu0 %v541
      %552 = vmatprep.subr.bf16.mxu0 0
      %553 = vmatpush1.bf16.msra.mxu0 %v540
      %554 = vmatprep.subr.bf16.mxu0 0
      %555 = vmatpush1.bf16.msra.mxu0 %v539
      %556 = vmatprep.subr.bf16.mxu0 0
      %557 = vmatpush1.bf16.msra.mxu0 %v538
      %558 = vmatprep.subr.bf16.mxu0 0
      %559 = vmatpush1.bf16.msra.mxu0 %v537
      %560 = vmatprep.subr.bf16.mxu0 0
      %561 = vmatpush1.bf16.msra.mxu0 %v536
      %562 = vmatprep.subr.bf16.mxu0 0
      %563 = vmatpush1.bf16.msra.mxu0 %v535
      %564 = vmatprep.subr.bf16.mxu0 0
      %565 = vmatpush1.bf16.msra.mxu0 %v534
      %566 = vmatprep.subr.bf16.mxu0 0
      %567 = vmatpush2.bf16.msra.mxu0 0
      %568 = vmatprep.subr.bf16.mxu0 0
      %569 = vmatpush2.bf16.msra.mxu0 0
      %570 = vmatprep.subr.bf16.mxu0 0
      %571 = vmatpush2.bf16.msra.mxu0 0
      %572 = vmatprep.subr.bf16.mxu0 0
      %573 = vmatpush2.bf16.msra.mxu0 0
      %574 = vmatprep.subr.bf16.mxu0 0
      %575 = vmatpush2.bf16.msra.mxu0 0
      %576 = vmatprep.subr.bf16.mxu0 0
      %577 = vmatpush2.bf16.msra.mxu0 0
      %578 = vmatprep.subr.bf16.mxu0 0
      %579 = vmatpush2.bf16.msra.mxu0 0
      %580 = vmatprep.subr.bf16.mxu0 0
      %581 = vmatpush2.bf16.msra.mxu0 0
      %582 = vmatprep.mubr.bf16.mxu0 0
      %583 = vmatmul.mubr.bf16.gmra.mxu0 %v485
      %v584 = vpop.f32.mrf.mxu0
      %v585 = vadd.f32 0.0, %v584
      %v586 = vpop.f32.mrf.mxu0
      %v587 = vpop.f32.mrf.mxu0
      %v588 = vpop.f32.mrf.mxu0
      %589 = vdwg.mxu0
      %v590 = vadd.f32 %v484, %v585
      %591 = vst.msk [vmem:[#allocation3] sm:$0xff] %vm431, %v590
      // Predicated region
      $region53: #{transformer_lm_forward.9} parent=47 // pred_check
        %p592 = pneg %p366
      $region54: #{transformer_lm_forward.9} parent=47 // pred_check_branch
        %594 = sbr.rel (%p592) target = $region56
      $region55: #{transformer_lm_forward.9} parent=47 // pred_region
        %v595 = vld [vmem:[#allocation3] sm:$0xff]
        %v596 = vld [vmem:[%s6] sm:$0x1]
        %v598 = vlaneseq
        %v599 = vshrl.u32 %v598, 7
        %v600 = vsub.s32 0, %v599
        %v601 = vrot.slane %v596, %v600
        %v603 = vadd.f32 %v595, %v601
        %v604 = vld [vmem:[%s344] sm:$0xf]
        %v605 = vunpack.c.l.bf16 %v604
        %v606 = vadd.f32 %v605, %v603
        %v607 = vpack.c.bf16 %v606, %v606
        %vm608 = vcmask 257024
        %609 = vst.msk [vmem:[%s364] sm:$0xf] %vm608, %v607
      $region56: #{transformer_lm_forward.9} parent=47 // pred_fallthru
        _
      %p610 = scmp.lt.s32.totalorder %s23, 1
      %s611 = scalar_select %p610, %s23, 1
      %p612 = scmp.lt.s32.totalorder %s24, 0
      %s613 = scalar_select %p612, %s24, 0
      %s614 = sadd.s32 %s613, %s611
      %s615 = smul.addr %s614, 4
      %s616 = scalar_lea.vmem %s7, %s615
      // Predicated region
      $region57: #{transformer_lm_forward.9} parent=47 // pred_check
        %p617 = pneg %p226
      $region58: #{transformer_lm_forward.9} parent=47 // pred_check_branch
        %619 = sbr.rel (%p617) target = $region60
      $region59: #{transformer_lm_forward.9} parent=47 // pred_region
        _
      $region60: #{transformer_lm_forward.9} parent=47 // pred_fallthru
        _
    $region48: #{transformer_lm_forward.9} parent=5 // pred_fallthru
      _
    %p620 = scmp.le.s32.totalorder 2, %s13
    // Predicated region
    $region61: #{transformer_lm_forward.9} parent=5 // pred_check
      %p621 = pneg %p620
    $region62: #{transformer_lm_forward.9} parent=5 // pred_check_branch
      %623 = sbr.rel (%p621) target = $region64
    $region63: #{transformer_lm_forward.9} parent=5 // pred_region
      %s624 = ssub.s32 %s13, 2
      // Predicated region
      $region65: #{transformer_lm_forward.9} parent=63 // pred_check
        %p625 = pneg %p232
      $region66: #{transformer_lm_forward.9} parent=63 // pred_check_branch
        %627 = sbr.rel (%p625) target = $region68
      $region67: #{transformer_lm_forward.9} parent=63 // pred_region
        %p628 = scmp.lt.s32.totalorder %s26, 1
        %s629 = scalar_select %p628, %s26, 1
        %p630 = scmp.lt.s32.totalorder %s27, 0
        %s631 = scalar_select %p630, %s27, 0
        %s632 = sadd.s32 %s631, %s629
        %s633 = smul.addr %s632, 4
        %s634 = scalar_lea.vmem %s7, %s633
      $region68: #{transformer_lm_forward.9} parent=63 // pred_fallthru
        _
    $region64: #{transformer_lm_forward.9} parent=5 // pred_fallthru
      _
  $region6: #{transformer_lm_forward.9} parent=0 // loop_footer
    %s17 = sadd.s32 1, %s13
  $region7: #{transformer_lm_forward.9} parent=0 // loop_footer_branch
    %12 = sbr.rel target = $region3
  $region8: #{transformer_lm_forward.9} parent=0 // loop_exit
    _

// kernel: transformer_lm_forward.8
$region0: #{transformer_lm_forward.8}
  #allocation0 [shape = 'u32[]', space=smem, size = 0x4, offset = 0x4, fixed_abs, tag = 'smem constant byte address 0x4 - core index']
  #allocation1 [shape = 'u32[144,128]{1,0:T(1,128)}', space=vmem, size = 0x12000, scoped, tag = 'internal scratch']
  #allocation2 [shape = 'f32[4,8,1]{2,1,0:T(8,128)}', space=vmem, size = 0x4000, scoped, tag = 'scratch operand']
  #allocation3 [shape = 'f32[4,8,1]{2,1,0:T(8,128)}', space=vmem, size = 0x4000, scoped, tag = 'scratch operand']
  #allocation4 [shape = 'f32[4,8,8]{2,1,0:T(8,128)}', space=vmem, size = 0x4000, scoped, tag = 'scratch operand']
  %s0 = inlined_call_operand.vmem [shape: bf16[2,4,8,8], index: 0, kind: input, shape index: {}]
  %s1 = inlined_call_operand.vmem [shape: bf16[2,4,8,8], index: 1, kind: input, shape index: {}]
  %s2 = inlined_call_operand.vmem [shape: bf16[2,4,8,8], index: 2, kind: input, shape index: {}]
  %s3 = inlined_call_operand.vmem [shape: bf16[2,8,32], index: 3, kind: input, shape index: {}]
  %s4 = inlined_call_operand.vmem [shape: bf16[4,8,32], index: 4, kind: input, shape index: {}]
  %s5 = inlined_call_operand.vmem [shape: f32[1,32], index: 5, kind: input, shape index: {}]
  %s6 = inlined_call_operand.vmem [shape: bf16[2,8,32], index: 6, kind: output, shape index: {}]
  %s7 = sld [smem:[#allocation0]]
  $region65: #{transformer_lm_forward.8} parent=0
    _
  %s9 = ssub.s32 1, %s7
  %s10 = scalar_select 0, %s9, %s7
  loop: start=0, step=1, limit=4
  $region2: #{transformer_lm_forward.8} parent=0 // loop_pre_header
    _
  $region3: #{transformer_lm_forward.8} parent=0 // loop_header
    %s12 = sphi 0, %s16
    %p13 = scmp.ge.s32.totalorder %s12, 4
    %s19 = sphi 0, %s38
    %s20 = sphi 0, %s34
    %s21 = sphi 0, %s30
    %s22 = sphi 0, %s19
    %s23 = sphi 0, %s20
    %s24 = sphi 0, %s21
    %s25 = sphi 0, %s22
    %s26 = sphi 0, %s23
    %s27 = sphi 0, %s24
    %s43 = sphi 0, %s45
    %s46 = sphi 0, %s43
    %s47 = sphi 0, %s46
    %s63 = sphi 0, %s47
    %s71 = sphi 0, %s73
    %s74 = sphi 0, %s71
    %s75 = sphi 0, %s74
    %s91 = sphi 0, %s75
    %s99 = sphi 0, %s101
    %s102 = sphi 0, %s99
    %s103 = sphi 0, %s102
    %s119 = sphi 0, %s103
    %s127 = sphi 0, %s129
    %s130 = sphi 0, %s127
    %s131 = sphi 0, %s130
    %s147 = sphi 0, %s131
    %s151 = sphi 0, %s151
    %s153 = sphi 0, %s151
    %s154 = sphi 0, %s153
    %s168 = sphi 0, %s154
    %s172 = sphi 0, %s172
    %s174 = sphi 0, %s172
    %s175 = sphi 0, %s174
    %s189 = sphi 0, %s175
    %s197 = sphi 0, %s199
    %s200 = sphi 0, %s197
    %s201 = sphi 0, %s200
    %s217 = sphi 0, %s201
  $region4: #{transformer_lm_forward.8} parent=0 // loop_header_branch
    %15 = sbr.rel (%p13) target = $region8
  $region5: #{transformer_lm_forward.8} parent=0 // loop_body
    %s17 = ssub.s32 %s12, 1
    %s18 = ssub.s32 %s12, 2
    %s28 = sadd.s32 1, %s21
    %p29 = scmp.ge.s32.totalorder %s28, 1
    %s30 = scalar_select %p29, 0, %s28
    %s31 = sadd.s32 1, %s20
    %s32 = scalar_select %p29, %s31, %s20
    %p33 = scmp.ge.s32.totalorder %s32, 1
    %s34 = scalar_select %p33, 0, %s32
    %s35 = sadd.s32 1, %s19
    %s36 = scalar_select %p33, %s35, %s19
    %p37 = scmp.ge.s32.totalorder %s36, 2
    %s38 = scalar_select %p37, 0, %s36
    %s39 = ssub.s32 %s19, %s38
    %s40 = ssub.s32 %s20, %s34
    %s41 = sor.u32 %s39, %s40
    %p42 = scmp.eq.s32.totalorder %s41, 0
    %s44 = sadd.s32 %s43, 1
    %s45 = scalar_select %p42, %s43, %s44
    %p48 = pneg %p42
    %p49 = scmp.eq.s32.totalorder %s12, 1
    %p50 = por %p48, %p49
    %p51 = scmp.ne.s32.totalorder %s43, %s46
    %p52 = scmp.eq.s32.totalorder %s12, 0
    %p53 = por %p51, %p52
    %p54 = scmp.ne.s32.totalorder %s43, %s46
    %p55 = scmp.eq.s32.totalorder %s17, 1
    %p56 = por %p54, %p55
    %p57 = scmp.ne.s32.totalorder %s46, %s47
    %p58 = scmp.eq.s32.totalorder %s17, 0
    %p59 = por %p57, %p58
    %p60 = scmp.ne.s32.totalorder %s46, %s47
    %p61 = scmp.eq.s32.totalorder %s18, 1
    %p62 = por %p60, %p61
    %p64 = scmp.ne.s32.totalorder %s47, %s63
    %p65 = scmp.eq.s32.totalorder %s18, 0
    %p66 = por %p64, %p65
    %s67 = ssub.s32 %s19, %s38
    %s68 = ssub.s32 %s21, %s30
    %s69 = sor.u32 %s67, %s68
    %p70 = scmp.eq.s32.totalorder %s69, 0
    %s72 = sadd.s32 %s71, 1
    %s73 = scalar_select %p70, %s71, %s72
    %p76 = pneg %p70
    %p77 = scmp.eq.s32.totalorder %s12, 1
    %p78 = por %p76, %p77
    %p79 = scmp.ne.s32.totalorder %s71, %s74
    %p80 = scmp.eq.s32.totalorder %s12, 0
    %p81 = por %p79, %p80
    %p82 = scmp.ne.s32.totalorder %s71, %s74
    %p83 = scmp.eq.s32.totalorder %s17, 1
    %p84 = por %p82, %p83
    %p85 = scmp.ne.s32.totalorder %s74, %s75
    %p86 = scmp.eq.s32.totalorder %s17, 0
    %p87 = por %p85, %p86
    %p88 = scmp.ne.s32.totalorder %s74, %s75
    %p89 = scmp.eq.s32.totalorder %s18, 1
    %p90 = por %p88, %p89
    %p92 = scmp.ne.s32.totalorder %s75, %s91
    %p93 = scmp.eq.s32.totalorder %s18, 0
    %p94 = por %p92, %p93
    %s95 = ssub.s32 %s19, %s38
    %s96 = ssub.s32 %s21, %s30
    %s97 = sor.u32 %s95, %s96
    %p98 = scmp.eq.s32.totalorder %s97, 0
    %s100 = sadd.s32 %s99, 1
    %s101 = scalar_select %p98, %s99, %s100
    %p104 = pneg %p98
    %p105 = scmp.eq.s32.totalorder %s12, 1
    %p106 = por %p104, %p105
    %p107 = scmp.ne.s32.totalorder %s99, %s102
    %p108 = scmp.eq.s32.totalorder %s12, 0
    %p109 = por %p107, %p108
    %p110 = scmp.ne.s32.totalorder %s99, %s102
    %p111 = scmp.eq.s32.totalorder %s17, 1
    %p112 = por %p110, %p111
    %p113 = scmp.ne.s32.totalorder %s102, %s103
    %p114 = scmp.eq.s32.totalorder %s17, 0
    %p115 = por %p113, %p114
    %p116 = scmp.ne.s32.totalorder %s102, %s103
    %p117 = scmp.eq.s32.totalorder %s18, 1
    %p118 = por %p116, %p117
    %p120 = scmp.ne.s32.totalorder %s103, %s119
    %p121 = scmp.eq.s32.totalorder %s18, 0
    %p122 = por %p120, %p121
    %s123 = ssub.s32 %s19, %s38
    %s124 = ssub.s32 %s20, %s34
    %s125 = sor.u32 %s123, %s124
    %p126 = scmp.eq.s32.totalorder %s125, 0
    %s128 = sadd.s32 %s127, 1
    %s129 = scalar_select %p126, %s127, %s128
    %p132 = pneg %p126
    %p133 = scmp.eq.s32.totalorder %s12, 1
    %p134 = por %p132, %p133
    %p135 = scmp.ne.s32.totalorder %s127, %s130
    %p136 = scmp.eq.s32.totalorder %s12, 0
    %p137 = por %p135, %p136
    %p138 = scmp.ne.s32.totalorder %s127, %s130
    %p139 = scmp.eq.s32.totalorder %s17, 1
    %p140 = por %p138, %p139
    %p141 = scmp.ne.s32.totalorder %s130, %s131
    %p142 = scmp.eq.s32.totalorder %s17, 0
    %p143 = por %p141, %p142
    %p144 = scmp.ne.s32.totalorder %s130, %s131
    %p145 = scmp.eq.s32.totalorder %s18, 1
    %p146 = por %p144, %p145
    %p148 = scmp.ne.s32.totalorder %s131, %s147
    %p149 = scmp.eq.s32.totalorder %s18, 0
    %p150 = por %p148, %p149
    %s152 = sadd.s32 %s151, 1
    %p155 = scmp.eq.s32.totalorder %s12, 1
    %p156 = scmp.ne.s32.totalorder %s151, %s153
    %p157 = scmp.eq.s32.totalorder %s12, 0
    %p158 = por %p156, %p157
    %p159 = scmp.ne.s32.totalorder %s151, %s153
    %p160 = scmp.eq.s32.totalorder %s17, 1
    %p161 = por %p159, %p160
    %p162 = scmp.ne.s32.totalorder %s153, %s154
    %p163 = scmp.eq.s32.totalorder %s17, 0
    %p164 = por %p162, %p163
    %p165 = scmp.ne.s32.totalorder %s153, %s154
    %p166 = scmp.eq.s32.totalorder %s18, 1
    %p167 = por %p165, %p166
    %p169 = scmp.ne.s32.totalorder %s154, %s168
    %p170 = scmp.eq.s32.totalorder %s18, 0
    %p171 = por %p169, %p170
    %s173 = sadd.s32 %s172, 1
    %p176 = scmp.eq.s32.totalorder %s12, 1
    %p177 = scmp.ne.s32.totalorder %s172, %s174
    %p178 = scmp.eq.s32.totalorder %s12, 0
    %p179 = por %p177, %p178
    %p180 = scmp.ne.s32.totalorder %s172, %s174
    %p181 = scmp.eq.s32.totalorder %s17, 1
    %p182 = por %p180, %p181
    %p183 = scmp.ne.s32.totalorder %s174, %s175
    %p184 = scmp.eq.s32.totalorder %s17, 0
    %p185 = por %p183, %p184
    %p186 = scmp.ne.s32.totalorder %s174, %s175
    %p187 = scmp.eq.s32.totalorder %s18, 1
    %p188 = por %p186, %p187
    %p190 = scmp.ne.s32.totalorder %s175, %s189
    %p191 = scmp.eq.s32.totalorder %s18, 0
    %p192 = por %p190, %p191
    %s193 = ssub.s32 %s19, %s38
    %s194 = ssub.s32 %s20, %s34
    %s195 = sor.u32 %s193, %s194
    %p196 = scmp.eq.s32.totalorder %s195, 0
    %s198 = sadd.s32 %s197, 1
    %s199 = scalar_select %p196, %s197, %s198
    %p202 = pneg %p196
    %p203 = scmp.eq.s32.totalorder %s12, 1
    %p204 = por %p202, %p203
    %p205 = scmp.ne.s32.totalorder %s197, %s200
    %p206 = scmp.eq.s32.totalorder %s12, 0
    %p207 = por %p205, %p206
    %p208 = scmp.ne.s32.totalorder %s197, %s200
    %p209 = scmp.eq.s32.totalorder %s17, 1
    %p210 = por %p208, %p209
    %p211 = scmp.ne.s32.totalorder %s200, %s201
    %p212 = scmp.eq.s32.totalorder %s17, 0
    %p213 = por %p211, %p212
    %p214 = scmp.ne.s32.totalorder %s200, %s201
    %p215 = scmp.eq.s32.totalorder %s18, 1
    %p216 = por %p214, %p215
    %p218 = scmp.ne.s32.totalorder %s201, %s217
    %p219 = scmp.eq.s32.totalorder %s18, 0
    %p220 = por %p218, %p219
    %p221 = scmp.le.s32.totalorder 1, %s12
    %p222 = scmp.lt.s32.totalorder %s12, 3
    %p223 = pnand %p221, %p222
    %p224 = pneg %p223
    // Predicated region
    $region9: #{transformer_lm_forward.8} parent=5 // pred_check
      _
    $region10: #{transformer_lm_forward.8} parent=5 // pred_check_branch
      %226 = sbr.rel (%p223) target = $region12
    $region11: #{transformer_lm_forward.8} parent=5 // pred_region
      %s227 = ssub.s32 %s12, 1
      // Predicated region
      $region13: #{transformer_lm_forward.8} parent=11 // pred_check
        %p228 = pneg %p164
      $region14: #{transformer_lm_forward.8} parent=11 // pred_check_branch
        %230 = sbr.rel (%p228) target = $region16
      $region15: #{transformer_lm_forward.8} parent=11 // pred_region
        _
      $region16: #{transformer_lm_forward.8} parent=11 // pred_fallthru
        _
      // Predicated region
      $region17: #{transformer_lm_forward.8} parent=11 // pred_check
        %p231 = pneg %p185
      $region18: #{transformer_lm_forward.8} parent=11 // pred_check_branch
        %233 = sbr.rel (%p231) target = $region20
      $region19: #{transformer_lm_forward.8} parent=11 // pred_region
        _
      $region20: #{transformer_lm_forward.8} parent=11 // pred_fallthru
        _
    $region12: #{transformer_lm_forward.8} parent=5 // pred_fallthru
      _
    %p234 = scmp.lt.s32.totalorder %s12, 2
    // Predicated region
    $region21: #{transformer_lm_forward.8} parent=5 // pred_check
      %p235 = pneg %p234
    $region22: #{transformer_lm_forward.8} parent=5 // pred_check_branch
      %237 = sbr.rel (%p235) target = $region24
    $region23: #{transformer_lm_forward.8} parent=5 // pred_region
      // Predicated region
      $region25: #{transformer_lm_forward.8} parent=23 // pred_check
        %p238 = pneg %p53
      $region26: #{transformer_lm_forward.8} parent=23 // pred_check_branch
        %240 = sbr.rel (%p238) target = $region28
      $region27: #{transformer_lm_forward.8} parent=23 // pred_region
        %p241 = scmp.lt.s32.totalorder %s19, 1
        %s242 = scalar_select %p241, %s19, 1
        %p243 = scmp.lt.s32.totalorder %s20, 0
        %s244 = scalar_select %p243, %s20, 0
        %s245 = smul.addr %s242, 4
        %s246 = sadd.s32 %s244, %s245
        %s247 = smul.addr %s246, 4
        %s248 = scalar_lea.vmem %s0, %s247
      $region28: #{transformer_lm_forward.8} parent=23 // pred_fallthru
        _
      // Predicated region
      $region29: #{transformer_lm_forward.8} parent=23 // pred_check
        %p249 = pneg %p81
      $region30: #{transformer_lm_forward.8} parent=23 // pred_check_branch
        %251 = sbr.rel (%p249) target = $region32
      $region31: #{transformer_lm_forward.8} parent=23 // pred_region
        %p252 = scmp.lt.s32.totalorder %s19, 1
        %s253 = scalar_select %p252, %s19, 1
        %p254 = scmp.lt.s32.totalorder %s21, 0
        %s255 = scalar_select %p254, %s21, 0
        %s256 = smul.addr %s253, 4
        %s257 = sadd.s32 %s255, %s256
        %s258 = smul.addr %s257, 4
        %s259 = scalar_lea.vmem %s1, %s258
      $region32: #{transformer_lm_forward.8} parent=23 // pred_fallthru
        _
      // Predicated region
      $region33: #{transformer_lm_forward.8} parent=23 // pred_check
        %p260 = pneg %p109
      $region34: #{transformer_lm_forward.8} parent=23 // pred_check_branch
        %262 = sbr.rel (%p260) target = $region36
      $region35: #{transformer_lm_forward.8} parent=23 // pred_region
        %p263 = scmp.lt.s32.totalorder %s19, 1
        %s264 = scalar_select %p263, %s19, 1
        %p265 = scmp.lt.s32.totalorder %s21, 0
        %s266 = scalar_select %p265, %s21, 0
        %s267 = smul.addr %s264, 4
        %s268 = sadd.s32 %s266, %s267
        %s269 = smul.addr %s268, 4
        %s270 = scalar_lea.vmem %s2, %s269
      $region36: #{transformer_lm_forward.8} parent=23 // pred_fallthru
        _
      // Predicated region
      $region37: #{transformer_lm_forward.8} parent=23 // pred_check
        %p271 = pneg %p137
      $region38: #{transformer_lm_forward.8} parent=23 // pred_check_branch
        %273 = sbr.rel (%p271) target = $region40
      $region39: #{transformer_lm_forward.8} parent=23 // pred_region
        %p274 = scmp.lt.s32.totalorder %s19, 1
        %s275 = scalar_select %p274, %s19, 1
        %p276 = scmp.lt.s32.totalorder %s20, 0
        %s277 = scalar_select %p276, %s20, 0
        %s278 = sadd.s32 %s277, %s275
        %s279 = smul.addr %s278, 4
        %s280 = scalar_lea.vmem %s3, %s279
      $region40: #{transformer_lm_forward.8} parent=23 // pred_fallthru
        _
    $region24: #{transformer_lm_forward.8} parent=5 // pred_fallthru
      _
    %p281 = scmp.le.s32.totalorder 1, %s12
    %p282 = scmp.lt.s32.totalorder %s12, 3
    %p283 = pnand %p281, %p282
    %p284 = pneg %p283
    // Predicated region
    $region41: #{transformer_lm_forward.8} parent=5 // pred_check
      _
    $region42: #{transformer_lm_forward.8} parent=5 // pred_check_branch
      %286 = sbr.rel (%p283) target = $region44
    $region43: #{transformer_lm_forward.8} parent=5 // pred_region
      %s287 = ssub.s32 %s12, 1
      %p288 = scmp.lt.s32.totalorder %s22, 1
      %s289 = scalar_select %p288, %s22, 1
      %p290 = scmp.lt.s32.totalorder %s23, 0
      %s291 = scalar_select %p290, %s23, 0
      %s292 = smul.addr %s289, 4
      %s293 = sadd.s32 %s291, %s292
      %s294 = smul.addr %s293, 4
      %s295 = scalar_lea.vmem %s0, %s294
      %p296 = pneg %p59
      %p297 = pneg %p56
      %p298 = scmp.lt.s32.totalorder %s22, 1
      %s299 = scalar_select %p298, %s22, 1
      %p300 = scmp.lt.s32.totalorder %s24, 0
      %s301 = scalar_select %p300, %s24, 0
      %s302 = smul.addr %s299, 4
      %s303 = sadd.s32 %s301, %s302
      %s304 = smul.addr %s303, 4
      %s305 = scalar_lea.vmem %s1, %s304
      %p306 = pneg %p87
      %p307 = pneg %p84
      %p308 = scmp.lt.s32.totalorder %s22, 1
      %s309 = scalar_select %p308, %s22, 1
      %p310 = scmp.lt.s32.totalorder %s24, 0
      %s311 = scalar_select %p310, %s24, 0
      %s312 = smul.addr %s309, 4
      %s313 = sadd.s32 %s311, %s312
      %s314 = smul.addr %s313, 4
      %s315 = scalar_lea.vmem %s2, %s314
      %p316 = pneg %p115
      %p317 = pneg %p112
      %p318 = scmp.lt.s32.totalorder %s22, 1
      %s319 = scalar_select %p318, %s22, 1
      %p320 = scmp.lt.s32.totalorder %s23, 0
      %s321 = scalar_select %p320, %s23, 0
      %s322 = sadd.s32 %s321, %s319
      %s323 = smul.addr %s322, 4
      %s324 = scalar_lea.vmem %s3, %s323
      %p325 = pneg %p143
      %p326 = pneg %p140
      %p327 = pneg %p164
      %p328 = pneg %p161
      %p329 = pneg %p185
      %p330 = pneg %p182
      %p331 = pneg %p213
      %p332 = pneg %p210
      %p333 = scmp.lt.s32.totalorder %s22, 1
      %s334 = scalar_select %p333, %s22, 1
      %p335 = scmp.lt.s32.totalorder %s23, 0
      %s336 = scalar_select %p335, %s23, 0
      %s337 = sadd.s32 %s336, %s334
      %s338 = smul.addr %s337, 4
      %s339 = scalar_lea.vmem %s6, %s338
      %p340 = scmp.lt.s32.totalorder %s22, 1
      %s341 = scalar_select %p340, %s22, 1
      %p342 = scmp.lt.s32.totalorder %s23, 0
      %s343 = scalar_select %p342, %s23, 0
      %s344 = smul.addr %s341, 4
      %s345 = sadd.s32 %s343, %s344
      %s346 = smul.addr %s345, 4
      %s347 = scalar_lea.vmem %s0, %s346
      %p348 = scmp.lt.s32.totalorder %s22, 1
      %s349 = scalar_select %p348, %s22, 1
      %p350 = scmp.lt.s32.totalorder %s24, 0
      %s351 = scalar_select %p350, %s24, 0
      %s352 = smul.addr %s349, 4
      %s353 = sadd.s32 %s351, %s352
      %s354 = smul.addr %s353, 4
      %s355 = scalar_lea.vmem %s1, %s354
      %p356 = scmp.lt.s32.totalorder %s22, 1
      %s357 = scalar_select %p356, %s22, 1
      %p358 = scmp.lt.s32.totalorder %s24, 0
      %s359 = scalar_select %p358, %s24, 0
      %s360 = smul.addr %s357, 4
      %s361 = sadd.s32 %s359, %s360
      %s362 = smul.addr %s361, 4
      %s363 = scalar_lea.vmem %s2, %s362
      %p364 = scmp.lt.s32.totalorder %s22, 1
      %s365 = scalar_select %p364, %s22, 1
      %p366 = scmp.lt.s32.totalorder %s23, 0
      %s367 = scalar_select %p366, %s23, 0
      %s368 = sadd.s32 %s367, %s365
      %s369 = smul.addr %s368, 4
      %s370 = scalar_lea.vmem %s3, %s369
      %p371 = scmp.lt.s32.totalorder %s22, 1
      %s372 = scalar_select %p371, %s22, 1
      %p373 = scmp.lt.s32.totalorder %s23, 0
      %s374 = scalar_select %p373, %s23, 0
      %s375 = sadd.s32 %s374, %s372
      %s376 = smul.addr %s375, 4
      %s377 = scalar_lea.vmem %s6, %s376
      %p379 = scmp.eq.s32.totalorder %s24, 0
      // Predicated region
      $region45: #{transformer_lm_forward.8} parent=43 // pred_check
        %p380 = pneg %p379
      $region46: #{transformer_lm_forward.8} parent=43 // pred_check_branch
        %382 = sbr.rel (%p380) target = $region48
      $region47: #{transformer_lm_forward.8} parent=43 // pred_region
        %vm383 = vcmask 7168
        %384 = vst.msk [vmem:[#allocation2] sm:$0xff] %vm383, -inf
        %385 = vst.msk [vmem:[#allocation2 + $0x8] sm:$0xff] %vm383, -inf
        %386 = vst.msk [vmem:[#allocation2 + $0x10] sm:$0xff] %vm383, -inf
        %387 = vst.msk [vmem:[#allocation2 + $0x18] sm:$0xff] %vm383, -inf
        %388 = vst.msk [vmem:[#allocation3] sm:$0xff] %vm383, 0.0
        %389 = vst.msk [vmem:[#allocation3 + $0x8] sm:$0xff] %vm383, 0.0
        %390 = vst.msk [vmem:[#allocation3 + $0x10] sm:$0xff] %vm383, 0.0
        %391 = vst.msk [vmem:[#allocation3 + $0x18] sm:$0xff] %vm383, 0.0
        %vm392 = vcmask 64512
        %393 = vst.msk [vmem:[#allocation4] sm:$0xff] %vm392, 0.0
        %394 = vst.msk [vmem:[#allocation4 + $0x8] sm:$0xff] %vm392, 0.0
        %395 = vst.msk [vmem:[#allocation4 + $0x10] sm:$0xff] %vm392, 0.0
        %396 = vst.msk [vmem:[#allocation4 + $0x18] sm:$0xff] %vm392, 0.0
      $region48: #{transformer_lm_forward.8} parent=43 // pred_fallthru
        _
      %v397 = vld [vmem:[%s347] sm:$0xf]
      %v398 = vld [vmem:[%s347 + $0x4] sm:$0xf]
      %v399 = vld [vmem:[%s347 + $0x8] sm:$0xf]
      %v400 = vld [vmem:[%s347 + $0xc] sm:$0xf]
      %v401 = vld [vmem:[%s355] sm:$0xf]
      %v402 = vld [vmem:[%s355 + $0x4] sm:$0xf]
      %v403 = vld [vmem:[%s355 + $0x8] sm:$0xf]
      %v404 = vld [vmem:[%s355 + $0xc] sm:$0xf]
      %v405 = vld [vmem:[%s363] sm:$0xf]
      %v406 = vld [vmem:[%s363 + $0x4] sm:$0xf]
      %v407 = vld [vmem:[%s363 + $0x8] sm:$0xf]
      %v408 = vld [vmem:[%s363 + $0xc] sm:$0xf]
      %vm409 = vcmask 64512
      %v411 = vsel %vm409, %v397, 0
      %v414 = vsel %vm409, %v401, 0
      %416 = vmatprep.subr.bf16.mxu0 0
      %417 = vmatpush1.bf16.xpose.msra.mxu0 0
      %418 = vmatprep.subr.bf16.mxu0 0
      %419 = vmatpush1.bf16.xpose.msra.mxu0 0
      %420 = vmatprep.subr.bf16.mxu0 0
      %421 = vmatpush1.bf16.xpose.msra.mxu0 0
      %422 = vmatprep.subr.bf16.mxu0 0
      %423 = vmatpush1.bf16.xpose.msra.mxu0 0
      %424 = vmatprep.subr.bf16.mxu0 0
      %425 = vmatpush1.bf16.xpose.msra.mxu0 0
      %426 = vmatprep.subr.bf16.mxu0 0
      %427 = vmatpush1.bf16.xpose.msra.mxu0 0
      %428 = vmatprep.subr.bf16.mxu0 0
      %429 = vmatpush1.bf16.xpose.msra.mxu0 0
      %430 = vmatprep.subr.bf16.mxu0 0
      %431 = vmatpush1.bf16.xpose.msra.mxu0 %v414
      %432 = vmatprep.subr.bf16.mxu0 0
      %433 = vmatpush2.bf16.xpose.msra.mxu0 0
      %434 = vmatprep.subr.bf16.mxu0 0
      %435 = vmatpush2.bf16.xpose.msra.mxu0 0
      %436 = vmatprep.subr.bf16.mxu0 0
      %437 = vmatpush2.bf16.xpose.msra.mxu0 0
      %438 = vmatprep.subr.bf16.mxu0 0
      %439 = vmatpush2.bf16.xpose.msra.mxu0 0
      %440 = vmatprep.subr.bf16.mxu0 0
      %441 = vmatpush2.bf16.xpose.msra.mxu0 0
      %442 = vmatprep.subr.bf16.mxu0 0
      %443 = vmatpush2.bf16.xpose.msra.mxu0 0
      %444 = vmatprep.subr.bf16.mxu0 0
      %445 = vmatpush2.bf16.xpose.msra.mxu0 0
      %446 = vmatprep.subr.bf16.mxu0 0
      %447 = vmatpush2.bf16.xpose.msra.mxu0 0
      %448 = vmatprep.mubr.bf16.mxu0 0
      %449 = vmatmul.mubr.bf16.gmra.mxu0 %v411
      %v450 = vpop.f32.mrf.mxu0
      %v451 = vadd.f32 0.0, %v450
      %v452 = vpop.f32.mrf.mxu0
      %v453 = vpop.f32.mrf.mxu0
      %v454 = vpop.f32.mrf.mxu0
      %455 = vdwg.mxu0
      %v457 = vsel %vm409, %v398, 0
      %v460 = vsel %vm409, %v402, 0
      %462 = vmatprep.subr.bf16.mxu0 0
      %463 = vmatpush1.bf16.xpose.msra.mxu0 0
      %464 = vmatprep.subr.bf16.mxu0 0
      %465 = vmatpush1.bf16.xpose.msra.mxu0 0
      %466 = vmatprep.subr.bf16.mxu0 0
      %467 = vmatpush1.bf16.xpose.msra.mxu0 0
      %468 = vmatprep.subr.bf16.mxu0 0
      %469 = vmatpush1.bf16.xpose.msra.mxu0 0
      %470 = vmatprep.subr.bf16.mxu0 0
      %471 = vmatpush1.bf16.xpose.msra.mxu0 0
      %472 = vmatprep.subr.bf16.mxu0 0
      %473 = vmatpush1.bf16.xpose.msra.mxu0 0
      %474 = vmatprep.subr.bf16.mxu0 0
      %475 = vmatpush1.bf16.xpose.msra.mxu0 0
      %476 = vmatprep.subr.bf16.mxu0 0
      %477 = vmatpush1.bf16.xpose.msra.mxu0 %v460
      %478 = vmatprep.subr.bf16.mxu0 0
      %479 = vmatpush2.bf16.xpose.msra.mxu0 0
      %480 = vmatprep.subr.bf16.mxu0 0
      %481 = vmatpush2.bf16.xpose.msra.mxu0 0
      %482 = vmatprep.subr.bf16.mxu0 0
      %483 = vmatpush2.bf16.xpose.msra.mxu0 0
      %484 = vmatprep.subr.bf16.mxu0 0
      %485 = vmatpush2.bf16.xpose.msra.mxu0 0
      %486 = vmatprep.subr.bf16.mxu0 0
      %487 = vmatpush2.bf16.xpose.msra.mxu0 0
      %488 = vmatprep.subr.bf16.mxu0 0
      %489 = vmatpush2.bf16.xpose.msra.mxu0 0
      %490 = vmatprep.subr.bf16.mxu0 0
      %491 = vmatpush2.bf16.xpose.msra.mxu0 0
      %492 = vmatprep.subr.bf16.mxu0 0
      %493 = vmatpush2.bf16.xpose.msra.mxu0 0
      %494 = vmatprep.mubr.bf16.mxu0 0
      %495 = vmatmul.mubr.bf16.gmra.mxu0 %v457
      %v496 = vpop.f32.mrf.mxu0
      %v497 = vadd.f32 0.0, %v496
      %v498 = vpop.f32.mrf.mxu0
      %v499 = vpop.f32.mrf.mxu0
      %v500 = vpop.f32.mrf.mxu0
      %501 = vdwg.mxu0
      %v503 = vsel %vm409, %v399, 0
      %v506 = vsel %vm409, %v403, 0
      %508 = vmatprep.subr.bf16.mxu0 0
      %509 = vmatpush1.bf16.xpose.msra.mxu0 0
      %510 = vmatprep.subr.bf16.mxu0 0
      %511 = vmatpush1.bf16.xpose.msra.mxu0 0
      %512 = vmatprep.subr.bf16.mxu0 0
      %513 = vmatpush1.bf16.xpose.msra.mxu0 0
      %514 = vmatprep.subr.bf16.mxu0 0
      %515 = vmatpush1.bf16.xpose.msra.mxu0 0
      %516 = vmatprep.subr.bf16.mxu0 0
      %517 = vmatpush1.bf16.xpose.msra.mxu0 0
      %518 = vmatprep.subr.bf16.mxu0 0
      %519 = vmatpush1.bf16.xpose.msra.mxu0 0
      %520 = vmatprep.subr.bf16.mxu0 0
      %521 = vmatpush1.bf16.xpose.msra.mxu0 0
      %522 = vmatprep.subr.bf16.mxu0 0
      %523 = vmatpush1.bf16.xpose.msra.mxu0 %v506
      %524 = vmatprep.subr.bf16.mxu0 0
      %525 = vmatpush2.bf16.xpose.msra.mxu0 0
      %526 = vmatprep.subr.bf16.mxu0 0
      %527 = vmatpush2.bf16.xpose.msra.mxu0 0
      %528 = vmatprep.subr.bf16.mxu0 0
      %529 = vmatpush2.bf16.xpose.msra.mxu0 0
      %530 = vmatprep.subr.bf16.mxu0 0
      %531 = vmatpush2.bf16.xpose.msra.mxu0 0
      %532 = vmatprep.subr.bf16.mxu0 0
      %533 = vmatpush2.bf16.xpose.msra.mxu0 0
      %534 = vmatprep.subr.bf16.mxu0 0
      %535 = vmatpush2.bf16.xpose.msra.mxu0 0
      %536 = vmatprep.subr.bf16.mxu0 0
      %537 = vmatpush2.bf16.xpose.msra.mxu0 0
      %538 = vmatprep.subr.bf16.mxu0 0
      %539 = vmatpush2.bf16.xpose.msra.mxu0 0
      %540 = vmatprep.mubr.bf16.mxu0 0
      %541 = vmatmul.mubr.bf16.gmra.mxu0 %v503
      %v542 = vpop.f32.mrf.mxu0
      %v543 = vadd.f32 0.0, %v542
      %v544 = vpop.f32.mrf.mxu0
      %v545 = vpop.f32.mrf.mxu0
      %v546 = vpop.f32.mrf.mxu0
      %547 = vdwg.mxu0
      %v549 = vsel %vm409, %v400, 0
      %v552 = vsel %vm409, %v404, 0
      %554 = vmatprep.subr.bf16.mxu0 0
      %555 = vmatpush1.bf16.xpose.msra.mxu0 0
      %556 = vmatprep.subr.bf16.mxu0 0
      %557 = vmatpush1.bf16.xpose.msra.mxu0 0
      %558 = vmatprep.subr.bf16.mxu0 0
      %559 = vmatpush1.bf16.xpose.msra.mxu0 0
      %560 = vmatprep.subr.bf16.mxu0 0
      %561 = vmatpush1.bf16.xpose.msra.mxu0 0
      %562 = vmatprep.subr.bf16.mxu0 0
      %563 = vmatpush1.bf16.xpose.msra.mxu0 0
      %564 = vmatprep.subr.bf16.mxu0 0
      %565 = vmatpush1.bf16.xpose.msra.mxu0 0
      %566 = vmatprep.subr.bf16.mxu0 0
      %567 = vmatpush1.bf16.xpose.msra.mxu0 0
      %568 = vmatprep.subr.bf16.mxu0 0
      %569 = vmatpush1.bf16.xpose.msra.mxu0 %v552
      %570 = vmatprep.subr.bf16.mxu0 0
      %571 = vmatpush2.bf16.xpose.msra.mxu0 0
      %572 = vmatprep.subr.bf16.mxu0 0
      %573 = vmatpush2.bf16.xpose.msra.mxu0 0
      %574 = vmatprep.subr.bf16.mxu0 0
      %575 = vmatpush2.bf16.xpose.msra.mxu0 0
      %576 = vmatprep.subr.bf16.mxu0 0
      %577 = vmatpush2.bf16.xpose.msra.mxu0 0
      %578 = vmatprep.subr.bf16.mxu0 0
      %579 = vmatpush2.bf16.xpose.msra.mxu0 0
      %580 = vmatprep.subr.bf16.mxu0 0
      %581 = vmatpush2.bf16.xpose.msra.mxu0 0
      %582 = vmatprep.subr.bf16.mxu0 0
      %583 = vmatpush2.bf16.xpose.msra.mxu0 0
      %584 = vmatprep.subr.bf16.mxu0 0
      %585 = vmatpush2.bf16.xpose.msra.mxu0 0
      %586 = vmatprep.mubr.bf16.mxu0 0
      %587 = vmatmul.mubr.bf16.gmra.mxu0 %v549
      %v588 = vpop.f32.mrf.mxu0
      %v589 = vadd.f32 0.0, %v588
      %v590 = vpop.f32.mrf.mxu0
      %v591 = vpop.f32.mrf.mxu0
      %v592 = vpop.f32.mrf.mxu0
      %593 = vdwg.mxu0
      %v594 = vld [vmem:[#allocation2] sm:$0xff]
      %v595 = vld [vmem:[#allocation2 + $0x8] sm:$0xff]
      %v596 = vld [vmem:[#allocation2 + $0x10] sm:$0xff]
      %v597 = vld [vmem:[#allocation2 + $0x18] sm:$0xff]
      %v598 = vsel %vm409, %v451, -inf
      %599 = vmax.xlane.f32.xlu0 %v598
      %v600 = vpop.xlane.xlu0 %599
      %v601 = vsel %vm409, %v497, -inf
      %602 = vmax.xlane.f32.xlu0 %v601
      %v603 = vpop.xlane.xlu0 %602
      %v604 = vsel %vm409, %v543, -inf
      %605 = vmax.xlane.f32.xlu0 %v604
      %v606 = vpop.xlane.xlu0 %605
      %v607 = vsel %vm409, %v589, -inf
      %608 = vmax.xlane.f32.xlu0 %v607
      %v609 = vpop.xlane.xlu0 %608
      %v610 = vmax.f32 %v594, %v600
      %v611 = vmax.f32 %v595, %v603
      %v612 = vmax.f32 %v596, %v606
      %v613 = vmax.f32 %v597, %v609
      %v614 = vsub.f32 %v594, %v610
      %v615 = vsub.f32 %v595, %v611
      %v616 = vsub.f32 %v596, %v612
      %v617 = vsub.f32 %v597, %v613
      %v618 = vmul.f32 %v614, 1.442695
      %v619 = vpow.pop %v618
      %v620 = vmul.f32 %v615, 1.442695
      %v621 = vpow.pop %v620
      %v622 = vmul.f32 %v616, 1.442695
      %v623 = vpow.pop %v622
      %v624 = vmul.f32 %v617, 1.442695
      %v625 = vpow.pop %v624
      %627 = vset.pattern.permute.xlu0 0
      %628 = vperm.xlu0 %627, %v610
      %v629 = vpop.permute.xlu0 %628
      %632 = vset.pattern.permute.xlu0 0
      %633 = vperm.xlu0 %632, %v611
      %v634 = vpop.permute.xlu0 %633
      %637 = vset.pattern.permute.xlu0 0
      %638 = vperm.xlu0 %637, %v612
      %v639 = vpop.permute.xlu0 %638
      %642 = vset.pattern.permute.xlu0 0
      %643 = vperm.xlu0 %642, %v613
      %v644 = vpop.permute.xlu0 %643
      %v646 = vsub.f32 %v451, %v629
      %v647 = vsub.f32 %v497, %v634
      %v648 = vsub.f32 %v543, %v639
      %v649 = vsub.f32 %v589, %v644
      %v650 = vmul.f32 %v646, 1.442695
      %v651 = vpow.pop %v650
      %v652 = vmul.f32 %v647, 1.442695
      %v653 = vpow.pop %v652
      %v654 = vmul.f32 %v648, 1.442695
      %v655 = vpow.pop %v654
      %v656 = vmul.f32 %v649, 1.442695
      %v657 = vpow.pop %v656
      %v658 = vld [vmem:[#allocation3] sm:$0xff]
      %v659 = vld [vmem:[#allocation3 + $0x8] sm:$0xff]
      %v660 = vld [vmem:[#allocation3 + $0x10] sm:$0xff]
      %v661 = vld [vmem:[#allocation3 + $0x18] sm:$0xff]
      %v662 = vmul.f32 %v619, %v658
      %v663 = vmul.f32 %v621, %v659
      %v664 = vmul.f32 %v623, %v660
      %v665 = vmul.f32 %v625, %v661
      %v666 = vsel %vm409, %v651, 0.0
      %667 = vadd.xlane.f32.xlu0 %v666
      %v668 = vpop.xlane.xlu0 %667
      %v669 = vsel %vm409, %v653, 0.0
      %670 = vadd.xlane.f32.xlu0 %v669
      %v671 = vpop.xlane.xlu0 %670
      %v672 = vsel %vm409, %v655, 0.0
      %673 = vadd.xlane.f32.xlu0 %v672
      %v674 = vpop.xlane.xlu0 %673
      %v675 = vsel %vm409, %v657, 0.0
      %676 = vadd.xlane.f32.xlu0 %v675
      %v677 = vpop.xlane.xlu0 %676
      %v678 = vadd.f32 %v662, %v668
      %v679 = vadd.f32 %v663, %v671
      %v680 = vadd.f32 %v664, %v674
      %v681 = vadd.f32 %v665, %v677
      %vm682 = vcmask 7168
      %683 = vst.msk [vmem:[#allocation3] sm:$0xff] %vm682, %v678
      %684 = vst.msk [vmem:[#allocation3 + $0x8] sm:$0xff] %vm682, %v679
      %685 = vst.msk [vmem:[#allocation3 + $0x10] sm:$0xff] %vm682, %v680
      %686 = vst.msk [vmem:[#allocation3 + $0x18] sm:$0xff] %vm682, %v681
      %v687 = vld [vmem:[#allocation4] sm:$0xff]
      %v688 = vld [vmem:[#allocation4 + $0x8] sm:$0xff]
      %v689 = vld [vmem:[#allocation4 + $0x10] sm:$0xff]
      %v690 = vld [vmem:[#allocation4 + $0x18] sm:$0xff]
      %692 = vset.pattern.permute.xlu0 0
      %693 = vperm.xlu0 %692, %v619
      %v694 = vpop.permute.xlu0 %693
      %697 = vset.pattern.permute.xlu0 0
      %698 = vperm.xlu0 %697, %v621
      %v699 = vpop.permute.xlu0 %698
      %702 = vset.pattern.permute.xlu0 0
      %703 = vperm.xlu0 %702, %v623
      %v704 = vpop.permute.xlu0 %703
      %707 = vset.pattern.permute.xlu0 0
      %708 = vperm.xlu0 %707, %v625
      %v709 = vpop.permute.xlu0 %708
      %v711 = vmul.f32 %v694, %v687
      %v712 = vmul.f32 %v699, %v688
      %v713 = vmul.f32 %v704, %v689
      %v714 = vmul.f32 %v709, %v690
      %v715 = vpack.c.bf16 %v651, %v651
      %v716 = vpack.c.bf16 %v653, %v653
      %v717 = vpack.c.bf16 %v655, %v655
      %v718 = vpack.c.bf16 %v657, %v657
      %v720 = vsel %vm409, %v715, 0
      %vm722 = vcmask 1043456
      %v724 = vsel %vm722, %v405, 0
      %726 = vmatprep.subr.bf16.mxu0 0
      %727 = vmatpush1.bf16.msra.mxu0 0
      %728 = vmatprep.subr.bf16.mxu0 0
      %729 = vmatpush1.bf16.msra.mxu0 0
      %730 = vmatprep.subr.bf16.mxu0 0
      %731 = vmatpush1.bf16.msra.mxu0 0
      %732 = vmatprep.subr.bf16.mxu0 0
      %733 = vmatpush1.bf16.msra.mxu0 0
      %734 = vmatprep.subr.bf16.mxu0 0
      %735 = vmatpush1.bf16.msra.mxu0 0
      %736 = vmatprep.subr.bf16.mxu0 0
      %737 = vmatpush1.bf16.msra.mxu0 0
      %738 = vmatprep.subr.bf16.mxu0 0
      %739 = vmatpush1.bf16.msra.mxu0 0
      %740 = vmatprep.subr.bf16.mxu0 0
      %741 = vmatpush1.bf16.msra.mxu0 %v724
      %742 = vmatprep.subr.bf16.mxu0 0
      %743 = vmatpush2.bf16.msra.mxu0 0
      %744 = vmatprep.subr.bf16.mxu0 0
      %745 = vmatpush2.bf16.msra.mxu0 0
      %746 = vmatprep.subr.bf16.mxu0 0
      %747 = vmatpush2.bf16.msra.mxu0 0
      %748 = vmatprep.subr.bf16.mxu0 0
      %749 = vmatpush2.bf16.msra.mxu0 0
      %750 = vmatprep.subr.bf16.mxu0 0
      %751 = vmatpush2.bf16.msra.mxu0 0
      %752 = vmatprep.subr.bf16.mxu0 0
      %753 = vmatpush2.bf16.msra.mxu0 0
      %754 = vmatprep.subr.bf16.mxu0 0
      %755 = vmatpush2.bf16.msra.mxu0 0
      %756 = vmatprep.subr.bf16.mxu0 0
      %757 = vmatpush2.bf16.msra.mxu0 0
      %758 = vmatprep.mubr.bf16.mxu0 0
      %759 = vmatmul.mubr.bf16.gmra.mxu0 %v720
      %v760 = vpop.f32.mrf.mxu0
      %v761 = vadd.f32 0.0, %v760
      %v762 = vpop.f32.mrf.mxu0
      %v763 = vpop.f32.mrf.mxu0
      %v764 = vpop.f32.mrf.mxu0
      %765 = vdwg.mxu0
      %v767 = vsel %vm409, %v716, 0
      %v770 = vsel %vm722, %v406, 0
      %772 = vmatprep.subr.bf16.mxu0 0
      %773 = vmatpush1.bf16.msra.mxu0 0
      %774 = vmatprep.subr.bf16.mxu0 0
      %775 = vmatpush1.bf16.msra.mxu0 0
      %776 = vmatprep.subr.bf16.mxu0 0
      %777 = vmatpush1.bf16.msra.mxu0 0
      %778 = vmatprep.subr.bf16.mxu0 0
      %779 = vmatpush1.bf16.msra.mxu0 0
      %780 = vmatprep.subr.bf16.mxu0 0
      %781 = vmatpush1.bf16.msra.mxu0 0
      %782 = vmatprep.subr.bf16.mxu0 0
      %783 = vmatpush1.bf16.msra.mxu0 0
      %784 = vmatprep.subr.bf16.mxu0 0
      %785 = vmatpush1.bf16.msra.mxu0 0
      %786 = vmatprep.subr.bf16.mxu0 0
      %787 = vmatpush1.bf16.msra.mxu0 %v770
      %788 = vmatprep.subr.bf16.mxu0 0
      %789 = vmatpush2.bf16.msra.mxu0 0
      %790 = vmatprep.subr.bf16.mxu0 0
      %791 = vmatpush2.bf16.msra.mxu0 0
      %792 = vmatprep.subr.bf16.mxu0 0
      %793 = vmatpush2.bf16.msra.mxu0 0
      %794 = vmatprep.subr.bf16.mxu0 0
      %795 = vmatpush2.bf16.msra.mxu0 0
      %796 = vmatprep.subr.bf16.mxu0 0
      %797 = vmatpush2.bf16.msra.mxu0 0
      %798 = vmatprep.subr.bf16.mxu0 0
      %799 = vmatpush2.bf16.msra.mxu0 0
      %800 = vmatprep.subr.bf16.mxu0 0
      %801 = vmatpush2.bf16.msra.mxu0 0
      %802 = vmatprep.subr.bf16.mxu0 0
      %803 = vmatpush2.bf16.msra.mxu0 0
      %804 = vmatprep.mubr.bf16.mxu0 0
      %805 = vmatmul.mubr.bf16.gmra.mxu0 %v767
      %v806 = vpop.f32.mrf.mxu0
      %v807 = vadd.f32 0.0, %v806
      %v808 = vpop.f32.mrf.mxu0
      %v809 = vpop.f32.mrf.mxu0
      %v810 = vpop.f32.mrf.mxu0
      %811 = vdwg.mxu0
      %v813 = vsel %vm409, %v717, 0
      %v816 = vsel %vm722, %v407, 0
      %818 = vmatprep.subr.bf16.mxu0 0
      %819 = vmatpush1.bf16.msra.mxu0 0
      %820 = vmatprep.subr.bf16.mxu0 0
      %821 = vmatpush1.bf16.msra.mxu0 0
      %822 = vmatprep.subr.bf16.mxu0 0
      %823 = vmatpush1.bf16.msra.mxu0 0
      %824 = vmatprep.subr.bf16.mxu0 0
      %825 = vmatpush1.bf16.msra.mxu0 0
      %826 = vmatprep.subr.bf16.mxu0 0
      %827 = vmatpush1.bf16.msra.mxu0 0
      %828 = vmatprep.subr.bf16.mxu0 0
      %829 = vmatpush1.bf16.msra.mxu0 0
      %830 = vmatprep.subr.bf16.mxu0 0
      %831 = vmatpush1.bf16.msra.mxu0 0
      %832 = vmatprep.subr.bf16.mxu0 0
      %833 = vmatpush1.bf16.msra.mxu0 %v816
      %834 = vmatprep.subr.bf16.mxu0 0
      %835 = vmatpush2.bf16.msra.mxu0 0
      %836 = vmatprep.subr.bf16.mxu0 0
      %837 = vmatpush2.bf16.msra.mxu0 0
      %838 = vmatprep.subr.bf16.mxu0 0
      %839 = vmatpush2.bf16.msra.mxu0 0
      %840 = vmatprep.subr.bf16.mxu0 0
      %841 = vmatpush2.bf16.msra.mxu0 0
      %842 = vmatprep.subr.bf16.mxu0 0
      %843 = vmatpush2.bf16.msra.mxu0 0
      %844 = vmatprep.subr.bf16.mxu0 0
      %845 = vmatpush2.bf16.msra.mxu0 0
      %846 = vmatprep.subr.bf16.mxu0 0
      %847 = vmatpush2.bf16.msra.mxu0 0
      %848 = vmatprep.subr.bf16.mxu0 0
      %849 = vmatpush2.bf16.msra.mxu0 0
      %850 = vmatprep.mubr.bf16.mxu0 0
      %851 = vmatmul.mubr.bf16.gmra.mxu0 %v813
      %v852 = vpop.f32.mrf.mxu0
      %v853 = vadd.f32 0.0, %v852
      %v854 = vpop.f32.mrf.mxu0
      %v855 = vpop.f32.mrf.mxu0
      %v856 = vpop.f32.mrf.mxu0
      %857 = vdwg.mxu0
      %v859 = vsel %vm409, %v718, 0
      %v862 = vsel %vm722, %v408, 0
      %864 = vmatprep.subr.bf16.mxu0 0
      %865 = vmatpush1.bf16.msra.mxu0 0
      %866 = vmatprep.subr.bf16.mxu0 0
      %867 = vmatpush1.bf16.msra.mxu0 0
      %868 = vmatprep.subr.bf16.mxu0 0
      %869 = vmatpush1.bf16.msra.mxu0 0
      %870 = vmatprep.subr.bf16.mxu0 0
      %871 = vmatpush1.bf16.msra.mxu0 0
      %872 = vmatprep.subr.bf16.mxu0 0
      %873 = vmatpush1.bf16.msra.mxu0 0
      %874 = vmatprep.subr.bf16.mxu0 0
      %875 = vmatpush1.bf16.msra.mxu0 0
      %876 = vmatprep.subr.bf16.mxu0 0
      %877 = vmatpush1.bf16.msra.mxu0 0
      %878 = vmatprep.subr.bf16.mxu0 0
      %879 = vmatpush1.bf16.msra.mxu0 %v862
      %880 = vmatprep.subr.bf16.mxu0 0
      %881 = vmatpush2.bf16.msra.mxu0 0
      %882 = vmatprep.subr.bf16.mxu0 0
      %883 = vmatpush2.bf16.msra.mxu0 0
      %884 = vmatprep.subr.bf16.mxu0 0
      %885 = vmatpush2.bf16.msra.mxu0 0
      %886 = vmatprep.subr.bf16.mxu0 0
      %887 = vmatpush2.bf16.msra.mxu0 0
      %888 = vmatprep.subr.bf16.mxu0 0
      %889 = vmatpush2.bf16.msra.mxu0 0
      %890 = vmatprep.subr.bf16.mxu0 0
      %891 = vmatpush2.bf16.msra.mxu0 0
      %892 = vmatprep.subr.bf16.mxu0 0
      %893 = vmatpush2.bf16.msra.mxu0 0
      %894 = vmatprep.subr.bf16.mxu0 0
      %895 = vmatpush2.bf16.msra.mxu0 0
      %896 = vmatprep.mubr.bf16.mxu0 0
      %897 = vmatmul.mubr.bf16.gmra.mxu0 %v859
      %v898 = vpop.f32.mrf.mxu0
      %v899 = vadd.f32 0.0, %v898
      %v900 = vpop.f32.mrf.mxu0
      %v901 = vpop.f32.mrf.mxu0
      %v902 = vpop.f32.mrf.mxu0
      %903 = vdwg.mxu0
      %v904 = vadd.f32 %v711, %v761
      %v905 = vadd.f32 %v712, %v807
      %v906 = vadd.f32 %v713, %v853
      %v907 = vadd.f32 %v714, %v899
      %908 = vst.msk [vmem:[#allocation4] sm:$0xff] %vm409, %v904
      %909 = vst.msk [vmem:[#allocation4 + $0x8] sm:$0xff] %vm409, %v905
      %910 = vst.msk [vmem:[#allocation4 + $0x10] sm:$0xff] %vm409, %v906
      %911 = vst.msk [vmem:[#allocation4 + $0x18] sm:$0xff] %vm409, %v907
      %912 = vst.msk [vmem:[#allocation2] sm:$0xff] %vm682, %v610
      %913 = vst.msk [vmem:[#allocation2 + $0x8] sm:$0xff] %vm682, %v611
      %914 = vst.msk [vmem:[#allocation2 + $0x10] sm:$0xff] %vm682, %v612
      %915 = vst.msk [vmem:[#allocation2 + $0x18] sm:$0xff] %vm682, %v613
      // Predicated region
      $region49: #{transformer_lm_forward.8} parent=43 // pred_check
        %p916 = pneg %p379
      $region50: #{transformer_lm_forward.8} parent=43 // pred_check_branch
        %918 = sbr.rel (%p916) target = $region52
      $region51: #{transformer_lm_forward.8} parent=43 // pred_region
        %v919 = vld [vmem:[#allocation4] sm:$0xff]
        %v920 = vld [vmem:[#allocation4 + $0x8] sm:$0xff]
        %v921 = vld [vmem:[#allocation4 + $0x10] sm:$0xff]
        %v922 = vld [vmem:[#allocation4 + $0x18] sm:$0xff]
        %v923 = vld [vmem:[#allocation3] sm:$0xff]
        %v924 = vld [vmem:[#allocation3 + $0x8] sm:$0xff]
        %v925 = vld [vmem:[#allocation3 + $0x10] sm:$0xff]
        %v926 = vld [vmem:[#allocation3 + $0x18] sm:$0xff]
        %v927 = vrcp.pop %v923
        %v928 = vrcp.pop %v924
        %v929 = vrcp.pop %v925
        %v930 = vrcp.pop %v926
        %932 = vset.pattern.permute.xlu0 0
        %933 = vperm.xlu0 %932, %v927
        %v934 = vpop.permute.xlu0 %933
        %937 = vset.pattern.permute.xlu0 0
        %938 = vperm.xlu0 %937, %v928
        %v939 = vpop.permute.xlu0 %938
        %942 = vset.pattern.permute.xlu0 0
        %943 = vperm.xlu0 %942, %v929
        %v944 = vpop.permute.xlu0 %943
        %947 = vset.pattern.permute.xlu0 0
        %948 = vperm.xlu0 %947, %v930
        %v949 = vpop.permute.xlu0 %948
        %v951 = vmul.f32 %v919, %v934
        %v952 = vmul.f32 %v920, %v939
        %v953 = vmul.f32 %v921, %v944
        %v954 = vmul.f32 %v922, %v949
        %v955 = vpack.c.bf16 %v951, %v951
        %v956 = vpack.c.bf16 %v952, %v952
        %v957 = vpack.c.bf16 %v953, %v953
        %v958 = vpack.c.bf16 %v954, %v954
        %v959 = vld [vmem:[%s4] sm:$0xf]
        %v960 = vld [vmem:[%s4 + $0x4] sm:$0xf]
        %v961 = vld [vmem:[%s4 + $0x8] sm:$0xf]
        %v962 = vld [vmem:[%s4 + $0xc] sm:$0xf]
        %v964 = vsel %vm409, %v955, 0
        %v967 = vsel %vm722, %v959, 0
        %969 = vmatprep.subr.bf16.mxu0 0
        %970 = vmatpush1.bf16.msra.mxu0 0
        %971 = vmatprep.subr.bf16.mxu0 0
        %972 = vmatpush1.bf16.msra.mxu0 0
        %973 = vmatprep.subr.bf16.mxu0 0
        %974 = vmatpush1.bf16.msra.mxu0 0
        %975 = vmatprep.subr.bf16.mxu0 0
        %976 = vmatpush1.bf16.msra.mxu0 0
        %977 = vmatprep.subr.bf16.mxu0 0
        %978 = vmatpush1.bf16.msra.mxu0 0
        %979 = vmatprep.subr.bf16.mxu0 0
        %980 = vmatpush1.bf16.msra.mxu0 0
        %981 = vmatprep.subr.bf16.mxu0 0
        %982 = vmatpush1.bf16.msra.mxu0 0
        %983 = vmatprep.subr.bf16.mxu0 0
        %984 = vmatpush1.bf16.msra.mxu0 %v967
        %985 = vmatprep.subr.bf16.mxu0 0
        %986 = vmatpush2.bf16.msra.mxu0 0
        %987 = vmatprep.subr.bf16.mxu0 0
        %988 = vmatpush2.bf16.msra.mxu0 0
        %989 = vmatprep.subr.bf16.mxu0 0
        %990 = vmatpush2.bf16.msra.mxu0 0
        %991 = vmatprep.subr.bf16.mxu0 0
        %992 = vmatpush2.bf16.msra.mxu0 0
        %993 = vmatprep.subr.bf16.mxu0 0
        %994 = vmatpush2.bf16.msra.mxu0 0
        %995 = vmatprep.subr.bf16.mxu0 0
        %996 = vmatpush2.bf16.msra.mxu0 0
        %997 = vmatprep.subr.bf16.mxu0 0
        %998 = vmatpush2.bf16.msra.mxu0 0
        %999 = vmatprep.subr.bf16.mxu0 0
        %1000 = vmatpush2.bf16.msra.mxu0 0
        %1001 = vmatprep.mubr.bf16.mxu0 0
        %1002 = vmatmul.mubr.bf16.gmra.mxu0 %v964
        %v1003 = vpop.f32.mrf.mxu0
        %v1004 = vadd.f32 0.0, %v1003
        %v1005 = vpop.f32.mrf.mxu0
        %v1006 = vpop.f32.mrf.mxu0
        %v1007 = vpop.f32.mrf.mxu0
        %1008 = vdwg.mxu0
        %v1010 = vsel %vm409, %v956, 0
        %v1013 = vsel %vm722, %v960, 0
        %1015 = vmatprep.subr.bf16.mxu0 0
        %1016 = vmatpush1.bf16.msra.mxu0 0
        %1017 = vmatprep.subr.bf16.mxu0 0
        %1018 = vmatpush1.bf16.msra.mxu0 0
        %1019 = vmatprep.subr.bf16.mxu0 0
        %1020 = vmatpush1.bf16.msra.mxu0 0
        %1021 = vmatprep.subr.bf16.mxu0 0
        %1022 = vmatpush1.bf16.msra.mxu0 0
        %1023 = vmatprep.subr.bf16.mxu0 0
        %1024 = vmatpush1.bf16.msra.mxu0 0
        %1025 = vmatprep.subr.bf16.mxu0 0
        %1026 = vmatpush1.bf16.msra.mxu0 0
        %1027 = vmatprep.subr.bf16.mxu0 0
        %1028 = vmatpush1.bf16.msra.mxu0 0
        %1029 = vmatprep.subr.bf16.mxu0 0
        %1030 = vmatpush1.bf16.msra.mxu0 %v1013
        %1031 = vmatprep.subr.bf16.mxu0 0
        %1032 = vmatpush2.bf16.msra.mxu0 0
        %1033 = vmatprep.subr.bf16.mxu0 0
        %1034 = vmatpush2.bf16.msra.mxu0 0
        %1035 = vmatprep.subr.bf16.mxu0 0
        %1036 = vmatpush2.bf16.msra.mxu0 0
        %1037 = vmatprep.subr.bf16.mxu0 0
        %1038 = vmatpush2.bf16.msra.mxu0 0
        %1039 = vmatprep.subr.bf16.mxu0 0
        %1040 = vmatpush2.bf16.msra.mxu0 0
        %1041 = vmatprep.subr.bf16.mxu0 0
        %1042 = vmatpush2.bf16.msra.mxu0 0
        %1043 = vmatprep.subr.bf16.mxu0 0
        %1044 = vmatpush2.bf16.msra.mxu0 0
        %1045 = vmatprep.subr.bf16.mxu0 0
        %1046 = vmatpush2.bf16.msra.mxu0 0
        %1047 = vmatprep.mubr.bf16.mxu0 0
        %1048 = vmatmul.mubr.bf16.gmra.mxu0 %v1010
        %v1049 = vpop.f32.mrf.mxu0
        %v1050 = vadd.f32 0.0, %v1049
        %v1051 = vpop.f32.mrf.mxu0
        %v1052 = vpop.f32.mrf.mxu0
        %v1053 = vpop.f32.mrf.mxu0
        %1054 = vdwg.mxu0
        %v1056 = vsel %vm409, %v957, 0
        %v1059 = vsel %vm722, %v961, 0
        %1061 = vmatprep.subr.bf16.mxu0 0
        %1062 = vmatpush1.bf16.msra.mxu0 0
        %1063 = vmatprep.subr.bf16.mxu0 0
        %1064 = vmatpush1.bf16.msra.mxu0 0
        %1065 = vmatprep.subr.bf16.mxu0 0
        %1066 = vmatpush1.bf16.msra.mxu0 0
        %1067 = vmatprep.subr.bf16.mxu0 0
        %1068 = vmatpush1.bf16.msra.mxu0 0
        %1069 = vmatprep.subr.bf16.mxu0 0
        %1070 = vmatpush1.bf16.msra.mxu0 0
        %1071 = vmatprep.subr.bf16.mxu0 0
        %1072 = vmatpush1.bf16.msra.mxu0 0
        %1073 = vmatprep.subr.bf16.mxu0 0
        %1074 = vmatpush1.bf16.msra.mxu0 0
        %1075 = vmatprep.subr.bf16.mxu0 0
        %1076 = vmatpush1.bf16.msra.mxu0 %v1059
        %1077 = vmatprep.subr.bf16.mxu0 0
        %1078 = vmatpush2.bf16.msra.mxu0 0
        %1079 = vmatprep.subr.bf16.mxu0 0
        %1080 = vmatpush2.bf16.msra.mxu0 0
        %1081 = vmatprep.subr.bf16.mxu0 0
        %1082 = vmatpush2.bf16.msra.mxu0 0
        %1083 = vmatprep.subr.bf16.mxu0 0
        %1084 = vmatpush2.bf16.msra.mxu0 0
        %1085 = vmatprep.subr.bf16.mxu0 0
        %1086 = vmatpush2.bf16.msra.mxu0 0
        %1087 = vmatprep.subr.bf16.mxu0 0
        %1088 = vmatpush2.bf16.msra.mxu0 0
        %1089 = vmatprep.subr.bf16.mxu0 0
        %1090 = vmatpush2.bf16.msra.mxu0 0
        %1091 = vmatprep.subr.bf16.mxu0 0
        %1092 = vmatpush2.bf16.msra.mxu0 0
        %1093 = vmatprep.mubr.bf16.mxu0 0
        %1094 = vmatmul.mubr.bf16.gmra.mxu0 %v1056
        %v1095 = vpop.f32.mrf.mxu0
        %v1096 = vadd.f32 0.0, %v1095
        %v1097 = vpop.f32.mrf.mxu0
        %v1098 = vpop.f32.mrf.mxu0
        %v1099 = vpop.f32.mrf.mxu0
        %1100 = vdwg.mxu0
        %v1102 = vsel %vm409, %v958, 0
        %v1105 = vsel %vm722, %v962, 0
        %1107 = vmatprep.subr.bf16.mxu0 0
        %1108 = vmatpush1.bf16.msra.mxu0 0
        %1109 = vmatprep.subr.bf16.mxu0 0
        %1110 = vmatpush1.bf16.msra.mxu0 0
        %1111 = vmatprep.subr.bf16.mxu0 0
        %1112 = vmatpush1.bf16.msra.mxu0 0
        %1113 = vmatprep.subr.bf16.mxu0 0
        %1114 = vmatpush1.bf16.msra.mxu0 0
        %1115 = vmatprep.subr.bf16.mxu0 0
        %1116 = vmatpush1.bf16.msra.mxu0 0
        %1117 = vmatprep.subr.bf16.mxu0 0
        %1118 = vmatpush1.bf16.msra.mxu0 0
        %1119 = vmatprep.subr.bf16.mxu0 0
        %1120 = vmatpush1.bf16.msra.mxu0 0
        %1121 = vmatprep.subr.bf16.mxu0 0
        %1122 = vmatpush1.bf16.msra.mxu0 %v1105
        %1123 = vmatprep.subr.bf16.mxu0 0
        %1124 = vmatpush2.bf16.msra.mxu0 0
        %1125 = vmatprep.subr.bf16.mxu0 0
        %1126 = vmatpush2.bf16.msra.mxu0 0
        %1127 = vmatprep.subr.bf16.mxu0 0
        %1128 = vmatpush2.bf16.msra.mxu0 0
        %1129 = vmatprep.subr.bf16.mxu0 0
        %1130 = vmatpush2.bf16.msra.mxu0 0
        %1131 = vmatprep.subr.bf16.mxu0 0
        %1132 = vmatpush2.bf16.msra.mxu0 0
        %1133 = vmatprep.subr.bf16.mxu0 0
        %1134 = vmatpush2.bf16.msra.mxu0 0
        %1135 = vmatprep.subr.bf16.mxu0 0
        %1136 = vmatpush2.bf16.msra.mxu0 0
        %1137 = vmatprep.subr.bf16.mxu0 0
        %1138 = vmatpush2.bf16.msra.mxu0 0
        %1139 = vmatprep.mubr.bf16.mxu0 0
        %1140 = vmatmul.mubr.bf16.gmra.mxu0 %v1102
        %v1141 = vpop.f32.mrf.mxu0
        %v1142 = vadd.f32 0.0, %v1141
        %v1143 = vpop.f32.mrf.mxu0
        %v1144 = vpop.f32.mrf.mxu0
        %v1145 = vpop.f32.mrf.mxu0
        %1146 = vdwg.mxu0
        %vm1147 = vcmask 261120
        %v1148 = vsel %vm1147, %v1004, 0.0
        %v1149 = vsel %vm1147, %v1050, 0.0
        %v1150 = vadd.f32 %v1148, %v1149
        %v1151 = vsel %vm1147, %v1096, 0.0
        %v1152 = vadd.f32 %v1150, %v1151
        %v1153 = vsel %vm1147, %v1142, 0.0
        %v1154 = vadd.f32 %v1152, %v1153
        %v1155 = vld [vmem:[%s5] sm:$0x1]
        %v1157 = vlaneseq
        %v1158 = vshrl.u32 %v1157, 7
        %v1159 = vsub.s32 0, %v1158
        %v1160 = vrot.slane %v1155, %v1159
        %v1162 = vadd.f32 %v1154, %v1160
        %v1163 = vld [vmem:[%s370] sm:$0xf]
        %v1164 = vunpack.c.l.bf16 %v1163
        %v1165 = vadd.f32 %v1164, %v1162
        %v1166 = vpack.c.bf16 %v1165, %v1165
        %vm1167 = vcmask 257024
        %1168 = vst.msk [vmem:[%s377] sm:$0xf] %vm1167, %v1166
      $region52: #{transformer_lm_forward.8} parent=43 // pred_fallthru
        _
      %p1169 = scmp.lt.s32.totalorder %s22, 1
      %s1170 = scalar_select %p1169, %s22, 1
      %p1171 = scmp.lt.s32.totalorder %s23, 0
      %s1172 = scalar_select %p1171, %s23, 0
      %s1173 = sadd.s32 %s1172, %s1170
      %s1174 = smul.addr %s1173, 4
      %s1175 = scalar_lea.vmem %s6, %s1174
      // Predicated region
      $region53: #{transformer_lm_forward.8} parent=43 // pred_check
        %p1176 = pneg %p210
      $region54: #{transformer_lm_forward.8} parent=43 // pred_check_branch
        %1178 = sbr.rel (%p1176) target = $region56
      $region55: #{transformer_lm_forward.8} parent=43 // pred_region
        _
      $region56: #{transformer_lm_forward.8} parent=43 // pred_fallthru
        _
    $region44: #{transformer_lm_forward.8} parent=5 // pred_fallthru
      _
    %p1179 = scmp.le.s32.totalorder 2, %s12
    // Predicated region
    $region57: #{transformer_lm_forward.8} parent=5 // pred_check
      %p1180 = pneg %p1179
    $region58: #{transformer_lm_forward.8} parent=5 // pred_check_branch
      %1182 = sbr.rel (%p1180) target = $region60
    $region59: #{transformer_lm_forward.8} parent=5 // pred_region
      %s1183 = ssub.s32 %s12, 2
      // Predicated region
      $region61: #{transformer_lm_forward.8} parent=59 // pred_check
        %p1184 = pneg %p216
      $region62: #{transformer_lm_forward.8} parent=59 // pred_check_branch
        %1186 = sbr.rel (%p1184) target = $region64
      $region63: #{transformer_lm_forward.8} parent=59 // pred_region
        %p1187 = scmp.lt.s32.totalorder %s25, 1
        %s1188 = scalar_select %p1187, %s25, 1
        %p1189 = scmp.lt.s32.totalorder %s26, 0
        %s1190 = scalar_select %p1189, %s26, 0
        %s1191 = sadd.s32 %s1190, %s1188
        %s1192 = smul.addr %s1191, 4
        %s1193 = scalar_lea.vmem %s6, %s1192
      $region64: #{transformer_lm_forward.8} parent=59 // pred_fallthru
        _
    $region60: #{transformer_lm_forward.8} parent=5 // pred_fallthru
      _
  $region6: #{transformer_lm_forward.8} parent=0 // loop_footer
    %s16 = sadd.s32 1, %s12
  $region7: #{transformer_lm_forward.8} parent=0 // loop_footer_branch
    %11 = sbr.rel target = $region3
  $region8: #{transformer_lm_forward.8} parent=0 // loop_exit
    _

</llo_original>
